<compile_context>
chip_gen: v6e
topology: v6e:2x2x1
jax: 0.10.0
libtpu: 0.0.40
codegen_flags: <defaults>
</compile_context>

<pallas_src>
import functools
import math

import numpy as np

import jax
import jax.numpy as jnp
from jax.experimental import pallas as pl
from jax.experimental.pallas import tpu as pltpu


# ----------------------------------------------------------------------------- kernel
def _decoder_kernel(yemb_ref, x_ref, ymask_ref, xmask_ref,
                    pos_ref,
                    sa_wq_ref, sa_bq_ref, sa_wo_ref, sa_bo_ref,
                    ca_wq_ref, ca_bq_ref, ca_wo_ref, ca_bo_ref,
                    n1g_ref, n1b_ref, n2g_ref, n2b_ref, n3g_ref, n3b_ref,
                    ff_w1_ref, ff_b1_ref, ff_w2_ref, ff_b2_ref,
                    fc_w_ref, fc_b_ref,
                    logits_ref, attn_ref,
                    *, n_layers, num_heads, h_dim, attn_pad, matmul_dtype):
    f32 = jnp.float32
    mm = matmul_dtype
    hd = h_dim // num_heads
    scale = math.sqrt(float(h_dim))      # embedding scale AND attention scale (sqrt(h_dim))
    inv_scale = 1.0 / scale

    def dot(a, w):
        # weights are already stored in matmul_dtype; cast only the activation.
        return jnp.dot(a.astype(w.dtype), w, preferred_element_type=f32)

    def layer_norm(x, g, b):
        mu = jnp.mean(x, axis=-1, keepdims=True)
        xc = x - mu
        var = jnp.mean(xc * xc, axis=-1, keepdims=True)
        return xc * jax.lax.rsqrt(var + 1e-5) * g + b

    def split_heads(p):
        # (S, H) -> (nh, S, hd); head h == feature columns [h*hd, (h+1)*hd)
        return jnp.stack([p[:, h * hd:(h + 1) * hd] for h in range(num_heads)], axis=0)

    def attend(qh, kvh, maskbool, wo_h, bo):
        # qh: (nh,Sq,hd) already scaled by 1/sqrt(H); kvh: (nh,Sk,hd) (K == V,
        # the reference applies query_fc to key and value as well).
        s = jnp.einsum('nqd,nkd->nqk', qh.astype(mm), kvh.astype(mm),
                       preferred_element_type=f32)
        s = jnp.where(maskbool, -1e9, s)                     # masked_fill(mask==0, -1e9)
        s = s - jnp.max(s, axis=-1, keepdims=True)           # stable softmax
        p = jnp.exp(s)
        p = p * pl.reciprocal(jnp.sum(p, axis=-1, keepdims=True), approx=True)
        a = jnp.einsum('nqk,nkd->nqd', p.astype(mm), kvh.astype(mm),
                       preferred_element_type=f32)           # (nh,Sq,hd)
        # output projection: head-sum done as a reduction over the head axis of a
        # batched matmul -- no per-layer head concatenation.
        out = jnp.einsum('nqd,ndh->nqh', a.astype(wo_h.dtype), wo_h,
                         preferred_element_type=f32).sum(axis=0) + bo
        return out, a

    def ffn(y, w1, b1, w2, b2):
        h = jnp.maximum(dot(y, w1) + b1, 0.0)
        return dot(h, w2) + b2

    # token embedding (gathered in wrapper) * sqrt(H) + positional encoding
    y = yemb_ref[0] * scale + pos_ref[...]
    x_enc = x_ref[0]
    S = y.shape[0]

    # mask compares hoisted out of the layer loop
    ymask0 = (ymask_ref[0] == 0.0)[None]    # (1,S,S)  broadcasts over heads
    xmask0 = (xmask_ref[0] == 0.0)[None]    # (1,1,Sx) broadcasts over heads & queries

    def layer_body(l, carry):
        y, _ = carry
        # ---- masked self-attention: Q = K = V = query_fc(y)  -> ONE projection
        p = dot(y, sa_wq_ref[l]) + sa_bq_ref[l]
        ph = split_heads(p)
        _y, _ = attend(ph * inv_scale, ph, ymask0, sa_wo_ref[l], sa_bo_ref[l])
        y = layer_norm(y + _y, n1g_ref[l], n1b_ref[l])
        # ---- cross-attention: K = V = query_fc(x_enc)        -> TWO projections
        q = dot(y, ca_wq_ref[l]) + ca_bq_ref[l]
        kv = dot(x_enc, ca_wq_ref[l]) + ca_bq_ref[l]
        _y, a = attend(split_heads(q) * inv_scale, split_heads(kv),
                       xmask0, ca_wo_ref[l], ca_bo_ref[l])
        y = layer_norm(y + _y, n2g_ref[l], n2b_ref[l])
        # ---- position-wise FFN
        _y = ffn(y, ff_w1_ref[l], ff_b1_ref[l], ff_w2_ref[l], ff_b2_ref[l])
        y = layer_norm(y + _y, n3g_ref[l], n3b_ref[l])
        return y, a

    a0 = jnp.zeros((num_heads, S, hd), f32)
    y, a_last = jax.lax.fori_loop(0, n_layers, layer_body, (y, a0))

    # concatenate heads ONCE (last layer's cross-attention = the returned `attention`),
    # lane-padded so the store is unmasked.
    pieces = [a_last[h] for h in range(num_heads)]
    if attn_pad > h_dim:
        pieces.append(jnp.zeros((S, attn_pad - h_dim), f32))
    attn_ref[0] = jnp.concatenate(pieces, axis=-1).astype(attn_ref.dtype)

    # fc_out (weight pre-padded to a lane-dense output width in the wrapper)
    logits_ref[0] = (dot(y, fc_w_ref[...]) + fc_b_ref[...]).astype(logits_ref.dtype)


# ----------------------------------------------------------------------------- wrapper
def decoder_forward(y_tokens, y_mask, x_enc, x_mask, params, *, num_heads,
                    matmul_dtype=jnp.float32):
    """y_tokens: (B,S) int32, y_mask: (B,S,S), x_enc: (B,Sx,H), x_mask: (B,Sx).
    Returns (logits (B,S,out_dim), attention (B,S,H)).
    matmul_dtype=jnp.bfloat16 enables bf16 MXU operands (f32 accumulation) on v6e/v7x."""
    B, S = y_tokens.shape
    _, Sx, H = x_enc.shape
    out_dim = params["fc_w"].shape[0]
    inter = params["layers"][0]["ff_w1"].shape[0]
    L = len(params["layers"])
    hd = H // num_heads
    f32 = jnp.float32
    mm = matmul_dtype

    def pad128(n):
        return ((n + 127) // 128) * 128
    out_pad = pad128(out_dim)
    attn_pad = pad128(H)

    # TODO(synk): embedding gather has no clean Mosaic equivalent here; done as an XLA
    #             gather in the wrapper (removes the one-hot array and its matmul).
    y_emb = params["emb"][y_tokens].astype(f32)                      # (B,S,H)

    y_mask_f = y_mask.astype(f32)                                    # (B,S,S)
    x_mask_f = x_mask.astype(f32).reshape(B, 1, Sx)                  # (B,1,Sx)
    pos = params["pos"][:S].astype(f32)                              # (S,H)

    # ---- wrapper-side layout plumbing (all transposes / head-splits hoisted here)
    def stack(name, fn, dtype=f32):
        return jnp.stack([fn(lyr[name]) for lyr in params["layers"]]).astype(dtype)

    sa_wq = stack("sa_wq", lambda w: w.T, mm)                             # (L,H,H) (in,out)
    sa_bq = stack("sa_bq", lambda b: b.reshape(1, H))
    sa_wo = stack("sa_wo", lambda w: w.T.reshape(num_heads, hd, H), mm)   # (L,nh,hd,H)
    sa_bo = stack("sa_bo", lambda b: b.reshape(1, H))
    ca_wq = stack("ca_wq", lambda w: w.T, mm)
    ca_bq = stack("ca_bq", lambda b: b.reshape(1, H))
    ca_wo = stack("ca_wo", lambda w: w.T.reshape(num_heads, hd, H), mm)
    ca_bo = stack("ca_bo", lambda b: b.reshape(1, H))
    n1g = stack("n1_g", lambda g: g.reshape(1, H))
    n1b = stack("n1_b", lambda g: g.reshape(1, H))
    n2g = stack("n2_g", lambda g: g.reshape(1, H))
    n2b = stack("n2_b", lambda g: g.reshape(1, H))
    n3g = stack("n3_g", lambda g: g.reshape(1, H))
    n3b = stack("n3_b", lambda g: g.reshape(1, H))
    ff_w1 = stack("ff_w1", lambda w: w.T, mm)                             # (L,H,I)
    ff_b1 = stack("ff_b1", lambda b: b.reshape(1, inter))
    ff_w2 = stack("ff_w2", lambda w: w.T, mm)                             # (L,I,H)
    ff_b2 = stack("ff_b2", lambda b: b.reshape(1, H))
    # fc_out weight zero-padded to a multiple of 128 output lanes (unmasked stores)
    fc_w = jnp.zeros((H, out_pad), mm).at[:, :out_dim].set(params["fc_w"].T.astype(mm))
    fc_b = jnp.zeros((1, out_pad), f32).at[:, :out_dim].set(params["fc_b"])

    per_batch = (y_emb, x_enc, y_mask_f, x_mask_f)
    shared = (pos,
              sa_wq, sa_bq, sa_wo, sa_bo,
              ca_wq, ca_bq, ca_wo, ca_bo,
              n1g, n1b, n2g, n2b, n3g, n3b,
              ff_w1, ff_b1, ff_w2, ff_b2,
              fc_w, fc_b)

    def batch_spec(a):
        return pl.BlockSpec((1,) + a.shape[1:],
                            lambda b, n=a.ndim: (b,) + (0,) * (n - 1))

    def shared_spec(a):
        return pl.BlockSpec(a.shape, lambda b, n=a.ndim: (0,) * n)

    grid_spec = pl.GridSpec(
        grid=(B,),
        in_specs=[batch_spec(a) for a in per_batch] + [shared_spec(a) for a in shared],
        out_specs=[
            pl.BlockSpec((1, S, out_pad), lambda b: (b, 0, 0)),
            pl.BlockSpec((1, S, attn_pad), lambda b: (b, 0, 0)),
        ],
    )

    kernel = functools.partial(_decoder_kernel, n_layers=L, num_heads=num_heads,
                               h_dim=H, attn_pad=attn_pad, matmul_dtype=mm)

    logits_p, attn_p = pl.pallas_call(
        kernel,
        out_shape=(jax.ShapeDtypeStruct((B, S, out_pad), f32),
                   jax.ShapeDtypeStruct((B, S, attn_pad), f32)),
        grid_spec=grid_spec,
        compiler_params=pltpu.CompilerParams(
            dimension_semantics=("parallel",),
            vmem_limit_bytes=32 * 1024 * 1024),
    )(*per_batch, *shared)
    return logits_p[..., :out_dim], attn_p[..., :H]


# ----------------------------------------------------------------------------- pure-JAX reference
def _reference(y_tokens, y_mask, x_enc, x_mask, params, *, num_heads):
    emb = params["emb"]
    H = emb.shape[1]
    B, S = y_tokens.shape
    Sx = x_enc.shape[1]
    hd = H // num_heads

    y = emb[y_tokens] * jnp.sqrt(jnp.float32(H))
    y = y + params["pos"][None, :S]

    def layer_norm(x, g, b):
        mu = jnp.mean(x, -1, keepdims=True)
        var = jnp.mean((x - mu) ** 2, -1, keepdims=True)
        return (x - mu) / jnp.sqrt(var + 1e-5) * g + b

    def mha(q_in, k_in, v_in, wq, bq, wo, bo, mask):
        Bq, Sq, _ = q_in.shape
        Sk = k_in.shape[1]
        Q = (q_in @ wq.T + bq).reshape(Bq, Sq, num_heads, hd).transpose(0, 2, 1, 3)
        K = (k_in @ wq.T + bq).reshape(Bq, Sk, num_heads, hd).transpose(0, 2, 1, 3)
        V = (v_in @ wq.T + bq).reshape(Bq, Sk, num_heads, hd).transpose(0, 2, 1, 3)
        e = jnp.einsum('bhqd,bhkd->bhqk', Q, K) / jnp.sqrt(jnp.float32(H))
        e = jnp.where(mask[:, None] == 0, -1e9, e)
        p = jax.nn.softmax(e, axis=-1)
        a = jnp.einsum('bhqk,bhkd->bhqd', p, V)
        attn = a.transpose(0, 2, 1, 3).reshape(Bq, Sq, H)
        return attn @ wo.T + bo, attn

    x_mask_b = jnp.broadcast_to(x_mask[:, None, :], (B, S, Sx))
    attention = None
    for lyr in params["layers"]:
        _y, _ = mha(y, y, y, lyr["sa_wq"], lyr["sa_bq"], lyr["sa_wo"], lyr["sa_bo"], y_mask)
        y = layer_norm(y + _y, lyr["n1_g"], lyr["n1_b"])
        _y, attention = mha(y, x_enc, x_enc, lyr["ca_wq"], lyr["ca_bq"],
                            lyr["ca_wo"], lyr["ca_bo"], x_mask_b)
        y = layer_norm(y + _y, lyr["n2_g"], lyr["n2_b"])
        h = jax.nn.relu(y @ lyr["ff_w1"].T + lyr["ff_b1"])
        _y = h @ lyr["ff_w2"].T + lyr["ff_b2"]
        y = layer_norm(y + _y, lyr["n3_g"], lyr["n3_b"])
    out = y @ params["fc_w"].T + params["fc_b"]
    return out, attention


# ----------------------------------------------------------------------------- init helpers
def _init_linear(key, in_f, out_f):
    # PyTorch nn.Linear default init: U(-1/sqrt(in), 1/sqrt(in)) for W and b.
    kw, kb = jax.random.split(key)
    bound = 1.0 / math.sqrt(in_f)
    w = jax.random.uniform(kw, (out_f, in_f), jnp.float32, -bound, bound)
    b = jax.random.uniform(kb, (out_f,), jnp.float32, -bound, bound)
    return w, b


def _sinusoid_table(h_dim, num_position):
    pos = np.arange(num_position, dtype=np.float32)[:, None]
    div = np.power(10000.0, 2.0 * (np.arange(h_dim) // 2) / h_dim).astype(np.float32)
    table = pos / div[None, :]
    table[:, 0::2] = np.sin(table[:, 0::2])
    table[:, 1::2] = np.cos(table[:, 1::2])
    return jnp.asarray(table)


def init_decoder_params(key, *, out_dim, h_dim, n_layers, num_heads, inter_dim, seq_len):
    del num_heads  # head split happens in the wrapper
    keys = jax.random.split(key, 2 + 6 * n_layers)
    emb = jax.random.normal(keys[0], (out_dim, h_dim), jnp.float32)   # nn.Embedding ~ N(0,1)
    fc_w, fc_b = _init_linear(keys[1], h_dim, out_dim)
    ones = jnp.ones((h_dim,), jnp.float32)
    zeros = jnp.zeros((h_dim,), jnp.float32)
    layers = []
    for l in range(n_layers):
        k = keys[2 + 6 * l: 2 + 6 * (l + 1)]
        sa_wq, sa_bq = _init_linear(k[0], h_dim, h_dim)   # self-attn query_fc (key/value_fc unused)
        sa_wo, sa_bo = _init_linear(k[1], h_dim, h_dim)   # self-attn out_fc
        ca_wq, ca_bq = _init_linear(k[2], h_dim, h_dim)   # cross-attn query_fc
        ca_wo, ca_bo = _init_linear(k[3], h_dim, h_dim)   # cross-attn out_fc
        ff_w1, ff_b1 = _init_linear(k[4], h_dim, inter_dim)
        ff_w2, ff_b2 = _init_linear(k[5], inter_dim, h_dim)
        layers.append(dict(
            sa_wq=sa_wq, sa_bq=sa_bq, sa_wo=sa_wo, sa_bo=sa_bo,
            ca_wq=ca_wq, ca_bq=ca_bq, ca_wo=ca_wo, ca_bo=ca_bo,
            n1_g=ones, n1_b=zeros, n2_g=ones, n2_b=zeros, n3_g=ones, n3_b=zeros,
            ff_w1=ff_w1, ff_b1=ff_b1, ff_w2=ff_w2, ff_b2=ff_b2))
    return dict(emb=emb, pos=_sinusoid_table(h_dim, seq_len), layers=layers,
                fc_w=fc_w, fc_b=fc_b)


# ----------------------------------------------------------------------------- demo / test
if __name__ == "__main__":
    B, S, SX = 2, 8, 8
    OUT_DIM, H_DIM, N_LAYERS, NUM_HEADS, INTER_DIM = 16, 32, 2, 4, 64

    root = jax.random.PRNGKey(0)
    k_par, k_tok, k_x = jax.random.split(root, 3)

    params = init_decoder_params(k_par, out_dim=OUT_DIM, h_dim=H_DIM,
                                 n_layers=N_LAYERS, num_heads=NUM_HEADS,
                                 inter_dim=INTER_DIM, seq_len=S)

    y_tokens = jax.random.randint(k_tok, (B, S), 0, OUT_DIM, dtype=jnp.int32)
    x_enc = jax.random.normal(k_x, (B, SX, H_DIM), jnp.float32)       # encoder output

    # causal (subsequent) mask for the target, padding mask for the encoder memory
    y_mask = jnp.broadcast_to(jnp.tril(jnp.ones((S, S), jnp.float32))[None], (B, S, S))
    x_mask = jnp.ones((B, SX), jnp.float32).at[1, SX - 1].set(0.0)    # batch 1: last pos padded

    # ---- f32 matmul path (default): strict check against the pure-JAX reference
    logits, attention = decoder_forward(y_tokens, y_mask, x_enc, x_mask, params,
                                        num_heads=NUM_HEADS)
    logits = jax.block_until_ready(logits)
    attention = jax.block_until_ready(attention)

    with jax.default_matmul_precision("float32"):
        ref_logits, ref_attention = _reference(y_tokens, y_mask, x_enc, x_mask, params,
                                               num_heads=NUM_HEADS)

    assert logits.shape == (B, S, OUT_DIM) and attention.shape == (B, S, H_DIM)
    # tolerance covers pl.reciprocal(approx=True) in the softmax denominator
    assert jnp.allclose(logits, ref_logits, atol=5e-3, rtol=5e-3), "logits mismatch"
    assert jnp.allclose(attention, ref_attention, atol=5e-3, rtol=5e-3), "attention mismatch"

    # ---- bf16 MXU-operand path (v6e/v7x suggestion): smoke check at loose tolerance
    logits_bf, attention_bf = decoder_forward(y_tokens, y_mask, x_enc, x_mask, params,
                                              num_heads=NUM_HEADS,
                                              matmul_dtype=jnp.bfloat16)
    logits_bf = jax.block_until_ready(logits_bf)
    attention_bf = jax.block_until_ready(attention_bf)
    assert jnp.allclose(logits_bf, ref_logits, atol=1e-1, rtol=1e-1), "bf16 logits mismatch"
    assert jnp.allclose(attention_bf, ref_attention, atol=1e-1, rtol=1e-1), "bf16 attn mismatch"

    print("KERNEL_OK")
</pallas_src>

<mosaic_0001>
module attributes {stable_mosaic.version = 11 : i64} {
  func.func @_decoder_kernel(%arg0: i32, %arg1: memref<1x8x32xf32, #tpu.memory_space<vmem>>, %arg2: memref<1x8x32xf32, #tpu.memory_space<vmem>>, %arg3: memref<1x8x8xf32, #tpu.memory_space<vmem>>, %arg4: memref<1x1x8xf32, #tpu.memory_space<vmem>>, %arg5: memref<8x32xf32, #tpu.memory_space<vmem>>, %arg6: memref<2x32x32xf32, #tpu.memory_space<vmem>>, %arg7: memref<2x1x32xf32, #tpu.memory_space<vmem>>, %arg8: memref<2x4x8x32xf32, #tpu.memory_space<vmem>>, %arg9: memref<2x1x32xf32, #tpu.memory_space<vmem>>, %arg10: memref<2x32x32xf32, #tpu.memory_space<vmem>>, %arg11: memref<2x1x32xf32, #tpu.memory_space<vmem>>, %arg12: memref<2x4x8x32xf32, #tpu.memory_space<vmem>>, %arg13: memref<2x1x32xf32, #tpu.memory_space<vmem>>, %arg14: memref<2x1x32xf32, #tpu.memory_space<vmem>>, %arg15: memref<2x1x32xf32, #tpu.memory_space<vmem>>, %arg16: memref<2x1x32xf32, #tpu.memory_space<vmem>>, %arg17: memref<2x1x32xf32, #tpu.memory_space<vmem>>, %arg18: memref<2x1x32xf32, #tpu.memory_space<vmem>>, %arg19: memref<2x1x32xf32, #tpu.memory_space<vmem>>, %arg20: memref<2x32x64xf32, #tpu.memory_space<vmem>>, %arg21: memref<2x1x64xf32, #tpu.memory_space<vmem>>, %arg22: memref<2x64x32xf32, #tpu.memory_space<vmem>>, %arg23: memref<2x1x32xf32, #tpu.memory_space<vmem>>, %arg24: memref<32x128xf32, #tpu.memory_space<vmem>>, %arg25: memref<1x128xf32, #tpu.memory_space<vmem>>, %arg26: memref<1x8x128xf32, #tpu.memory_space<vmem>>, %arg27: memref<1x8x128xf32, #tpu.memory_space<vmem>>) attributes {dimension_semantics = [#tpu.dimension_semantics<parallel>], iteration_bounds = array<i64: 2>, scalar_prefetch = 0 : i64, scratch_operands = 0 : i64, tpu.core_type = #tpu.core_type<tc>, window_params = [{transform_indices = @transform_0, window_bounds = array<i64: 1, 8, 32>}, {transform_indices = @transform_1, window_bounds = array<i64: 1, 8, 32>}, {transform_indices = @transform_2, window_bounds = array<i64: 1, 8, 8>}, {transform_indices = @transform_3, window_bounds = array<i64: 1, 1, 8>}, {pipeline_mode = #tpu.pipeline_mode<synchronous>, transform_indices = @transform_4, window_bounds = array<i64: 8, 32>}, {pipeline_mode = #tpu.pipeline_mode<synchronous>, transform_indices = @transform_5, window_bounds = array<i64: 2, 32, 32>}, {pipeline_mode = #tpu.pipeline_mode<synchronous>, transform_indices = @transform_6, window_bounds = array<i64: 2, 1, 32>}, {pipeline_mode = #tpu.pipeline_mode<synchronous>, transform_indices = @transform_7, window_bounds = array<i64: 2, 4, 8, 32>}, {pipeline_mode = #tpu.pipeline_mode<synchronous>, transform_indices = @transform_8, window_bounds = array<i64: 2, 1, 32>}, {pipeline_mode = #tpu.pipeline_mode<synchronous>, transform_indices = @transform_9, window_bounds = array<i64: 2, 32, 32>}, {pipeline_mode = #tpu.pipeline_mode<synchronous>, transform_indices = @transform_10, window_bounds = array<i64: 2, 1, 32>}, {pipeline_mode = #tpu.pipeline_mode<synchronous>, transform_indices = @transform_11, window_bounds = array<i64: 2, 4, 8, 32>}, {pipeline_mode = #tpu.pipeline_mode<synchronous>, transform_indices = @transform_12, window_bounds = array<i64: 2, 1, 32>}, {pipeline_mode = #tpu.pipeline_mode<synchronous>, transform_indices = @transform_13, window_bounds = array<i64: 2, 1, 32>}, {pipeline_mode = #tpu.pipeline_mode<synchronous>, transform_indices = @transform_14, window_bounds = array<i64: 2, 1, 32>}, {pipeline_mode = #tpu.pipeline_mode<synchronous>, transform_indices = @transform_15, window_bounds = array<i64: 2, 1, 32>}, {pipeline_mode = #tpu.pipeline_mode<synchronous>, transform_indices = @transform_16, window_bounds = array<i64: 2, 1, 32>}, {pipeline_mode = #tpu.pipeline_mode<synchronous>, transform_indices = @transform_17, window_bounds = array<i64: 2, 1, 32>}, {pipeline_mode = #tpu.pipeline_mode<synchronous>, transform_indices = @transform_18, window_bounds = array<i64: 2, 1, 32>}, {pipeline_mode = #tpu.pipeline_mode<synchronous>, transform_indices = @transform_19, window_bounds = array<i64: 2, 32, 64>}, {pipeline_mode = #tpu.pipeline_mode<synchronous>, transform_indices = @transform_20, window_bounds = array<i64: 2, 1, 64>}, {pipeline_mode = #tpu.pipeline_mode<synchronous>, transform_indices = @transform_21, window_bounds = array<i64: 2, 64, 32>}, {pipeline_mode = #tpu.pipeline_mode<synchronous>, transform_indices = @transform_22, window_bounds = array<i64: 2, 1, 32>}, {pipeline_mode = #tpu.pipeline_mode<synchronous>, transform_indices = @transform_23, window_bounds = array<i64: 32, 128>}, {pipeline_mode = #tpu.pipeline_mode<synchronous>, transform_indices = @transform_24, window_bounds = array<i64: 1, 128>}, {transform_indices = @transform_25, window_bounds = array<i64: 1, 8, 128>}, {transform_indices = @transform_26, window_bounds = array<i64: 1, 8, 128>}]} {
    %c0 = arith.constant 0 : index
    %c0_0 = arith.constant 0 : index
    %c0_1 = arith.constant 0 : index
    %0 = vector.load %arg1[%c0, %c0_0, %c0_1] : memref<1x8x32xf32, #tpu.memory_space<vmem>>, vector<1x8x32xf32>
    %1 = vector.shape_cast %0 : vector<1x8x32xf32> to vector<8x32xf32>
    %cst = arith.constant 5.65685415 : f32
    %2 = vector.broadcast %cst : f32 to vector<8x32xf32>
    %3 = arith.mulf %1, %2 : vector<8x32xf32>
    %c0_2 = arith.constant 0 : index
    %c0_3 = arith.constant 0 : index
    %4 = vector.load %arg5[%c0_2, %c0_3] : memref<8x32xf32, #tpu.memory_space<vmem>>, vector<8x32xf32>
    %5 = arith.addf %3, %4 : vector<8x32xf32>
    %c0_4 = arith.constant 0 : index
    %c0_5 = arith.constant 0 : index
    %c0_6 = arith.constant 0 : index
    %6 = vector.load %arg2[%c0_4, %c0_5, %c0_6] : memref<1x8x32xf32, #tpu.memory_space<vmem>>, vector<1x8x32xf32>
    %7 = vector.shape_cast %6 : vector<1x8x32xf32> to vector<8x32xf32>
    %c0_7 = arith.constant 0 : index
    %c0_8 = arith.constant 0 : index
    %c0_9 = arith.constant 0 : index
    %8 = vector.load %arg3[%c0_7, %c0_8, %c0_9] : memref<1x8x8xf32, #tpu.memory_space<vmem>>, vector<1x8x8xf32>
    %9 = vector.shape_cast %8 : vector<1x8x8xf32> to vector<8x8xf32>
    %cst_10 = arith.constant 0.000000e+00 : f32
    %10 = vector.broadcast %cst_10 : f32 to vector<8x8xf32>
    %11 = arith.cmpf oeq, %9, %10 : vector<8x8xf32>
    %12 = vector.shape_cast %11 : vector<8x8xi1> to vector<1x8x8xi1>
    %c0_11 = arith.constant 0 : index
    %c0_12 = arith.constant 0 : index
    %c0_13 = arith.constant 0 : index
    %13 = vector.load %arg4[%c0_11, %c0_12, %c0_13] : memref<1x1x8xf32, #tpu.memory_space<vmem>>, vector<1x1x8xf32>
    %14 = vector.shape_cast %13 : vector<1x1x8xf32> to vector<1x8xf32>
    %cst_14 = arith.constant 0.000000e+00 : f32
    %15 = vector.broadcast %cst_14 : f32 to vector<1x8xf32>
    %16 = arith.cmpf oeq, %14, %15 : vector<1x8xf32>
    %17 = vector.shape_cast %16 : vector<1x8xi1> to vector<1x1x8xi1>
    %cst_15 = arith.constant 0.000000e+00 : f32
    %18 = vector.broadcast %cst_15 : f32 to vector<4x8x8xf32>
    %c0_i32 = arith.constant 0 : i32
    %c2_i32 = arith.constant 2 : i32
    %19 = arith.addi %c0_i32, %c2_i32 : i32
    %c1_i32 = arith.constant 1 : i32
    %20:2 = scf.for %arg28 = %c0_i32 to %19 step %c1_i32 iter_args(%arg29 = %5, %arg30 = %18) -> (vector<8x32xf32>, vector<4x8x8xf32>)  : i32 {
      %42 = arith.index_cast %arg28 : i32 to index
      %c0_29 = arith.constant 0 : index
      %c0_30 = arith.constant 0 : index
      %43 = vector.load %arg6[%42, %c0_29, %c0_30] : memref<2x32x32xf32, #tpu.memory_space<vmem>>, vector<1x32x32xf32>
      %44 = vector.shape_cast %43 : vector<1x32x32xf32> to vector<32x32xf32>
      %cst_31 = arith.constant dense<0.000000e+00> : vector<8x32xf32>
      %45 = tpu.matmul %arg29, %44, %cst_31 {dimension_numbers = #tpu.dot_dimension_numbers<[1], [0], [0], [1], [0, 0, 1, 1], [], []>} : vector<8x32xf32>, vector<32x32xf32>, vector<8x32xf32> -> vector<8x32xf32>
      %46 = arith.index_cast %arg28 : i32 to index
      %c0_32 = arith.constant 0 : index
      %c0_33 = arith.constant 0 : index
      %47 = vector.load %arg7[%46, %c0_32, %c0_33] : memref<2x1x32xf32, #tpu.memory_space<vmem>>, vector<1x1x32xf32>
      %48 = vector.shape_cast %47 : vector<1x1x32xf32> to vector<1x32xf32>
      %49 = vector.broadcast %48 : vector<1x32xf32> to vector<8x32xf32>
      %50 = arith.addf %45, %49 : vector<8x32xf32>
      %51 = vector.extract_strided_slice %50 {offsets = [0, 0], sizes = [8, 8], strides = [1, 1]} : vector<8x32xf32> to vector<8x8xf32>
      %52 = vector.extract_strided_slice %50 {offsets = [0, 8], sizes = [8, 8], strides = [1, 1]} : vector<8x32xf32> to vector<8x8xf32>
      %53 = vector.extract_strided_slice %50 {offsets = [0, 16], sizes = [8, 8], strides = [1, 1]} : vector<8x32xf32> to vector<8x8xf32>
      %54 = vector.extract_strided_slice %50 {offsets = [0, 24], sizes = [8, 8], strides = [1, 1]} : vector<8x32xf32> to vector<8x8xf32>
      %55 = vector.shape_cast %51 : vector<8x8xf32> to vector<1x8x8xf32>
      %56 = vector.shape_cast %52 : vector<8x8xf32> to vector<1x8x8xf32>
      %57 = vector.shape_cast %53 : vector<8x8xf32> to vector<1x8x8xf32>
      %58 = vector.shape_cast %54 : vector<8x8xf32> to vector<1x8x8xf32>
      %59 = tpu.concatenate %55, %56, %57, %58 in 0 : vector<1x8x8xf32>, vector<1x8x8xf32>, vector<1x8x8xf32>, vector<1x8x8xf32> -> vector<4x8x8xf32>
      %cst_34 = arith.constant 0.176776692 : f32
      %60 = vector.broadcast %cst_34 : f32 to vector<4x8x8xf32>
      %61 = arith.mulf %59, %60 : vector<4x8x8xf32>
      %62 = arith.index_cast %arg28 : i32 to index
      %c0_35 = arith.constant 0 : index
      %c0_36 = arith.constant 0 : index
      %c0_37 = arith.constant 0 : index
      %63 = vector.load %arg8[%62, %c0_35, %c0_36, %c0_37] : memref<2x4x8x32xf32, #tpu.memory_space<vmem>>, vector<1x4x8x32xf32>
      %64 = vector.shape_cast %63 : vector<1x4x8x32xf32> to vector<4x8x32xf32>
      %65 = arith.index_cast %arg28 : i32 to index
      %c0_38 = arith.constant 0 : index
      %c0_39 = arith.constant 0 : index
      %66 = vector.load %arg9[%65, %c0_38, %c0_39] : memref<2x1x32xf32, #tpu.memory_space<vmem>>, vector<1x1x32xf32>
      %67 = vector.shape_cast %66 : vector<1x1x32xf32> to vector<1x32xf32>
      "tpu.trace_start"() <{level = 10 : i32, message = "nqd,nkd->nqk"}> : () -> ()
      %cst_40 = arith.constant dense<0.000000e+00> : vector<4x8x8xf32>
      %68 = tpu.matmul %61, %59, %cst_40 {dimension_numbers = #tpu.dot_dimension_numbers<[2], [2], [1], [1], [0, 0, 0, 1, 1, 1], [0], [0]>} : vector<4x8x8xf32>, vector<4x8x8xf32>, vector<4x8x8xf32> -> vector<4x8x8xf32>
      %cst_41 = arith.constant -1.000000e+09 : f32
      "tpu.trace_stop"() : () -> ()
      %69 = vector.shape_cast %12 : vector<1x8x8xi1> to vector<1x8x8xi1>
      %70 = vector.broadcast %69 : vector<1x8x8xi1> to vector<4x8x8xi1>
      %71 = vector.broadcast %cst_41 : f32 to vector<4x8x8xf32>
      %72 = arith.select %70, %71, %68 : vector<4x8x8xi1>, vector<4x8x8xf32>
      %cst_42 = arith.constant dense<0xFF800000> : vector<4x8xf32>
      %73 = vector.multi_reduction <maximumf>, %72, %cst_42 [2] : vector<4x8x8xf32> to vector<4x8xf32>
      %74 = vector.shape_cast %73 : vector<4x8xf32> to vector<4x8x1xf32>
      %75 = vector.broadcast %74 : vector<4x8x1xf32> to vector<4x8x8xf32>
      %76 = arith.subf %72, %75 : vector<4x8x8xf32>
      %77 = math.exp %76 : vector<4x8x8xf32>
      %cst_43 = arith.constant dense<0.000000e+00> : vector<4x8xf32>
      %78 = vector.multi_reduction <add>, %77, %cst_43 [2] : vector<4x8x8xf32> to vector<4x8xf32>
      %79 = vector.shape_cast %78 : vector<4x8xf32> to vector<4x8x1xf32>
      %80 = tpu.reciprocal %79 {approx = true} : vector<4x8x1xf32> -> vector<4x8x1xf32>
      %81 = vector.broadcast %80 : vector<4x8x1xf32> to vector<4x8x8xf32>
      %82 = arith.mulf %77, %81 : vector<4x8x8xf32>
      "tpu.trace_start"() <{level = 10 : i32, message = "nqk,nkd->nqd"}> : () -> ()
      %cst_44 = arith.constant dense<0.000000e+00> : vector<4x8x8xf32>
      %83 = tpu.matmul %82, %59, %cst_44 {dimension_numbers = #tpu.dot_dimension_numbers<[2], [1], [1], [2], [0, 0, 0, 1, 1, 2], [0], [0]>} : vector<4x8x8xf32>, vector<4x8x8xf32>, vector<4x8x8xf32> -> vector<4x8x8xf32>
      "tpu.trace_stop"() : () -> ()
      "tpu.trace_start"() <{level = 10 : i32, message = "nqd,ndh->nqh"}> : () -> ()
      %cst_45 = arith.constant dense<0.000000e+00> : vector<4x8x32xf32>
      %84 = tpu.matmul %83, %64, %cst_45 {dimension_numbers = #tpu.dot_dimension_numbers<[2], [1], [1], [2], [0, 0, 0, 1, 1, 2], [0], [0]>} : vector<4x8x8xf32>, vector<4x8x32xf32>, vector<4x8x32xf32> -> vector<4x8x32xf32>
      "tpu.trace_stop"() : () -> ()
      %cst_46 = arith.constant dense<0.000000e+00> : vector<8x32xf32>
      %85 = vector.multi_reduction <add>, %84, %cst_46 [0] : vector<4x8x32xf32> to vector<8x32xf32>
      %86 = vector.broadcast %67 : vector<1x32xf32> to vector<8x32xf32>
      %87 = arith.addf %85, %86 : vector<8x32xf32>
      %88 = arith.addf %arg29, %87 : vector<8x32xf32>
      %89 = arith.index_cast %arg28 : i32 to index
      %c0_47 = arith.constant 0 : index
      %c0_48 = arith.constant 0 : index
      %90 = vector.load %arg14[%89, %c0_47, %c0_48] : memref<2x1x32xf32, #tpu.memory_space<vmem>>, vector<1x1x32xf32>
      %91 = vector.shape_cast %90 : vector<1x1x32xf32> to vector<1x32xf32>
      %92 = arith.index_cast %arg28 : i32 to index
      %c0_49 = arith.constant 0 : index
      %c0_50 = arith.constant 0 : index
      %93 = vector.load %arg15[%92, %c0_49, %c0_50] : memref<2x1x32xf32, #tpu.memory_space<vmem>>, vector<1x1x32xf32>
      %94 = vector.shape_cast %93 : vector<1x1x32xf32> to vector<1x32xf32>
      %cst_51 = arith.constant dense<0.000000e+00> : vector<8xf32>
      %95 = vector.multi_reduction <add>, %88, %cst_51 [1] : vector<8x32xf32> to vector<8xf32>
      %96 = vector.shape_cast %95 : vector<8xf32> to vector<8x1xf32>
      %cst_52 = arith.constant 3.200000e+01 : f32
      %97 = vector.broadcast %cst_52 : f32 to vector<8x1xf32>
      %98 = arith.divf %96, %97 : vector<8x1xf32>
      %99 = vector.broadcast %98 : vector<8x1xf32> to vector<8x32xf32>
      %100 = arith.subf %88, %99 : vector<8x32xf32>
      %101 = arith.mulf %100, %100 : vector<8x32xf32>
      %cst_53 = arith.constant dense<0.000000e+00> : vector<8xf32>
      %102 = vector.multi_reduction <add>, %101, %cst_53 [1] : vector<8x32xf32> to vector<8xf32>
      %103 = vector.shape_cast %102 : vector<8xf32> to vector<8x1xf32>
      %cst_54 = arith.constant 3.200000e+01 : f32
      %104 = vector.broadcast %cst_54 : f32 to vector<8x1xf32>
      %105 = arith.divf %103, %104 : vector<8x1xf32>
      %cst_55 = arith.constant 9.99999974E-6 : f32
      %106 = vector.broadcast %cst_55 : f32 to vector<8x1xf32>
      %107 = arith.addf %105, %106 : vector<8x1xf32>
      %108 = math.rsqrt %107 : vector<8x1xf32>
      %109 = vector.broadcast %108 : vector<8x1xf32> to vector<8x32xf32>
      %110 = arith.mulf %100, %109 : vector<8x32xf32>
      %111 = vector.broadcast %91 : vector<1x32xf32> to vector<8x32xf32>
      %112 = arith.mulf %110, %111 : vector<8x32xf32>
      %113 = vector.broadcast %94 : vector<1x32xf32> to vector<8x32xf32>
      %114 = arith.addf %112, %113 : vector<8x32xf32>
      %115 = arith.index_cast %arg28 : i32 to index
      %c0_56 = arith.constant 0 : index
      %c0_57 = arith.constant 0 : index
      %116 = vector.load %arg10[%115, %c0_56, %c0_57] : memref<2x32x32xf32, #tpu.memory_space<vmem>>, vector<1x32x32xf32>
      %117 = vector.shape_cast %116 : vector<1x32x32xf32> to vector<32x32xf32>
      %cst_58 = arith.constant dense<0.000000e+00> : vector<8x32xf32>
      %118 = tpu.matmul %114, %117, %cst_58 {dimension_numbers = #tpu.dot_dimension_numbers<[1], [0], [0], [1], [0, 0, 1, 1], [], []>} : vector<8x32xf32>, vector<32x32xf32>, vector<8x32xf32> -> vector<8x32xf32>
      %119 = arith.index_cast %arg28 : i32 to index
      %c0_59 = arith.constant 0 : index
      %c0_60 = arith.constant 0 : index
      %120 = vector.load %arg11[%119, %c0_59, %c0_60] : memref<2x1x32xf32, #tpu.memory_space<vmem>>, vector<1x1x32xf32>
      %121 = vector.shape_cast %120 : vector<1x1x32xf32> to vector<1x32xf32>
      %122 = vector.broadcast %121 : vector<1x32xf32> to vector<8x32xf32>
      %123 = arith.addf %118, %122 : vector<8x32xf32>
      %124 = arith.index_cast %arg28 : i32 to index
      %c0_61 = arith.constant 0 : index
      %c0_62 = arith.constant 0 : index
      %125 = vector.load %arg10[%124, %c0_61, %c0_62] : memref<2x32x32xf32, #tpu.memory_space<vmem>>, vector<1x32x32xf32>
      %126 = vector.shape_cast %125 : vector<1x32x32xf32> to vector<32x32xf32>
      %cst_63 = arith.constant dense<0.000000e+00> : vector<8x32xf32>
      %127 = tpu.matmul %7, %126, %cst_63 {dimension_numbers = #tpu.dot_dimension_numbers<[1], [0], [0], [1], [0, 0, 1, 1], [], []>} : vector<8x32xf32>, vector<32x32xf32>, vector<8x32xf32> -> vector<8x32xf32>
      %128 = arith.index_cast %arg28 : i32 to index
      %c0_64 = arith.constant 0 : index
      %c0_65 = arith.constant 0 : index
      %129 = vector.load %arg11[%128, %c0_64, %c0_65] : memref<2x1x32xf32, #tpu.memory_space<vmem>>, vector<1x1x32xf32>
      %130 = vector.shape_cast %129 : vector<1x1x32xf32> to vector<1x32xf32>
      %131 = vector.broadcast %130 : vector<1x32xf32> to vector<8x32xf32>
      %132 = arith.addf %127, %131 : vector<8x32xf32>
      %133 = vector.extract_strided_slice %123 {offsets = [0, 0], sizes = [8, 8], strides = [1, 1]} : vector<8x32xf32> to vector<8x8xf32>
      %134 = vector.extract_strided_slice %123 {offsets = [0, 8], sizes = [8, 8], strides = [1, 1]} : vector<8x32xf32> to vector<8x8xf32>
      %135 = vector.extract_strided_slice %123 {offsets = [0, 16], sizes = [8, 8], strides = [1, 1]} : vector<8x32xf32> to vector<8x8xf32>
      %136 = vector.extract_strided_slice %123 {offsets = [0, 24], sizes = [8, 8], strides = [1, 1]} : vector<8x32xf32> to vector<8x8xf32>
      %137 = vector.shape_cast %133 : vector<8x8xf32> to vector<1x8x8xf32>
      %138 = vector.shape_cast %134 : vector<8x8xf32> to vector<1x8x8xf32>
      %139 = vector.shape_cast %135 : vector<8x8xf32> to vector<1x8x8xf32>
      %140 = vector.shape_cast %136 : vector<8x8xf32> to vector<1x8x8xf32>
      %141 = tpu.concatenate %137, %138, %139, %140 in 0 : vector<1x8x8xf32>, vector<1x8x8xf32>, vector<1x8x8xf32>, vector<1x8x8xf32> -> vector<4x8x8xf32>
      %cst_66 = arith.constant 0.176776692 : f32
      %142 = vector.broadcast %cst_66 : f32 to vector<4x8x8xf32>
      %143 = arith.mulf %141, %142 : vector<4x8x8xf32>
      %144 = vector.extract_strided_slice %132 {offsets = [0, 0], sizes = [8, 8], strides = [1, 1]} : vector<8x32xf32> to vector<8x8xf32>
      %145 = vector.extract_strided_slice %132 {offsets = [0, 8], sizes = [8, 8], strides = [1, 1]} : vector<8x32xf32> to vector<8x8xf32>
      %146 = vector.extract_strided_slice %132 {offsets = [0, 16], sizes = [8, 8], strides = [1, 1]} : vector<8x32xf32> to vector<8x8xf32>
      %147 = vector.extract_strided_slice %132 {offsets = [0, 24], sizes = [8, 8], strides = [1, 1]} : vector<8x32xf32> to vector<8x8xf32>
      %148 = vector.shape_cast %144 : vector<8x8xf32> to vector<1x8x8xf32>
      %149 = vector.shape_cast %145 : vector<8x8xf32> to vector<1x8x8xf32>
      %150 = vector.shape_cast %146 : vector<8x8xf32> to vector<1x8x8xf32>
      %151 = vector.shape_cast %147 : vector<8x8xf32> to vector<1x8x8xf32>
      %152 = tpu.concatenate %148, %149, %150, %151 in 0 : vector<1x8x8xf32>, vector<1x8x8xf32>, vector<1x8x8xf32>, vector<1x8x8xf32> -> vector<4x8x8xf32>
      %153 = arith.index_cast %arg28 : i32 to index
      %c0_67 = arith.constant 0 : index
      %c0_68 = arith.constant 0 : index
      %c0_69 = arith.constant 0 : index
      %154 = vector.load %arg12[%153, %c0_67, %c0_68, %c0_69] : memref<2x4x8x32xf32, #tpu.memory_space<vmem>>, vector<1x4x8x32xf32>
      %155 = vector.shape_cast %154 : vector<1x4x8x32xf32> to vector<4x8x32xf32>
      %156 = arith.index_cast %arg28 : i32 to index
      %c0_70 = arith.constant 0 : index
      %c0_71 = arith.constant 0 : index
      %157 = vector.load %arg13[%156, %c0_70, %c0_71] : memref<2x1x32xf32, #tpu.memory_space<vmem>>, vector<1x1x32xf32>
      %158 = vector.shape_cast %157 : vector<1x1x32xf32> to vector<1x32xf32>
      "tpu.trace_start"() <{level = 10 : i32, message = "nqd,nkd->nqk"}> : () -> ()
      %cst_72 = arith.constant dense<0.000000e+00> : vector<4x8x8xf32>
      %159 = tpu.matmul %143, %152, %cst_72 {dimension_numbers = #tpu.dot_dimension_numbers<[2], [2], [1], [1], [0, 0, 0, 1, 1, 1], [0], [0]>} : vector<4x8x8xf32>, vector<4x8x8xf32>, vector<4x8x8xf32> -> vector<4x8x8xf32>
      %cst_73 = arith.constant -1.000000e+09 : f32
      "tpu.trace_stop"() : () -> ()
      %160 = vector.shape_cast %17 : vector<1x1x8xi1> to vector<1x1x8xi1>
      %161 = vector.broadcast %160 : vector<1x1x8xi1> to vector<4x8x8xi1>
      %162 = vector.broadcast %cst_73 : f32 to vector<4x8x8xf32>
      %163 = arith.select %161, %162, %159 : vector<4x8x8xi1>, vector<4x8x8xf32>
      %cst_74 = arith.constant dense<0xFF800000> : vector<4x8xf32>
      %164 = vector.multi_reduction <maximumf>, %163, %cst_74 [2] : vector<4x8x8xf32> to vector<4x8xf32>
      %165 = vector.shape_cast %164 : vector<4x8xf32> to vector<4x8x1xf32>
      %166 = vector.broadcast %165 : vector<4x8x1xf32> to vector<4x8x8xf32>
      %167 = arith.subf %163, %166 : vector<4x8x8xf32>
      %168 = math.exp %167 : vector<4x8x8xf32>
      %cst_75 = arith.constant dense<0.000000e+00> : vector<4x8xf32>
      %169 = vector.multi_reduction <add>, %168, %cst_75 [2] : vector<4x8x8xf32> to vector<4x8xf32>
      %170 = vector.shape_cast %169 : vector<4x8xf32> to vector<4x8x1xf32>
      %171 = tpu.reciprocal %170 {approx = true} : vector<4x8x1xf32> -> vector<4x8x1xf32>
      %172 = vector.broadcast %171 : vector<4x8x1xf32> to vector<4x8x8xf32>
      %173 = arith.mulf %168, %172 : vector<4x8x8xf32>
      "tpu.trace_start"() <{level = 10 : i32, message = "nqk,nkd->nqd"}> : () -> ()
      %cst_76 = arith.constant dense<0.000000e+00> : vector<4x8x8xf32>
      %174 = tpu.matmul %173, %152, %cst_76 {dimension_numbers = #tpu.dot_dimension_numbers<[2], [1], [1], [2], [0, 0, 0, 1, 1, 2], [0], [0]>} : vector<4x8x8xf32>, vector<4x8x8xf32>, vector<4x8x8xf32> -> vector<4x8x8xf32>
      "tpu.trace_stop"() : () -> ()
      "tpu.trace_start"() <{level = 10 : i32, message = "nqd,ndh->nqh"}> : () -> ()
      %cst_77 = arith.constant dense<0.000000e+00> : vector<4x8x32xf32>
      %175 = tpu.matmul %174, %155, %cst_77 {dimension_numbers = #tpu.dot_dimension_numbers<[2], [1], [1], [2], [0, 0, 0, 1, 1, 2], [0], [0]>} : vector<4x8x8xf32>, vector<4x8x32xf32>, vector<4x8x32xf32> -> vector<4x8x32xf32>
      "tpu.trace_stop"() : () -> ()
      %cst_78 = arith.constant dense<0.000000e+00> : vector<8x32xf32>
      %176 = vector.multi_reduction <add>, %175, %cst_78 [0] : vector<4x8x32xf32> to vector<8x32xf32>
      %177 = vector.broadcast %158 : vector<1x32xf32> to vector<8x32xf32>
      %178 = arith.addf %176, %177 : vector<8x32xf32>
      %179 = arith.addf %114, %178 : vector<8x32xf32>
      %180 = arith.index_cast %arg28 : i32 to index
      %c0_79 = arith.constant 0 : index
      %c0_80 = arith.constant 0 : index
      %181 = vector.load %arg16[%180, %c0_79, %c0_80] : memref<2x1x32xf32, #tpu.memory_space<vmem>>, vector<1x1x32xf32>
      %182 = vector.shape_cast %181 : vector<1x1x32xf32> to vector<1x32xf32>
      %183 = arith.index_cast %arg28 : i32 to index
      %c0_81 = arith.constant 0 : index
      %c0_82 = arith.constant 0 : index
      %184 = vector.load %arg17[%183, %c0_81, %c0_82] : memref<2x1x32xf32, #tpu.memory_space<vmem>>, vector<1x1x32xf32>
      %185 = vector.shape_cast %184 : vector<1x1x32xf32> to vector<1x32xf32>
      %cst_83 = arith.constant dense<0.000000e+00> : vector<8xf32>
      %186 = vector.multi_reduction <add>, %179, %cst_83 [1] : vector<8x32xf32> to vector<8xf32>
      %187 = vector.shape_cast %186 : vector<8xf32> to vector<8x1xf32>
      %cst_84 = arith.constant 3.200000e+01 : f32
      %188 = vector.broadcast %cst_84 : f32 to vector<8x1xf32>
      %189 = arith.divf %187, %188 : vector<8x1xf32>
      %190 = vector.broadcast %189 : vector<8x1xf32> to vector<8x32xf32>
      %191 = arith.subf %179, %190 : vector<8x32xf32>
      %192 = arith.mulf %191, %191 : vector<8x32xf32>
      %cst_85 = arith.constant dense<0.000000e+00> : vector<8xf32>
      %193 = vector.multi_reduction <add>, %192, %cst_85 [1] : vector<8x32xf32> to vector<8xf32>
      %194 = vector.shape_cast %193 : vector<8xf32> to vector<8x1xf32>
      %cst_86 = arith.constant 3.200000e+01 : f32
      %195 = vector.broadcast %cst_86 : f32 to vector<8x1xf32>
      %196 = arith.divf %194, %195 : vector<8x1xf32>
      %cst_87 = arith.constant 9.99999974E-6 : f32
      %197 = vector.broadcast %cst_87 : f32 to vector<8x1xf32>
      %198 = arith.addf %196, %197 : vector<8x1xf32>
      %199 = math.rsqrt %198 : vector<8x1xf32>
      %200 = vector.broadcast %199 : vector<8x1xf32> to vector<8x32xf32>
      %201 = arith.mulf %191, %200 : vector<8x32xf32>
      %202 = vector.broadcast %182 : vector<1x32xf32> to vector<8x32xf32>
      %203 = arith.mulf %201, %202 : vector<8x32xf32>
      %204 = vector.broadcast %185 : vector<1x32xf32> to vector<8x32xf32>
      %205 = arith.addf %203, %204 : vector<8x32xf32>
      %206 = arith.index_cast %arg28 : i32 to index
      %c0_88 = arith.constant 0 : index
      %c0_89 = arith.constant 0 : index
      %207 = vector.load %arg20[%206, %c0_88, %c0_89] : memref<2x32x64xf32, #tpu.memory_space<vmem>>, vector<1x32x64xf32>
      %208 = vector.shape_cast %207 : vector<1x32x64xf32> to vector<32x64xf32>
      %209 = arith.index_cast %arg28 : i32 to index
      %c0_90 = arith.constant 0 : index
      %c0_91 = arith.constant 0 : index
      %210 = vector.load %arg21[%209, %c0_90, %c0_91] : memref<2x1x64xf32, #tpu.memory_space<vmem>>, vector<1x1x64xf32>
      %211 = vector.shape_cast %210 : vector<1x1x64xf32> to vector<1x64xf32>
      %212 = arith.index_cast %arg28 : i32 to index
      %c0_92 = arith.constant 0 : index
      %c0_93 = arith.constant 0 : index
      %213 = vector.load %arg22[%212, %c0_92, %c0_93] : memref<2x64x32xf32, #tpu.memory_space<vmem>>, vector<1x64x32xf32>
      %214 = vector.shape_cast %213 : vector<1x64x32xf32> to vector<64x32xf32>
      %215 = arith.index_cast %arg28 : i32 to index
      %c0_94 = arith.constant 0 : index
      %c0_95 = arith.constant 0 : index
      %216 = vector.load %arg23[%215, %c0_94, %c0_95] : memref<2x1x32xf32, #tpu.memory_space<vmem>>, vector<1x1x32xf32>
      %217 = vector.shape_cast %216 : vector<1x1x32xf32> to vector<1x32xf32>
      %cst_96 = arith.constant dense<0.000000e+00> : vector<8x64xf32>
      %218 = tpu.matmul %205, %208, %cst_96 {dimension_numbers = #tpu.dot_dimension_numbers<[1], [0], [0], [1], [0, 0, 1, 1], [], []>} : vector<8x32xf32>, vector<32x64xf32>, vector<8x64xf32> -> vector<8x64xf32>
      %219 = vector.broadcast %211 : vector<1x64xf32> to vector<8x64xf32>
      %220 = arith.addf %218, %219 : vector<8x64xf32>
      %cst_97 = arith.constant 0.000000e+00 : f32
      %221 = vector.broadcast %cst_97 : f32 to vector<8x64xf32>
      %222 = arith.maximumf %220, %221 : vector<8x64xf32>
      %cst_98 = arith.constant dense<0.000000e+00> : vector<8x32xf32>
      %223 = tpu.matmul %222, %214, %cst_98 {dimension_numbers = #tpu.dot_dimension_numbers<[1], [0], [0], [1], [0, 0, 1, 1], [], []>} : vector<8x64xf32>, vector<64x32xf32>, vector<8x32xf32> -> vector<8x32xf32>
      %224 = vector.broadcast %217 : vector<1x32xf32> to vector<8x32xf32>
      %225 = arith.addf %223, %224 : vector<8x32xf32>
      %226 = arith.addf %205, %225 : vector<8x32xf32>
      %227 = arith.index_cast %arg28 : i32 to index
      %c0_99 = arith.constant 0 : index
      %c0_100 = arith.constant 0 : index
      %228 = vector.load %arg18[%227, %c0_99, %c0_100] : memref<2x1x32xf32, #tpu.memory_space<vmem>>, vector<1x1x32xf32>
      %229 = vector.shape_cast %228 : vector<1x1x32xf32> to vector<1x32xf32>
      %230 = arith.index_cast %arg28 : i32 to index
      %c0_101 = arith.constant 0 : index
      %c0_102 = arith.constant 0 : index
      %231 = vector.load %arg19[%230, %c0_101, %c0_102] : memref<2x1x32xf32, #tpu.memory_space<vmem>>, vector<1x1x32xf32>
      %232 = vector.shape_cast %231 : vector<1x1x32xf32> to vector<1x32xf32>
      %cst_103 = arith.constant dense<0.000000e+00> : vector<8xf32>
      %233 = vector.multi_reduction <add>, %226, %cst_103 [1] : vector<8x32xf32> to vector<8xf32>
      %234 = vector.shape_cast %233 : vector<8xf32> to vector<8x1xf32>
      %cst_104 = arith.constant 3.200000e+01 : f32
      %235 = vector.broadcast %cst_104 : f32 to vector<8x1xf32>
      %236 = arith.divf %234, %235 : vector<8x1xf32>
      %237 = vector.broadcast %236 : vector<8x1xf32> to vector<8x32xf32>
      %238 = arith.subf %226, %237 : vector<8x32xf32>
      %239 = arith.mulf %238, %238 : vector<8x32xf32>
      %cst_105 = arith.constant dense<0.000000e+00> : vector<8xf32>
      %240 = vector.multi_reduction <add>, %239, %cst_105 [1] : vector<8x32xf32> to vector<8xf32>
      %241 = vector.shape_cast %240 : vector<8xf32> to vector<8x1xf32>
      %cst_106 = arith.constant 3.200000e+01 : f32
      %242 = vector.broadcast %cst_106 : f32 to vector<8x1xf32>
      %243 = arith.divf %241, %242 : vector<8x1xf32>
      %cst_107 = arith.constant 9.99999974E-6 : f32
      %244 = vector.broadcast %cst_107 : f32 to vector<8x1xf32>
      %245 = arith.addf %243, %244 : vector<8x1xf32>
      %246 = math.rsqrt %245 : vector<8x1xf32>
      %247 = vector.broadcast %246 : vector<8x1xf32> to vector<8x32xf32>
      %248 = arith.mulf %238, %247 : vector<8x32xf32>
      %249 = vector.broadcast %229 : vector<1x32xf32> to vector<8x32xf32>
      %250 = arith.mulf %248, %249 : vector<8x32xf32>
      %251 = vector.broadcast %232 : vector<1x32xf32> to vector<8x32xf32>
      %252 = arith.addf %250, %251 : vector<8x32xf32>
      scf.yield %252, %174 : vector<8x32xf32>, vector<4x8x8xf32>
    }
    %c2_i32_16 = arith.constant 2 : i32
    %21 = vector.extract_strided_slice %20#1 {offsets = [0, 0, 0], sizes = [1, 8, 8], strides = [1, 1, 1]} : vector<4x8x8xf32> to vector<1x8x8xf32>
    %22 = vector.shape_cast %21 : vector<1x8x8xf32> to vector<8x8xf32>
    %23 = vector.extract_strided_slice %20#1 {offsets = [1, 0, 0], sizes = [1, 8, 8], strides = [1, 1, 1]} : vector<4x8x8xf32> to vector<1x8x8xf32>
    %24 = vector.shape_cast %23 : vector<1x8x8xf32> to vector<8x8xf32>
    %25 = vector.extract_strided_slice %20#1 {offsets = [2, 0, 0], sizes = [1, 8, 8], strides = [1, 1, 1]} : vector<4x8x8xf32> to vector<1x8x8xf32>
    %26 = vector.shape_cast %25 : vector<1x8x8xf32> to vector<8x8xf32>
    %27 = vector.extract_strided_slice %20#1 {offsets = [3, 0, 0], sizes = [1, 8, 8], strides = [1, 1, 1]} : vector<4x8x8xf32> to vector<1x8x8xf32>
    %28 = vector.shape_cast %27 : vector<1x8x8xf32> to vector<8x8xf32>
    %cst_17 = arith.constant 0.000000e+00 : f32
    %29 = vector.broadcast %cst_17 : f32 to vector<8x96xf32>
    %30 = tpu.concatenate %22, %24, %26, %28, %29 in 1 : vector<8x8xf32>, vector<8x8xf32>, vector<8x8xf32>, vector<8x8xf32>, vector<8x96xf32> -> vector<8x128xf32>
    %c0_18 = arith.constant 0 : index
    %c0_19 = arith.constant 0 : index
    %c0_20 = arith.constant 0 : index
    %31 = vector.load %arg27[%c0_18, %c0_19, %c0_20] : memref<1x8x128xf32, #tpu.memory_space<vmem>>, vector<1x8x128xf32>
    %32 = vector.shape_cast %31 : vector<1x8x128xf32> to vector<8x128xf32>
    %33 = vector.shape_cast %30 : vector<8x128xf32> to vector<1x8x128xf32>
    tpu.vector_store %arg27[%c0_18, %c0_19, %c0_20], %33 {strides = array<i32>} : memref<1x8x128xf32, #tpu.memory_space<vmem>>, vector<1x8x128xf32>,
    %c0_21 = arith.constant 0 : index
    %c0_22 = arith.constant 0 : index
    %34 = vector.load %arg24[%c0_21, %c0_22] : memref<32x128xf32, #tpu.memory_space<vmem>>, vector<32x128xf32>
    %cst_23 = arith.constant dense<0.000000e+00> : vector<8x128xf32>
    %35 = tpu.matmul %20#0, %34, %cst_23 {dimension_numbers = #tpu.dot_dimension_numbers<[1], [0], [0], [1], [0, 0, 1, 1], [], []>} : vector<8x32xf32>, vector<32x128xf32>, vector<8x128xf32> -> vector<8x128xf32>
    %c0_24 = arith.constant 0 : index
    %c0_25 = arith.constant 0 : index
    %36 = vector.load %arg25[%c0_24, %c0_25] : memref<1x128xf32, #tpu.memory_space<vmem>>, vector<1x128xf32>
    %37 = vector.broadcast %36 : vector<1x128xf32> to vector<8x128xf32>
    %38 = arith.addf %35, %37 : vector<8x128xf32>
    %c0_26 = arith.constant 0 : index
    %c0_27 = arith.constant 0 : index
    %c0_28 = arith.constant 0 : index
    %39 = vector.load %arg26[%c0_26, %c0_27, %c0_28] : memref<1x8x128xf32, #tpu.memory_space<vmem>>, vector<1x8x128xf32>
    %40 = vector.shape_cast %39 : vector<1x8x128xf32> to vector<8x128xf32>
    %41 = vector.shape_cast %38 : vector<8x128xf32> to vector<1x8x128xf32>
    tpu.vector_store %arg26[%c0_26, %c0_27, %c0_28], %41 {strides = array<i32>} : memref<1x8x128xf32, #tpu.memory_space<vmem>>, vector<1x8x128xf32>,
    return
  }
  func.func @transform_0(%arg0: i32) -> (i32, i32, i32) {
    %c0_i32 = arith.constant 0 : i32
    %c0_i32_0 = arith.constant 0 : i32
    %c0_i32_1 = arith.constant 0 : i32
    return %arg0, %c0_i32, %c0_i32_0 : i32, i32, i32
  }
  func.func @transform_1(%arg0: i32) -> (i32, i32, i32) {
    %c0_i32 = arith.constant 0 : i32
    %c0_i32_0 = arith.constant 0 : i32
    %c0_i32_1 = arith.constant 0 : i32
    return %arg0, %c0_i32, %c0_i32_0 : i32, i32, i32
  }
  func.func @transform_2(%arg0: i32) -> (i32, i32, i32) {
    %c0_i32 = arith.constant 0 : i32
    %c0_i32_0 = arith.constant 0 : i32
    %c0_i32_1 = arith.constant 0 : i32
    return %arg0, %c0_i32, %c0_i32_0 : i32, i32, i32
  }
  func.func @transform_3(%arg0: i32) -> (i32, i32, i32) {
    %c0_i32 = arith.constant 0 : i32
    %c0_i32_0 = arith.constant 0 : i32
    %c0_i32_1 = arith.constant 0 : i32
    return %arg0, %c0_i32, %c0_i32_0 : i32, i32, i32
  }
  func.func @transform_4(%arg0: i32) -> (i32, i32) {
    %c0_i32 = arith.constant 0 : i32
    %c0_i32_0 = arith.constant 0 : i32
    %c0_i32_1 = arith.constant 0 : i32
    return %c0_i32, %c0_i32_0 : i32, i32
  }
  func.func @transform_5(%arg0: i32) -> (i32, i32, i32) {
    %c0_i32 = arith.constant 0 : i32
    %c0_i32_0 = arith.constant 0 : i32
    %c0_i32_1 = arith.constant 0 : i32
    %c0_i32_2 = arith.constant 0 : i32
    return %c0_i32, %c0_i32_0, %c0_i32_1 : i32, i32, i32
  }
  func.func @transform_6(%arg0: i32) -> (i32, i32, i32) {
    %c0_i32 = arith.constant 0 : i32
    %c0_i32_0 = arith.constant 0 : i32
    %c0_i32_1 = arith.constant 0 : i32
    %c0_i32_2 = arith.constant 0 : i32
    return %c0_i32, %c0_i32_0, %c0_i32_1 : i32, i32, i32
  }
  func.func @transform_7(%arg0: i32) -> (i32, i32, i32, i32) {
    %c0_i32 = arith.constant 0 : i32
    %c0_i32_0 = arith.constant 0 : i32
    %c0_i32_1 = arith.constant 0 : i32
    %c0_i32_2 = arith.constant 0 : i32
    %c0_i32_3 = arith.constant 0 : i32
    return %c0_i32, %c0_i32_0, %c0_i32_1, %c0_i32_2 : i32, i32, i32, i32
  }
  func.func @transform_8(%arg0: i32) -> (i32, i32, i32) {
    %c0_i32 = arith.constant 0 : i32
    %c0_i32_0 = arith.constant 0 : i32
    %c0_i32_1 = arith.constant 0 : i32
    %c0_i32_2 = arith.constant 0 : i32
    return %c0_i32, %c0_i32_0, %c0_i32_1 : i32, i32, i32
  }
  func.func @transform_9(%arg0: i32) -> (i32, i32, i32) {
    %c0_i32 = arith.constant 0 : i32
    %c0_i32_0 = arith.constant 0 : i32
    %c0_i32_1 = arith.constant 0 : i32
    %c0_i32_2 = arith.constant 0 : i32
    return %c0_i32, %c0_i32_0, %c0_i32_1 : i32, i32, i32
  }
  func.func @transform_10(%arg0: i32) -> (i32, i32, i32) {
    %c0_i32 = arith.constant 0 : i32
    %c0_i32_0 = arith.constant 0 : i32
    %c0_i32_1 = arith.constant 0 : i32
    %c0_i32_2 = arith.constant 0 : i32
    return %c0_i32, %c0_i32_0, %c0_i32_1 : i32, i32, i32
  }
  func.func @transform_11(%arg0: i32) -> (i32, i32, i32, i32) {
    %c0_i32 = arith.constant 0 : i32
    %c0_i32_0 = arith.constant 0 : i32
    %c0_i32_1 = arith.constant 0 : i32
    %c0_i32_2 = arith.constant 0 : i32
    %c0_i32_3 = arith.constant 0 : i32
    return %c0_i32, %c0_i32_0, %c0_i32_1, %c0_i32_2 : i32, i32, i32, i32
  }
  func.func @transform_12(%arg0: i32) -> (i32, i32, i32) {
    %c0_i32 = arith.constant 0 : i32
    %c0_i32_0 = arith.constant 0 : i32
    %c0_i32_1 = arith.constant 0 : i32
    %c0_i32_2 = arith.constant 0 : i32
    return %c0_i32, %c0_i32_0, %c0_i32_1 : i32, i32, i32
  }
  func.func @transform_13(%arg0: i32) -> (i32, i32, i32) {
    %c0_i32 = arith.constant 0 : i32
    %c0_i32_0 = arith.constant 0 : i32
    %c0_i32_1 = arith.constant 0 : i32
    %c0_i32_2 = arith.constant 0 : i32
    return %c0_i32, %c0_i32_0, %c0_i32_1 : i32, i32, i32
  }
  func.func @transform_14(%arg0: i32) -> (i32, i32, i32) {
    %c0_i32 = arith.constant 0 : i32
    %c0_i32_0 = arith.constant 0 : i32
    %c0_i32_1 = arith.constant 0 : i32
    %c0_i32_2 = arith.constant 0 : i32
    return %c0_i32, %c0_i32_0, %c0_i32_1 : i32, i32, i32
  }
  func.func @transform_15(%arg0: i32) -> (i32, i32, i32) {
    %c0_i32 = arith.constant 0 : i32
    %c0_i32_0 = arith.constant 0 : i32
    %c0_i32_1 = arith.constant 0 : i32
    %c0_i32_2 = arith.constant 0 : i32
    return %c0_i32, %c0_i32_0, %c0_i32_1 : i32, i32, i32
  }
  func.func @transform_16(%arg0: i32) -> (i32, i32, i32) {
    %c0_i32 = arith.constant 0 : i32
    %c0_i32_0 = arith.constant 0 : i32
    %c0_i32_1 = arith.constant 0 : i32
    %c0_i32_2 = arith.constant 0 : i32
    return %c0_i32, %c0_i32_0, %c0_i32_1 : i32, i32, i32
  }
  func.func @transform_17(%arg0: i32) -> (i32, i32, i32) {
    %c0_i32 = arith.constant 0 : i32
    %c0_i32_0 = arith.constant 0 : i32
    %c0_i32_1 = arith.constant 0 : i32
    %c0_i32_2 = arith.constant 0 : i32
    return %c0_i32, %c0_i32_0, %c0_i32_1 : i32, i32, i32
  }
  func.func @transform_18(%arg0: i32) -> (i32, i32, i32) {
    %c0_i32 = arith.constant 0 : i32
    %c0_i32_0 = arith.constant 0 : i32
    %c0_i32_1 = arith.constant 0 : i32
    %c0_i32_2 = arith.constant 0 : i32
    return %c0_i32, %c0_i32_0, %c0_i32_1 : i32, i32, i32
  }
  func.func @transform_19(%arg0: i32) -> (i32, i32, i32) {
    %c0_i32 = arith.constant 0 : i32
    %c0_i32_0 = arith.constant 0 : i32
    %c0_i32_1 = arith.constant 0 : i32
    %c0_i32_2 = arith.constant 0 : i32
    return %c0_i32, %c0_i32_0, %c0_i32_1 : i32, i32, i32
  }
  func.func @transform_20(%arg0: i32) -> (i32, i32, i32) {
    %c0_i32 = arith.constant 0 : i32
    %c0_i32_0 = arith.constant 0 : i32
    %c0_i32_1 = arith.constant 0 : i32
    %c0_i32_2 = arith.constant 0 : i32
    return %c0_i32, %c0_i32_0, %c0_i32_1 : i32, i32, i32
  }
  func.func @transform_21(%arg0: i32) -> (i32, i32, i32) {
    %c0_i32 = arith.constant 0 : i32
    %c0_i32_0 = arith.constant 0 : i32
    %c0_i32_1 = arith.constant 0 : i32
    %c0_i32_2 = arith.constant 0 : i32
    return %c0_i32, %c0_i32_0, %c0_i32_1 : i32, i32, i32
  }
  func.func @transform_22(%arg0: i32) -> (i32, i32, i32) {
    %c0_i32 = arith.constant 0 : i32
    %c0_i32_0 = arith.constant 0 : i32
    %c0_i32_1 = arith.constant 0 : i32
    %c0_i32_2 = arith.constant 0 : i32
    return %c0_i32, %c0_i32_0, %c0_i32_1 : i32, i32, i32
  }
  func.func @transform_23(%arg0: i32) -> (i32, i32) {
    %c0_i32 = arith.constant 0 : i32
    %c0_i32_0 = arith.constant 0 : i32
    %c0_i32_1 = arith.constant 0 : i32
    return %c0_i32, %c0_i32_0 : i32, i32
  }
  func.func @transform_24(%arg0: i32) -> (i32, i32) {
    %c0_i32 = arith.constant 0 : i32
    %c0_i32_0 = arith.constant 0 : i32
    %c0_i32_1 = arith.constant 0 : i32
    return %c0_i32, %c0_i32_0 : i32, i32
  }
  func.func @transform_25(%arg0: i32) -> (i32, i32, i32) {
    %c0_i32 = arith.constant 0 : i32
    %c0_i32_0 = arith.constant 0 : i32
    %c0_i32_1 = arith.constant 0 : i32
    return %arg0, %c0_i32, %c0_i32_0 : i32, i32, i32
  }
  func.func @transform_26(%arg0: i32) -> (i32, i32, i32) {
    %c0_i32 = arith.constant 0 : i32
    %c0_i32_0 = arith.constant 0 : i32
    %c0_i32_1 = arith.constant 0 : i32
    return %arg0, %c0_i32, %c0_i32_0 : i32, i32, i32
  }
}

</mosaic_0001>

<llo_original>
// kernel: tpu_custom_call.1
$region0: #{tpu_custom_call.1}
  #allocation0 [shape = 'u32[]', space=smem, size = 0x4, offset = 0x4, fixed_abs, tag = 'smem constant byte address 0x4 - core index']
  #allocation1 [shape = 'u32[144,128]{1,0:T(1,128)}', space=vmem, size = 0x12000, scoped, tag = 'internal scratch']
  %s0 = inlined_call_operand.hbm [shape: f32[2,8,32], index: 0, kind: input, shape index: {}]
  %s1 = inlined_call_operand.hbm [shape: f32[2,8,32], index: 1, kind: input, shape index: {}]
  %s2 = inlined_call_operand.hbm [shape: f32[2,8,8], index: 2, kind: input, shape index: {}]
  %s3 = inlined_call_operand.hbm [shape: f32[2,1,8], index: 3, kind: input, shape index: {}]
  %s4 = inlined_call_operand.hbm [shape: f32[8,32], index: 4, kind: input, shape index: {}]
  %s5 = inlined_call_operand.vmem [shape: f32[2,32,32], index: 5, kind: input, shape index: {}]
  %s6 = inlined_call_operand.hbm [shape: f32[2,1,32], index: 6, kind: input, shape index: {}]
  %s7 = inlined_call_operand.vmem [shape: f32[2,4,8,32], index: 7, kind: input, shape index: {}]
  %s8 = inlined_call_operand.hbm [shape: f32[2,1,32], index: 8, kind: input, shape index: {}]
  %s9 = inlined_call_operand.vmem [shape: f32[2,32,32], index: 9, kind: input, shape index: {}]
  %s10 = inlined_call_operand.hbm [shape: f32[2,1,32], index: 10, kind: input, shape index: {}]
  %s11 = inlined_call_operand.hbm [shape: f32[2,4,8,32], index: 11, kind: input, shape index: {}]
  %s12 = inlined_call_operand.hbm [shape: f32[2,1,32], index: 12, kind: input, shape index: {}]
  %s13 = inlined_call_operand.hbm [shape: f32[2,1,32], index: 13, kind: input, shape index: {}]
  %s14 = inlined_call_operand.hbm [shape: f32[2,1,32], index: 14, kind: input, shape index: {}]
  %s15 = inlined_call_operand.hbm [shape: f32[2,1,32], index: 15, kind: input, shape index: {}]
  %s16 = inlined_call_operand.hbm [shape: f32[2,1,32], index: 16, kind: input, shape index: {}]
  %s17 = inlined_call_operand.hbm [shape: f32[2,1,32], index: 17, kind: input, shape index: {}]
  %s18 = inlined_call_operand.hbm [shape: f32[2,1,32], index: 18, kind: input, shape index: {}]
  %s19 = inlined_call_operand.hbm [shape: f32[2,32,64], index: 19, kind: input, shape index: {}]
  %s20 = inlined_call_operand.vmem [shape: f32[2,1,64], index: 20, kind: input, shape index: {}]
  %s21 = inlined_call_operand.vmem [shape: f32[2,64,32], index: 21, kind: input, shape index: {}]
  %s22 = inlined_call_operand.vmem [shape: f32[2,1,32], index: 22, kind: input, shape index: {}]
  %s23 = inlined_call_operand.vmem [shape: f32[32,128], index: 23, kind: input, shape index: {}]
  %s24 = inlined_call_operand.vmem [shape: f32[1,128], index: 24, kind: input, shape index: {}]
  %s25 = inlined_call_operand.hbm [shape: f32[2,8,128], index: 25, kind: output, shape index: {0}]
  %s26 = inlined_call_operand.hbm [shape: f32[2,8,128], index: 26, kind: output, shape index: {1}]
  %27 = xla_tuple %s25, %s26
  %s28 = sld [smem:[#allocation0]]
  $region216: #{tpu_custom_call.1} parent=0
    _
  %s30 = ssub.s32 1, %s28
  %s31 = scalar_select 0, %s30, %s28
  $region1: #{tpu_custom_call.1} parent=0
    #allocation2 [shape = 'u8[8192]{0}', space=vmem, size = 0x2000, scoped, tag = 'input window, operand 0']
    #allocation3 [shape = 's32[2]{0}', space=sflag, size = 0x8, scoped, tag = 'scoped memory for tpu_custom_call.1']
    #allocation4 [shape = 's32[2]{0}', space=sflag, size = 0x8, scoped, tag = 'scoped memory for tpu_custom_call.1']
    #allocation5 [shape = 'u8[8192]{0}', space=vmem, size = 0x2000, scoped, tag = 'input window, operand 1']
    #allocation6 [shape = 's32[2]{0}', space=sflag, size = 0x8, scoped, tag = 'scoped memory for tpu_custom_call.1']
    #allocation7 [shape = 'u8[8192]{0}', space=vmem, size = 0x2000, scoped, tag = 'input window, operand 2']
    #allocation8 [shape = 'u8[1024]{0}', space=vmem, size = 0x400, scoped, tag = 'input window, operand 3']
    #allocation9 [shape = 's32[2]{0}', space=sflag, size = 0x8, scoped, tag = 'scoped memory for tpu_custom_call.1']
    #allocation10 [shape = 'u8[4096]{0}', space=vmem, size = 0x1000, scoped, tag = 'input window, operand 4, single buffered']
    #allocation11 [shape = 'u8[1024]{0}', space=vmem, size = 0x400, scoped, tag = 'input window, operand 6, single buffered']
    #allocation12 [shape = 's32[1]{0}', space=sflag, size = 0x4, scoped, tag = 'scoped memory for tpu_custom_call.1']
    #allocation13 [shape = 'u8[1024]{0}', space=vmem, size = 0x400, scoped, tag = 'input window, operand 8, single buffered']
    #allocation14 [shape = 'u8[1024]{0}', space=vmem, size = 0x400, scoped, tag = 'input window, operand 10, single buffered']
    #allocation15 [shape = 's32[1]{0}', space=sflag, size = 0x4, scoped, tag = 'scoped memory for tpu_custom_call.1']
    #allocation16 [shape = 'u8[32768]{0}', space=vmem, size = 0x8000, scoped, tag = 'input window, operand 11, single buffered']
    #allocation17 [shape = 'u8[1024]{0}', space=vmem, size = 0x400, scoped, tag = 'input window, operand 12, single buffered']
    #allocation18 [shape = 's32[1]{0}', space=sflag, size = 0x4, scoped, tag = 'scoped memory for tpu_custom_call.1']
    #allocation19 [shape = 'u8[1024]{0}', space=vmem, size = 0x400, scoped, tag = 'input window, operand 13, single buffered']
    #allocation20 [shape = 'u8[1024]{0}', space=vmem, size = 0x400, scoped, tag = 'input window, operand 14, single buffered']
    #allocation21 [shape = 's32[1]{0}', space=sflag, size = 0x4, scoped, tag = 'scoped memory for tpu_custom_call.1']
    #allocation22 [shape = 'u8[1024]{0}', space=vmem, size = 0x400, scoped, tag = 'input window, operand 15, single buffered']
    #allocation23 [shape = 'u8[1024]{0}', space=vmem, size = 0x400, scoped, tag = 'input window, operand 16, single buffered']
    #allocation24 [shape = 's32[1]{0}', space=sflag, size = 0x4, scoped, tag = 'scoped memory for tpu_custom_call.1']
    #allocation25 [shape = 'u8[1024]{0}', space=vmem, size = 0x400, scoped, tag = 'input window, operand 17, single buffered']
    #allocation26 [shape = 'u8[1024]{0}', space=vmem, size = 0x400, scoped, tag = 'input window, operand 18, single buffered']
    #allocation27 [shape = 's32[1]{0}', space=sflag, size = 0x4, scoped, tag = 'scoped memory for tpu_custom_call.1']
    #allocation28 [shape = 'u8[32768]{0}', space=vmem, size = 0x8000, scoped, tag = 'input window, operand 19, single buffered']
    #allocation29 [shape = 'u8[8192]{0}', space=vmem, size = 0x2000, scoped, tag = 'output window, operand 0']
    #allocation30 [shape = 'u8[8192]{0}', space=vmem, size = 0x2000, scoped, tag = 'output window, operand 1']
    #allocation31 [shape = 's32[2]{0}', space=sflag, size = 0x8, scoped, tag = 'scoped memory for tpu_custom_call.1']
    %32 = vsyncpa [#allocation3], 0
    %s33 = scalar_lea.sflag [#allocation3], 1
    %34 = vsyncpa %s33, 0
    %35 = vsyncpa [#allocation6], 0
    %s36 = scalar_lea.sflag [#allocation6], 1
    %37 = vsyncpa %s36, 0
    %38 = vsyncpa [#allocation9], 0
    %s39 = scalar_lea.sflag [#allocation9], 1
    %40 = vsyncpa %s39, 0
    %41 = vsyncpa [#allocation12], 0
    %42 = vsyncpa [#allocation15], 0
    %43 = vsyncpa [#allocation18], 0
    %44 = vsyncpa [#allocation21], 0
    %45 = vsyncpa [#allocation24], 0
    %46 = vsyncpa [#allocation27], 0
    %47 = vsyncpa [#allocation4], 0
    %s48 = scalar_lea.sflag [#allocation4], 1
    %49 = vsyncpa %s48, 0
    %50 = vsyncpa [#allocation31], 0
    %s51 = scalar_lea.sflag [#allocation31], 1
    %52 = vsyncpa %s51, 0
    loop: start=0, step=1, limit=4
    $region2: #{tpu_custom_call.1} parent=1 // loop_pre_header
      _
    $region3: #{tpu_custom_call.1} parent=1 // loop_header
      %s54 = sphi 0, %s58
      %p55 = scmp.ge.s32.totalorder %s54, 4
      %s64 = sphi 0, %s66
      %s67 = sphi 0, %s64
      %s68 = sphi 0, %s67
      %s84 = sphi 0, %s68
      %s90 = sphi 0, %s92
      %s93 = sphi 0, %s90
      %s94 = sphi 0, %s93
      %s110 = sphi 0, %s94
      %s116 = sphi 0, %s118
      %s119 = sphi 0, %s116
      %s120 = sphi 0, %s119
      %s136 = sphi 0, %s120
      %s142 = sphi 0, %s144
      %s145 = sphi 0, %s142
      %s146 = sphi 0, %s145
      %s162 = sphi 0, %s146
      %s166 = sphi 0, %s166
      %s168 = sphi 0, %s166
      %s169 = sphi 0, %s168
      %s183 = sphi 0, %s169
      %s187 = sphi 0, %s187
      %s189 = sphi 0, %s187
      %s190 = sphi 0, %s189
      %s204 = sphi 0, %s190
      %s208 = sphi 0, %s208
      %s210 = sphi 0, %s208
      %s211 = sphi 0, %s210
      %s225 = sphi 0, %s211
      %s229 = sphi 0, %s229
      %s231 = sphi 0, %s229
      %s232 = sphi 0, %s231
      %s246 = sphi 0, %s232
      %s250 = sphi 0, %s250
      %s252 = sphi 0, %s250
      %s253 = sphi 0, %s252
      %s267 = sphi 0, %s253
      %s271 = sphi 0, %s271
      %s273 = sphi 0, %s271
      %s274 = sphi 0, %s273
      %s288 = sphi 0, %s274
      %s292 = sphi 0, %s292
      %s294 = sphi 0, %s292
      %s295 = sphi 0, %s294
      %s309 = sphi 0, %s295
      %s313 = sphi 0, %s313
      %s315 = sphi 0, %s313
      %s316 = sphi 0, %s315
      %s330 = sphi 0, %s316
      %s334 = sphi 0, %s334
      %s336 = sphi 0, %s334
      %s337 = sphi 0, %s336
      %s351 = sphi 0, %s337
      %s355 = sphi 0, %s355
      %s357 = sphi 0, %s355
      %s358 = sphi 0, %s357
      %s372 = sphi 0, %s358
      %s376 = sphi 0, %s376
      %s378 = sphi 0, %s376
      %s379 = sphi 0, %s378
      %s393 = sphi 0, %s379
      %s397 = sphi 0, %s397
      %s399 = sphi 0, %s397
      %s400 = sphi 0, %s399
      %s414 = sphi 0, %s400
      %s418 = sphi 0, %s418
      %s420 = sphi 0, %s418
      %s421 = sphi 0, %s420
      %s435 = sphi 0, %s421
      %s439 = sphi 0, %s439
      %s441 = sphi 0, %s439
      %s442 = sphi 0, %s441
      %s456 = sphi 0, %s442
      %s460 = sphi 0, %s460
      %s462 = sphi 0, %s460
      %s463 = sphi 0, %s462
      %s477 = sphi 0, %s463
      %s481 = sphi 0, %s481
      %s483 = sphi 0, %s481
      %s484 = sphi 0, %s483
      %s498 = sphi 0, %s484
      %s502 = sphi 0, %s502
      %s504 = sphi 0, %s502
      %s505 = sphi 0, %s504
      %s519 = sphi 0, %s505
      %s523 = sphi 0, %s523
      %s525 = sphi 0, %s523
      %s526 = sphi 0, %s525
      %s540 = sphi 0, %s526
      %s544 = sphi 0, %s544
      %s546 = sphi 0, %s544
      %s547 = sphi 0, %s546
      %s561 = sphi 0, %s547
      %s565 = sphi 0, %s565
      %s567 = sphi 0, %s565
      %s568 = sphi 0, %s567
      %s582 = sphi 0, %s568
      %s586 = sphi 0, %s586
      %s588 = sphi 0, %s586
      %s589 = sphi 0, %s588
      %s603 = sphi 0, %s589
      %s609 = sphi 0, %s611
      %s612 = sphi 0, %s609
      %s613 = sphi 0, %s612
      %s629 = sphi 0, %s613
      %s635 = sphi 0, %s637
      %s638 = sphi 0, %s635
      %s639 = sphi 0, %s638
      %s655 = sphi 0, %s639
    $region4: #{tpu_custom_call.1} parent=1 // loop_header_branch
      %57 = sbr.rel (%p55) target = $region8
    $region5: #{tpu_custom_call.1} parent=1 // loop_body
      %s59 = ssub.s32 %s54, 1
      %s60 = ssub.s32 %s54, 2
      %s61 = sadd.s32 %s54, 1
      %s62 = ssub.s32 %s54, %s61
      %p63 = scmp.eq.s32.totalorder %s62, 0
      %s65 = sadd.s32 %s64, 1
      %s66 = scalar_select %p63, %s64, %s65
      %p69 = pneg %p63
      %p70 = scmp.eq.s32.totalorder %s54, 1
      %p71 = por %p69, %p70
      %p72 = scmp.ne.s32.totalorder %s64, %s67
      %p73 = scmp.eq.s32.totalorder %s54, 0
      %p74 = por %p72, %p73
      %p75 = scmp.ne.s32.totalorder %s64, %s67
      %p76 = scmp.eq.s32.totalorder %s59, 1
      %p77 = por %p75, %p76
      %p78 = scmp.ne.s32.totalorder %s67, %s68
      %p79 = scmp.eq.s32.totalorder %s59, 0
      %p80 = por %p78, %p79
      %p81 = scmp.ne.s32.totalorder %s67, %s68
      %p82 = scmp.eq.s32.totalorder %s60, 1
      %p83 = por %p81, %p82
      %p85 = scmp.ne.s32.totalorder %s68, %s84
      %p86 = scmp.eq.s32.totalorder %s60, 0
      %p87 = por %p85, %p86
      %s88 = ssub.s32 %s54, %s61
      %p89 = scmp.eq.s32.totalorder %s88, 0
      %s91 = sadd.s32 %s90, 1
      %s92 = scalar_select %p89, %s90, %s91
      %p95 = pneg %p89
      %p96 = scmp.eq.s32.totalorder %s54, 1
      %p97 = por %p95, %p96
      %p98 = scmp.ne.s32.totalorder %s90, %s93
      %p99 = scmp.eq.s32.totalorder %s54, 0
      %p100 = por %p98, %p99
      %p101 = scmp.ne.s32.totalorder %s90, %s93
      %p102 = scmp.eq.s32.totalorder %s59, 1
      %p103 = por %p101, %p102
      %p104 = scmp.ne.s32.totalorder %s93, %s94
      %p105 = scmp.eq.s32.totalorder %s59, 0
      %p106 = por %p104, %p105
      %p107 = scmp.ne.s32.totalorder %s93, %s94
      %p108 = scmp.eq.s32.totalorder %s60, 1
      %p109 = por %p107, %p108
      %p111 = scmp.ne.s32.totalorder %s94, %s110
      %p112 = scmp.eq.s32.totalorder %s60, 0
      %p113 = por %p111, %p112
      %s114 = ssub.s32 %s54, %s61
      %p115 = scmp.eq.s32.totalorder %s114, 0
      %s117 = sadd.s32 %s116, 1
      %s118 = scalar_select %p115, %s116, %s117
      %p121 = pneg %p115
      %p122 = scmp.eq.s32.totalorder %s54, 1
      %p123 = por %p121, %p122
      %p124 = scmp.ne.s32.totalorder %s116, %s119
      %p125 = scmp.eq.s32.totalorder %s54, 0
      %p126 = por %p124, %p125
      %p127 = scmp.ne.s32.totalorder %s116, %s119
      %p128 = scmp.eq.s32.totalorder %s59, 1
      %p129 = por %p127, %p128
      %p130 = scmp.ne.s32.totalorder %s119, %s120
      %p131 = scmp.eq.s32.totalorder %s59, 0
      %p132 = por %p130, %p131
      %p133 = scmp.ne.s32.totalorder %s119, %s120
      %p134 = scmp.eq.s32.totalorder %s60, 1
      %p135 = por %p133, %p134
      %p137 = scmp.ne.s32.totalorder %s120, %s136
      %p138 = scmp.eq.s32.totalorder %s60, 0
      %p139 = por %p137, %p138
      %s140 = ssub.s32 %s54, %s61
      %p141 = scmp.eq.s32.totalorder %s140, 0
      %s143 = sadd.s32 %s142, 1
      %s144 = scalar_select %p141, %s142, %s143
      %p147 = pneg %p141
      %p148 = scmp.eq.s32.totalorder %s54, 1
      %p149 = por %p147, %p148
      %p150 = scmp.ne.s32.totalorder %s142, %s145
      %p151 = scmp.eq.s32.totalorder %s54, 0
      %p152 = por %p150, %p151
      %p153 = scmp.ne.s32.totalorder %s142, %s145
      %p154 = scmp.eq.s32.totalorder %s59, 1
      %p155 = por %p153, %p154
      %p156 = scmp.ne.s32.totalorder %s145, %s146
      %p157 = scmp.eq.s32.totalorder %s59, 0
      %p158 = por %p156, %p157
      %p159 = scmp.ne.s32.totalorder %s145, %s146
      %p160 = scmp.eq.s32.totalorder %s60, 1
      %p161 = por %p159, %p160
      %p163 = scmp.ne.s32.totalorder %s146, %s162
      %p164 = scmp.eq.s32.totalorder %s60, 0
      %p165 = por %p163, %p164
      %s167 = sadd.s32 %s166, 1
      %p170 = scmp.eq.s32.totalorder %s54, 1
      %p171 = scmp.ne.s32.totalorder %s166, %s168
      %p172 = scmp.eq.s32.totalorder %s54, 0
      %p173 = por %p171, %p172
      %p174 = scmp.ne.s32.totalorder %s166, %s168
      %p175 = scmp.eq.s32.totalorder %s59, 1
      %p176 = por %p174, %p175
      %p177 = scmp.ne.s32.totalorder %s168, %s169
      %p178 = scmp.eq.s32.totalorder %s59, 0
      %p179 = por %p177, %p178
      %p180 = scmp.ne.s32.totalorder %s168, %s169
      %p181 = scmp.eq.s32.totalorder %s60, 1
      %p182 = por %p180, %p181
      %p184 = scmp.ne.s32.totalorder %s169, %s183
      %p185 = scmp.eq.s32.totalorder %s60, 0
      %p186 = por %p184, %p185
      %s188 = sadd.s32 %s187, 1
      %p191 = scmp.eq.s32.totalorder %s54, 1
      %p192 = scmp.ne.s32.totalorder %s187, %s189
      %p193 = scmp.eq.s32.totalorder %s54, 0
      %p194 = por %p192, %p193
      %p195 = scmp.ne.s32.totalorder %s187, %s189
      %p196 = scmp.eq.s32.totalorder %s59, 1
      %p197 = por %p195, %p196
      %p198 = scmp.ne.s32.totalorder %s189, %s190
      %p199 = scmp.eq.s32.totalorder %s59, 0
      %p200 = por %p198, %p199
      %p201 = scmp.ne.s32.totalorder %s189, %s190
      %p202 = scmp.eq.s32.totalorder %s60, 1
      %p203 = por %p201, %p202
      %p205 = scmp.ne.s32.totalorder %s190, %s204
      %p206 = scmp.eq.s32.totalorder %s60, 0
      %p207 = por %p205, %p206
      %s209 = sadd.s32 %s208, 1
      %p212 = scmp.eq.s32.totalorder %s54, 1
      %p213 = scmp.ne.s32.totalorder %s208, %s210
      %p214 = scmp.eq.s32.totalorder %s54, 0
      %p215 = por %p213, %p214
      %p216 = scmp.ne.s32.totalorder %s208, %s210
      %p217 = scmp.eq.s32.totalorder %s59, 1
      %p218 = por %p216, %p217
      %p219 = scmp.ne.s32.totalorder %s210, %s211
      %p220 = scmp.eq.s32.totalorder %s59, 0
      %p221 = por %p219, %p220
      %p222 = scmp.ne.s32.totalorder %s210, %s211
      %p223 = scmp.eq.s32.totalorder %s60, 1
      %p224 = por %p222, %p223
      %p226 = scmp.ne.s32.totalorder %s211, %s225
      %p227 = scmp.eq.s32.totalorder %s60, 0
      %p228 = por %p226, %p227
      %s230 = sadd.s32 %s229, 1
      %p233 = scmp.eq.s32.totalorder %s54, 1
      %p234 = scmp.ne.s32.totalorder %s229, %s231
      %p235 = scmp.eq.s32.totalorder %s54, 0
      %p236 = por %p234, %p235
      %p237 = scmp.ne.s32.totalorder %s229, %s231
      %p238 = scmp.eq.s32.totalorder %s59, 1
      %p239 = por %p237, %p238
      %p240 = scmp.ne.s32.totalorder %s231, %s232
      %p241 = scmp.eq.s32.totalorder %s59, 0
      %p242 = por %p240, %p241
      %p243 = scmp.ne.s32.totalorder %s231, %s232
      %p244 = scmp.eq.s32.totalorder %s60, 1
      %p245 = por %p243, %p244
      %p247 = scmp.ne.s32.totalorder %s232, %s246
      %p248 = scmp.eq.s32.totalorder %s60, 0
      %p249 = por %p247, %p248
      %s251 = sadd.s32 %s250, 1
      %p254 = scmp.eq.s32.totalorder %s54, 1
      %p255 = scmp.ne.s32.totalorder %s250, %s252
      %p256 = scmp.eq.s32.totalorder %s54, 0
      %p257 = por %p255, %p256
      %p258 = scmp.ne.s32.totalorder %s250, %s252
      %p259 = scmp.eq.s32.totalorder %s59, 1
      %p260 = por %p258, %p259
      %p261 = scmp.ne.s32.totalorder %s252, %s253
      %p262 = scmp.eq.s32.totalorder %s59, 0
      %p263 = por %p261, %p262
      %p264 = scmp.ne.s32.totalorder %s252, %s253
      %p265 = scmp.eq.s32.totalorder %s60, 1
      %p266 = por %p264, %p265
      %p268 = scmp.ne.s32.totalorder %s253, %s267
      %p269 = scmp.eq.s32.totalorder %s60, 0
      %p270 = por %p268, %p269
      %s272 = sadd.s32 %s271, 1
      %p275 = scmp.eq.s32.totalorder %s54, 1
      %p276 = scmp.ne.s32.totalorder %s271, %s273
      %p277 = scmp.eq.s32.totalorder %s54, 0
      %p278 = por %p276, %p277
      %p279 = scmp.ne.s32.totalorder %s271, %s273
      %p280 = scmp.eq.s32.totalorder %s59, 1
      %p281 = por %p279, %p280
      %p282 = scmp.ne.s32.totalorder %s273, %s274
      %p283 = scmp.eq.s32.totalorder %s59, 0
      %p284 = por %p282, %p283
      %p285 = scmp.ne.s32.totalorder %s273, %s274
      %p286 = scmp.eq.s32.totalorder %s60, 1
      %p287 = por %p285, %p286
      %p289 = scmp.ne.s32.totalorder %s274, %s288
      %p290 = scmp.eq.s32.totalorder %s60, 0
      %p291 = por %p289, %p290
      %s293 = sadd.s32 %s292, 1
      %p296 = scmp.eq.s32.totalorder %s54, 1
      %p297 = scmp.ne.s32.totalorder %s292, %s294
      %p298 = scmp.eq.s32.totalorder %s54, 0
      %p299 = por %p297, %p298
      %p300 = scmp.ne.s32.totalorder %s292, %s294
      %p301 = scmp.eq.s32.totalorder %s59, 1
      %p302 = por %p300, %p301
      %p303 = scmp.ne.s32.totalorder %s294, %s295
      %p304 = scmp.eq.s32.totalorder %s59, 0
      %p305 = por %p303, %p304
      %p306 = scmp.ne.s32.totalorder %s294, %s295
      %p307 = scmp.eq.s32.totalorder %s60, 1
      %p308 = por %p306, %p307
      %p310 = scmp.ne.s32.totalorder %s295, %s309
      %p311 = scmp.eq.s32.totalorder %s60, 0
      %p312 = por %p310, %p311
      %s314 = sadd.s32 %s313, 1
      %p317 = scmp.eq.s32.totalorder %s54, 1
      %p318 = scmp.ne.s32.totalorder %s313, %s315
      %p319 = scmp.eq.s32.totalorder %s54, 0
      %p320 = por %p318, %p319
      %p321 = scmp.ne.s32.totalorder %s313, %s315
      %p322 = scmp.eq.s32.totalorder %s59, 1
      %p323 = por %p321, %p322
      %p324 = scmp.ne.s32.totalorder %s315, %s316
      %p325 = scmp.eq.s32.totalorder %s59, 0
      %p326 = por %p324, %p325
      %p327 = scmp.ne.s32.totalorder %s315, %s316
      %p328 = scmp.eq.s32.totalorder %s60, 1
      %p329 = por %p327, %p328
      %p331 = scmp.ne.s32.totalorder %s316, %s330
      %p332 = scmp.eq.s32.totalorder %s60, 0
      %p333 = por %p331, %p332
      %s335 = sadd.s32 %s334, 1
      %p338 = scmp.eq.s32.totalorder %s54, 1
      %p339 = scmp.ne.s32.totalorder %s334, %s336
      %p340 = scmp.eq.s32.totalorder %s54, 0
      %p341 = por %p339, %p340
      %p342 = scmp.ne.s32.totalorder %s334, %s336
      %p343 = scmp.eq.s32.totalorder %s59, 1
      %p344 = por %p342, %p343
      %p345 = scmp.ne.s32.totalorder %s336, %s337
      %p346 = scmp.eq.s32.totalorder %s59, 0
      %p347 = por %p345, %p346
      %p348 = scmp.ne.s32.totalorder %s336, %s337
      %p349 = scmp.eq.s32.totalorder %s60, 1
      %p350 = por %p348, %p349
      %p352 = scmp.ne.s32.totalorder %s337, %s351
      %p353 = scmp.eq.s32.totalorder %s60, 0
      %p354 = por %p352, %p353
      %s356 = sadd.s32 %s355, 1
      %p359 = scmp.eq.s32.totalorder %s54, 1
      %p360 = scmp.ne.s32.totalorder %s355, %s357
      %p361 = scmp.eq.s32.totalorder %s54, 0
      %p362 = por %p360, %p361
      %p363 = scmp.ne.s32.totalorder %s355, %s357
      %p364 = scmp.eq.s32.totalorder %s59, 1
      %p365 = por %p363, %p364
      %p366 = scmp.ne.s32.totalorder %s357, %s358
      %p367 = scmp.eq.s32.totalorder %s59, 0
      %p368 = por %p366, %p367
      %p369 = scmp.ne.s32.totalorder %s357, %s358
      %p370 = scmp.eq.s32.totalorder %s60, 1
      %p371 = por %p369, %p370
      %p373 = scmp.ne.s32.totalorder %s358, %s372
      %p374 = scmp.eq.s32.totalorder %s60, 0
      %p375 = por %p373, %p374
      %s377 = sadd.s32 %s376, 1
      %p380 = scmp.eq.s32.totalorder %s54, 1
      %p381 = scmp.ne.s32.totalorder %s376, %s378
      %p382 = scmp.eq.s32.totalorder %s54, 0
      %p383 = por %p381, %p382
      %p384 = scmp.ne.s32.totalorder %s376, %s378
      %p385 = scmp.eq.s32.totalorder %s59, 1
      %p386 = por %p384, %p385
      %p387 = scmp.ne.s32.totalorder %s378, %s379
      %p388 = scmp.eq.s32.totalorder %s59, 0
      %p389 = por %p387, %p388
      %p390 = scmp.ne.s32.totalorder %s378, %s379
      %p391 = scmp.eq.s32.totalorder %s60, 1
      %p392 = por %p390, %p391
      %p394 = scmp.ne.s32.totalorder %s379, %s393
      %p395 = scmp.eq.s32.totalorder %s60, 0
      %p396 = por %p394, %p395
      %s398 = sadd.s32 %s397, 1
      %p401 = scmp.eq.s32.totalorder %s54, 1
      %p402 = scmp.ne.s32.totalorder %s397, %s399
      %p403 = scmp.eq.s32.totalorder %s54, 0
      %p404 = por %p402, %p403
      %p405 = scmp.ne.s32.totalorder %s397, %s399
      %p406 = scmp.eq.s32.totalorder %s59, 1
      %p407 = por %p405, %p406
      %p408 = scmp.ne.s32.totalorder %s399, %s400
      %p409 = scmp.eq.s32.totalorder %s59, 0
      %p410 = por %p408, %p409
      %p411 = scmp.ne.s32.totalorder %s399, %s400
      %p412 = scmp.eq.s32.totalorder %s60, 1
      %p413 = por %p411, %p412
      %p415 = scmp.ne.s32.totalorder %s400, %s414
      %p416 = scmp.eq.s32.totalorder %s60, 0
      %p417 = por %p415, %p416
      %s419 = sadd.s32 %s418, 1
      %p422 = scmp.eq.s32.totalorder %s54, 1
      %p423 = scmp.ne.s32.totalorder %s418, %s420
      %p424 = scmp.eq.s32.totalorder %s54, 0
      %p425 = por %p423, %p424
      %p426 = scmp.ne.s32.totalorder %s418, %s420
      %p427 = scmp.eq.s32.totalorder %s59, 1
      %p428 = por %p426, %p427
      %p429 = scmp.ne.s32.totalorder %s420, %s421
      %p430 = scmp.eq.s32.totalorder %s59, 0
      %p431 = por %p429, %p430
      %p432 = scmp.ne.s32.totalorder %s420, %s421
      %p433 = scmp.eq.s32.totalorder %s60, 1
      %p434 = por %p432, %p433
      %p436 = scmp.ne.s32.totalorder %s421, %s435
      %p437 = scmp.eq.s32.totalorder %s60, 0
      %p438 = por %p436, %p437
      %s440 = sadd.s32 %s439, 1
      %p443 = scmp.eq.s32.totalorder %s54, 1
      %p444 = scmp.ne.s32.totalorder %s439, %s441
      %p445 = scmp.eq.s32.totalorder %s54, 0
      %p446 = por %p444, %p445
      %p447 = scmp.ne.s32.totalorder %s439, %s441
      %p448 = scmp.eq.s32.totalorder %s59, 1
      %p449 = por %p447, %p448
      %p450 = scmp.ne.s32.totalorder %s441, %s442
      %p451 = scmp.eq.s32.totalorder %s59, 0
      %p452 = por %p450, %p451
      %p453 = scmp.ne.s32.totalorder %s441, %s442
      %p454 = scmp.eq.s32.totalorder %s60, 1
      %p455 = por %p453, %p454
      %p457 = scmp.ne.s32.totalorder %s442, %s456
      %p458 = scmp.eq.s32.totalorder %s60, 0
      %p459 = por %p457, %p458
      %s461 = sadd.s32 %s460, 1
      %p464 = scmp.eq.s32.totalorder %s54, 1
      %p465 = scmp.ne.s32.totalorder %s460, %s462
      %p466 = scmp.eq.s32.totalorder %s54, 0
      %p467 = por %p465, %p466
      %p468 = scmp.ne.s32.totalorder %s460, %s462
      %p469 = scmp.eq.s32.totalorder %s59, 1
      %p470 = por %p468, %p469
      %p471 = scmp.ne.s32.totalorder %s462, %s463
      %p472 = scmp.eq.s32.totalorder %s59, 0
      %p473 = por %p471, %p472
      %p474 = scmp.ne.s32.totalorder %s462, %s463
      %p475 = scmp.eq.s32.totalorder %s60, 1
      %p476 = por %p474, %p475
      %p478 = scmp.ne.s32.totalorder %s463, %s477
      %p479 = scmp.eq.s32.totalorder %s60, 0
      %p480 = por %p478, %p479
      %s482 = sadd.s32 %s481, 1
      %p485 = scmp.eq.s32.totalorder %s54, 1
      %p486 = scmp.ne.s32.totalorder %s481, %s483
      %p487 = scmp.eq.s32.totalorder %s54, 0
      %p488 = por %p486, %p487
      %p489 = scmp.ne.s32.totalorder %s481, %s483
      %p490 = scmp.eq.s32.totalorder %s59, 1
      %p491 = por %p489, %p490
      %p492 = scmp.ne.s32.totalorder %s483, %s484
      %p493 = scmp.eq.s32.totalorder %s59, 0
      %p494 = por %p492, %p493
      %p495 = scmp.ne.s32.totalorder %s483, %s484
      %p496 = scmp.eq.s32.totalorder %s60, 1
      %p497 = por %p495, %p496
      %p499 = scmp.ne.s32.totalorder %s484, %s498
      %p500 = scmp.eq.s32.totalorder %s60, 0
      %p501 = por %p499, %p500
      %s503 = sadd.s32 %s502, 1
      %p506 = scmp.eq.s32.totalorder %s54, 1
      %p507 = scmp.ne.s32.totalorder %s502, %s504
      %p508 = scmp.eq.s32.totalorder %s54, 0
      %p509 = por %p507, %p508
      %p510 = scmp.ne.s32.totalorder %s502, %s504
      %p511 = scmp.eq.s32.totalorder %s59, 1
      %p512 = por %p510, %p511
      %p513 = scmp.ne.s32.totalorder %s504, %s505
      %p514 = scmp.eq.s32.totalorder %s59, 0
      %p515 = por %p513, %p514
      %p516 = scmp.ne.s32.totalorder %s504, %s505
      %p517 = scmp.eq.s32.totalorder %s60, 1
      %p518 = por %p516, %p517
      %p520 = scmp.ne.s32.totalorder %s505, %s519
      %p521 = scmp.eq.s32.totalorder %s60, 0
      %p522 = por %p520, %p521
      %s524 = sadd.s32 %s523, 1
      %p527 = scmp.eq.s32.totalorder %s54, 1
      %p528 = scmp.ne.s32.totalorder %s523, %s525
      %p529 = scmp.eq.s32.totalorder %s54, 0
      %p530 = por %p528, %p529
      %p531 = scmp.ne.s32.totalorder %s523, %s525
      %p532 = scmp.eq.s32.totalorder %s59, 1
      %p533 = por %p531, %p532
      %p534 = scmp.ne.s32.totalorder %s525, %s526
      %p535 = scmp.eq.s32.totalorder %s59, 0
      %p536 = por %p534, %p535
      %p537 = scmp.ne.s32.totalorder %s525, %s526
      %p538 = scmp.eq.s32.totalorder %s60, 1
      %p539 = por %p537, %p538
      %p541 = scmp.ne.s32.totalorder %s526, %s540
      %p542 = scmp.eq.s32.totalorder %s60, 0
      %p543 = por %p541, %p542
      %s545 = sadd.s32 %s544, 1
      %p548 = scmp.eq.s32.totalorder %s54, 1
      %p549 = scmp.ne.s32.totalorder %s544, %s546
      %p550 = scmp.eq.s32.totalorder %s54, 0
      %p551 = por %p549, %p550
      %p552 = scmp.ne.s32.totalorder %s544, %s546
      %p553 = scmp.eq.s32.totalorder %s59, 1
      %p554 = por %p552, %p553
      %p555 = scmp.ne.s32.totalorder %s546, %s547
      %p556 = scmp.eq.s32.totalorder %s59, 0
      %p557 = por %p555, %p556
      %p558 = scmp.ne.s32.totalorder %s546, %s547
      %p559 = scmp.eq.s32.totalorder %s60, 1
      %p560 = por %p558, %p559
      %p562 = scmp.ne.s32.totalorder %s547, %s561
      %p563 = scmp.eq.s32.totalorder %s60, 0
      %p564 = por %p562, %p563
      %s566 = sadd.s32 %s565, 1
      %p569 = scmp.eq.s32.totalorder %s54, 1
      %p570 = scmp.ne.s32.totalorder %s565, %s567
      %p571 = scmp.eq.s32.totalorder %s54, 0
      %p572 = por %p570, %p571
      %p573 = scmp.ne.s32.totalorder %s565, %s567
      %p574 = scmp.eq.s32.totalorder %s59, 1
      %p575 = por %p573, %p574
      %p576 = scmp.ne.s32.totalorder %s567, %s568
      %p577 = scmp.eq.s32.totalorder %s59, 0
      %p578 = por %p576, %p577
      %p579 = scmp.ne.s32.totalorder %s567, %s568
      %p580 = scmp.eq.s32.totalorder %s60, 1
      %p581 = por %p579, %p580
      %p583 = scmp.ne.s32.totalorder %s568, %s582
      %p584 = scmp.eq.s32.totalorder %s60, 0
      %p585 = por %p583, %p584
      %s587 = sadd.s32 %s586, 1
      %p590 = scmp.eq.s32.totalorder %s54, 1
      %p591 = scmp.ne.s32.totalorder %s586, %s588
      %p592 = scmp.eq.s32.totalorder %s54, 0
      %p593 = por %p591, %p592
      %p594 = scmp.ne.s32.totalorder %s586, %s588
      %p595 = scmp.eq.s32.totalorder %s59, 1
      %p596 = por %p594, %p595
      %p597 = scmp.ne.s32.totalorder %s588, %s589
      %p598 = scmp.eq.s32.totalorder %s59, 0
      %p599 = por %p597, %p598
      %p600 = scmp.ne.s32.totalorder %s588, %s589
      %p601 = scmp.eq.s32.totalorder %s60, 1
      %p602 = por %p600, %p601
      %p604 = scmp.ne.s32.totalorder %s589, %s603
      %p605 = scmp.eq.s32.totalorder %s60, 0
      %p606 = por %p604, %p605
      %s607 = ssub.s32 %s54, %s61
      %p608 = scmp.eq.s32.totalorder %s607, 0
      %s610 = sadd.s32 %s609, 1
      %s611 = scalar_select %p608, %s609, %s610
      %p614 = pneg %p608
      %p615 = scmp.eq.s32.totalorder %s54, 1
      %p616 = por %p614, %p615
      %p617 = scmp.ne.s32.totalorder %s609, %s612
      %p618 = scmp.eq.s32.totalorder %s54, 0
      %p619 = por %p617, %p618
      %p620 = scmp.ne.s32.totalorder %s609, %s612
      %p621 = scmp.eq.s32.totalorder %s59, 1
      %p622 = por %p620, %p621
      %p623 = scmp.ne.s32.totalorder %s612, %s613
      %p624 = scmp.eq.s32.totalorder %s59, 0
      %p625 = por %p623, %p624
      %p626 = scmp.ne.s32.totalorder %s612, %s613
      %p627 = scmp.eq.s32.totalorder %s60, 1
      %p628 = por %p626, %p627
      %p630 = scmp.ne.s32.totalorder %s613, %s629
      %p631 = scmp.eq.s32.totalorder %s60, 0
      %p632 = por %p630, %p631
      %s633 = ssub.s32 %s54, %s61
      %p634 = scmp.eq.s32.totalorder %s633, 0
      %s636 = sadd.s32 %s635, 1
      %s637 = scalar_select %p634, %s635, %s636
      %p640 = pneg %p634
      %p641 = scmp.eq.s32.totalorder %s54, 1
      %p642 = por %p640, %p641
      %p643 = scmp.ne.s32.totalorder %s635, %s638
      %p644 = scmp.eq.s32.totalorder %s54, 0
      %p645 = por %p643, %p644
      %p646 = scmp.ne.s32.totalorder %s635, %s638
      %p647 = scmp.eq.s32.totalorder %s59, 1
      %p648 = por %p646, %p647
      %p649 = scmp.ne.s32.totalorder %s638, %s639
      %p650 = scmp.eq.s32.totalorder %s59, 0
      %p651 = por %p649, %p650
      %p652 = scmp.ne.s32.totalorder %s638, %s639
      %p653 = scmp.eq.s32.totalorder %s60, 1
      %p654 = por %p652, %p653
      %p656 = scmp.ne.s32.totalorder %s639, %s655
      %p657 = scmp.eq.s32.totalorder %s60, 0
      %p658 = por %p656, %p657
      %p659 = scmp.le.s32.totalorder 1, %s54
      %p660 = scmp.lt.s32.totalorder %s54, 3
      %p661 = pnand %p659, %p660
      %p662 = pneg %p661
      // Predicated region
      $region9: #{tpu_custom_call.1} parent=5 // pred_check
        _
      $region10: #{tpu_custom_call.1} parent=5 // pred_check_branch
        %664 = sbr.rel (%p661) target = $region12
      $region11: #{tpu_custom_call.1} parent=5 // pred_region
        %s665 = ssub.s32 %s54, 1
        // Predicated region
        $region13: #{tpu_custom_call.1} parent=11 // pred_check
          %p666 = pneg %p179
        $region14: #{tpu_custom_call.1} parent=11 // pred_check_branch
          %668 = sbr.rel (%p666) target = $region16
        $region15: #{tpu_custom_call.1} parent=11 // pred_region
          %s670 = ssub.s32 128, 128
          %671 = vsyncadd [#allocation9], %s670
          %s673 = sshll.u32 [#allocation10], 4
          %s674 = int_to_ptr.vmem [resolvable:$true] %s673
          %676 = dma.hbm_to_vmem [thread:$0]  %s4, 128, %s674, [#allocation9]
        $region16: #{tpu_custom_call.1} parent=11 // pred_fallthru
          _
        // Predicated region
        $region17: #{tpu_custom_call.1} parent=11 // pred_check
          %p677 = pneg %p200
        $region18: #{tpu_custom_call.1} parent=11 // pred_check_branch
          %679 = sbr.rel (%p677) target = $region20
        $region19: #{tpu_custom_call.1} parent=11 // pred_region
          _
        $region20: #{tpu_custom_call.1} parent=11 // pred_fallthru
          _
        // Predicated region
        $region21: #{tpu_custom_call.1} parent=11 // pred_check
          %p680 = pneg %p221
        $region22: #{tpu_custom_call.1} parent=11 // pred_check_branch
          %682 = sbr.rel (%p680) target = $region24
        $region23: #{tpu_custom_call.1} parent=11 // pred_region
          %s684 = ssub.s32 32, 32
          %685 = vsyncadd [#allocation12], %s684
          %s686 = sshll.u32 [#allocation11], 4
          %s687 = int_to_ptr.vmem [resolvable:$true] %s686
          %692 = dma.hbm_to_vmem [thread:$0]  %s6, 32, %s687, [#allocation12], 16, 16, 1
        $region24: #{tpu_custom_call.1} parent=11 // pred_fallthru
          _
        // Predicated region
        $region25: #{tpu_custom_call.1} parent=11 // pred_check
          %p693 = pneg %p242
        $region26: #{tpu_custom_call.1} parent=11 // pred_check_branch
          %695 = sbr.rel (%p693) target = $region28
        $region27: #{tpu_custom_call.1} parent=11 // pred_region
          _
        $region28: #{tpu_custom_call.1} parent=11 // pred_fallthru
          _
        // Predicated region
        $region29: #{tpu_custom_call.1} parent=11 // pred_check
          %p696 = pneg %p263
        $region30: #{tpu_custom_call.1} parent=11 // pred_check_branch
          %698 = sbr.rel (%p696) target = $region32
        $region31: #{tpu_custom_call.1} parent=11 // pred_region
          %s700 = ssub.s32 32, 32
          %701 = vsyncadd [#allocation12], %s700
          %s702 = sshll.u32 [#allocation13], 4
          %s703 = int_to_ptr.vmem [resolvable:$true] %s702
          %708 = dma.hbm_to_vmem [thread:$0]  %s8, 32, %s703, [#allocation12], 16, 16, 1
        $region32: #{tpu_custom_call.1} parent=11 // pred_fallthru
          _
        // Predicated region
        $region33: #{tpu_custom_call.1} parent=11 // pred_check
          %p709 = pneg %p284
        $region34: #{tpu_custom_call.1} parent=11 // pred_check_branch
          %711 = sbr.rel (%p709) target = $region36
        $region35: #{tpu_custom_call.1} parent=11 // pred_region
          _
        $region36: #{tpu_custom_call.1} parent=11 // pred_fallthru
          _
        // Predicated region
        $region37: #{tpu_custom_call.1} parent=11 // pred_check
          %p712 = pneg %p305
        $region38: #{tpu_custom_call.1} parent=11 // pred_check_branch
          %714 = sbr.rel (%p712) target = $region40
        $region39: #{tpu_custom_call.1} parent=11 // pred_region
          %s716 = ssub.s32 32, 32
          %717 = vsyncadd [#allocation15], %s716
          %s718 = sshll.u32 [#allocation14], 4
          %s719 = int_to_ptr.vmem [resolvable:$true] %s718
          %724 = dma.hbm_to_vmem [thread:$0]  %s10, 32, %s719, [#allocation15], 16, 16, 1
        $region40: #{tpu_custom_call.1} parent=11 // pred_fallthru
          _
        // Predicated region
        $region41: #{tpu_custom_call.1} parent=11 // pred_check
          %p725 = pneg %p326
        $region42: #{tpu_custom_call.1} parent=11 // pred_check_branch
          %727 = sbr.rel (%p725) target = $region44
        $region43: #{tpu_custom_call.1} parent=11 // pred_region
          %s729 = ssub.s32 1024, 1024
          %730 = vsyncadd [#allocation15], %s729
          %s731 = sshll.u32 [#allocation16], 4
          %s732 = int_to_ptr.vmem [resolvable:$true] %s731
          %737 = dma.hbm_to_vmem [thread:$0]  %s11, 1024, %s732, [#allocation15], 128, 128, 8
        $region44: #{tpu_custom_call.1} parent=11 // pred_fallthru
          _
        // Predicated region
        $region45: #{tpu_custom_call.1} parent=11 // pred_check
          %p738 = pneg %p347
        $region46: #{tpu_custom_call.1} parent=11 // pred_check_branch
          %740 = sbr.rel (%p738) target = $region48
        $region47: #{tpu_custom_call.1} parent=11 // pred_region
          %s742 = ssub.s32 32, 32
          %743 = vsyncadd [#allocation18], %s742
          %s744 = sshll.u32 [#allocation17], 4
          %s745 = int_to_ptr.vmem [resolvable:$true] %s744
          %750 = dma.hbm_to_vmem [thread:$0]  %s12, 32, %s745, [#allocation18], 16, 16, 1
        $region48: #{tpu_custom_call.1} parent=11 // pred_fallthru
          _
        // Predicated region
        $region49: #{tpu_custom_call.1} parent=11 // pred_check
          %p751 = pneg %p368
        $region50: #{tpu_custom_call.1} parent=11 // pred_check_branch
          %753 = sbr.rel (%p751) target = $region52
        $region51: #{tpu_custom_call.1} parent=11 // pred_region
          %s755 = ssub.s32 32, 32
          %756 = vsyncadd [#allocation18], %s755
          %s757 = sshll.u32 [#allocation19], 4
          %s758 = int_to_ptr.vmem [resolvable:$true] %s757
          %763 = dma.hbm_to_vmem [thread:$0]  %s13, 32, %s758, [#allocation18], 16, 16, 1
        $region52: #{tpu_custom_call.1} parent=11 // pred_fallthru
          _
        // Predicated region
        $region53: #{tpu_custom_call.1} parent=11 // pred_check
          %p764 = pneg %p389
        $region54: #{tpu_custom_call.1} parent=11 // pred_check_branch
          %766 = sbr.rel (%p764) target = $region56
        $region55: #{tpu_custom_call.1} parent=11 // pred_region
          %s768 = ssub.s32 32, 32
          %769 = vsyncadd [#allocation21], %s768
          %s770 = sshll.u32 [#allocation20], 4
          %s771 = int_to_ptr.vmem [resolvable:$true] %s770
          %776 = dma.hbm_to_vmem [thread:$0]  %s14, 32, %s771, [#allocation21], 16, 16, 1
        $region56: #{tpu_custom_call.1} parent=11 // pred_fallthru
          _
        // Predicated region
        $region57: #{tpu_custom_call.1} parent=11 // pred_check
          %p777 = pneg %p410
        $region58: #{tpu_custom_call.1} parent=11 // pred_check_branch
          %779 = sbr.rel (%p777) target = $region60
        $region59: #{tpu_custom_call.1} parent=11 // pred_region
          %s781 = ssub.s32 32, 32
          %782 = vsyncadd [#allocation21], %s781
          %s783 = sshll.u32 [#allocation22], 4
          %s784 = int_to_ptr.vmem [resolvable:$true] %s783
          %789 = dma.hbm_to_vmem [thread:$0]  %s15, 32, %s784, [#allocation21], 16, 16, 1
        $region60: #{tpu_custom_call.1} parent=11 // pred_fallthru
          _
        // Predicated region
        $region61: #{tpu_custom_call.1} parent=11 // pred_check
          %p790 = pneg %p431
        $region62: #{tpu_custom_call.1} parent=11 // pred_check_branch
          %792 = sbr.rel (%p790) target = $region64
        $region63: #{tpu_custom_call.1} parent=11 // pred_region
          %s794 = ssub.s32 32, 32
          %795 = vsyncadd [#allocation24], %s794
          %s796 = sshll.u32 [#allocation23], 4
          %s797 = int_to_ptr.vmem [resolvable:$true] %s796
          %802 = dma.hbm_to_vmem [thread:$0]  %s16, 32, %s797, [#allocation24], 16, 16, 1
        $region64: #{tpu_custom_call.1} parent=11 // pred_fallthru
          _
        // Predicated region
        $region65: #{tpu_custom_call.1} parent=11 // pred_check
          %p803 = pneg %p452
        $region66: #{tpu_custom_call.1} parent=11 // pred_check_branch
          %805 = sbr.rel (%p803) target = $region68
        $region67: #{tpu_custom_call.1} parent=11 // pred_region
          %s807 = ssub.s32 32, 32
          %808 = vsyncadd [#allocation24], %s807
          %s809 = sshll.u32 [#allocation25], 4
          %s810 = int_to_ptr.vmem [resolvable:$true] %s809
          %815 = dma.hbm_to_vmem [thread:$0]  %s17, 32, %s810, [#allocation24], 16, 16, 1
        $region68: #{tpu_custom_call.1} parent=11 // pred_fallthru
          _
        // Predicated region
        $region69: #{tpu_custom_call.1} parent=11 // pred_check
          %p816 = pneg %p473
        $region70: #{tpu_custom_call.1} parent=11 // pred_check_branch
          %818 = sbr.rel (%p816) target = $region72
        $region71: #{tpu_custom_call.1} parent=11 // pred_region
          %s820 = ssub.s32 32, 32
          %821 = vsyncadd [#allocation27], %s820
          %s822 = sshll.u32 [#allocation26], 4
          %s823 = int_to_ptr.vmem [resolvable:$true] %s822
          %828 = dma.hbm_to_vmem [thread:$0]  %s18, 32, %s823, [#allocation27], 16, 16, 1
        $region72: #{tpu_custom_call.1} parent=11 // pred_fallthru
          _
        // Predicated region
        $region73: #{tpu_custom_call.1} parent=11 // pred_check
          %p829 = pneg %p494
        $region74: #{tpu_custom_call.1} parent=11 // pred_check_branch
          %831 = sbr.rel (%p829) target = $region76
        $region75: #{tpu_custom_call.1} parent=11 // pred_region
          %s833 = ssub.s32 1024, 1024
          %834 = vsyncadd [#allocation27], %s833
          %s835 = sshll.u32 [#allocation28], 4
          %s836 = int_to_ptr.vmem [resolvable:$true] %s835
          %841 = dma.hbm_to_vmem [thread:$0]  %s19, 1024, %s836, [#allocation27], 128, 128, 8
        $region76: #{tpu_custom_call.1} parent=11 // pred_fallthru
          _
        // Predicated region
        $region77: #{tpu_custom_call.1} parent=11 // pred_check
          %p842 = pneg %p515
        $region78: #{tpu_custom_call.1} parent=11 // pred_check_branch
          %844 = sbr.rel (%p842) target = $region80
        $region79: #{tpu_custom_call.1} parent=11 // pred_region
          _
        $region80: #{tpu_custom_call.1} parent=11 // pred_fallthru
          _
        // Predicated region
        $region81: #{tpu_custom_call.1} parent=11 // pred_check
          %p845 = pneg %p536
        $region82: #{tpu_custom_call.1} parent=11 // pred_check_branch
          %847 = sbr.rel (%p845) target = $region84
        $region83: #{tpu_custom_call.1} parent=11 // pred_region
          _
        $region84: #{tpu_custom_call.1} parent=11 // pred_fallthru
          _
        // Predicated region
        $region85: #{tpu_custom_call.1} parent=11 // pred_check
          %p848 = pneg %p557
        $region86: #{tpu_custom_call.1} parent=11 // pred_check_branch
          %850 = sbr.rel (%p848) target = $region88
        $region87: #{tpu_custom_call.1} parent=11 // pred_region
          _
        $region88: #{tpu_custom_call.1} parent=11 // pred_fallthru
          _
        // Predicated region
        $region89: #{tpu_custom_call.1} parent=11 // pred_check
          %p851 = pneg %p578
        $region90: #{tpu_custom_call.1} parent=11 // pred_check_branch
          %853 = sbr.rel (%p851) target = $region92
        $region91: #{tpu_custom_call.1} parent=11 // pred_region
          _
        $region92: #{tpu_custom_call.1} parent=11 // pred_fallthru
          _
        // Predicated region
        $region93: #{tpu_custom_call.1} parent=11 // pred_check
          %p854 = pneg %p599
        $region94: #{tpu_custom_call.1} parent=11 // pred_check_branch
          %856 = sbr.rel (%p854) target = $region96
        $region95: #{tpu_custom_call.1} parent=11 // pred_region
          _
        $region96: #{tpu_custom_call.1} parent=11 // pred_fallthru
          _
      $region12: #{tpu_custom_call.1} parent=5 // pred_fallthru
        _
      %p857 = scmp.lt.s32.totalorder %s54, 2
      // Predicated region
      $region97: #{tpu_custom_call.1} parent=5 // pred_check
        %p858 = pneg %p857
      $region98: #{tpu_custom_call.1} parent=5 // pred_check_branch
        %860 = sbr.rel (%p858) target = $region100
      $region99: #{tpu_custom_call.1} parent=5 // pred_region
        // Predicated region
        $region101: #{tpu_custom_call.1} parent=99 // pred_check
          %p861 = pneg %p74
        $region102: #{tpu_custom_call.1} parent=99 // pred_check_branch
          %863 = sbr.rel (%p861) target = $region104
        $region103: #{tpu_custom_call.1} parent=99 // pred_region
          %s864 = sand.u32 %s64, 1
          %s865 = scalar_lea.sflag [#allocation3], %s864
          %s866 = sand.u32 %s64, 1
          %s867 = smul.addr %s866, 8
          %s868 = scalar_lea.vmem [#allocation2], %s867
          %s870 = ssub.s32 128, 128
          %871 = vsyncadd %s865, %s870
          %s872 = smul.addr %s54, 128
          %s873 = scalar_lea.hbm %s0, %s872
          %s875 = sshll.u32 %s868, 4
          %s876 = int_to_ptr.vmem [resolvable:$true] %s875
          %878 = dma.hbm_to_vmem [thread:$0]  %s873, 128, %s876, %s865
        $region104: #{tpu_custom_call.1} parent=99 // pred_fallthru
          _
        // Predicated region
        $region105: #{tpu_custom_call.1} parent=99 // pred_check
          %p879 = pneg %p100
        $region106: #{tpu_custom_call.1} parent=99 // pred_check_branch
          %881 = sbr.rel (%p879) target = $region108
        $region107: #{tpu_custom_call.1} parent=99 // pred_region
          %s882 = sand.u32 %s54, 1
          %s883 = scalar_lea.sflag [#allocation6], %s882
          %s884 = sand.u32 %s90, 1
          %s885 = smul.addr %s884, 8
          %s886 = scalar_lea.vmem [#allocation5], %s885
          %s888 = ssub.s32 128, 128
          %889 = vsyncadd %s883, %s888
          %s890 = smul.addr %s54, 128
          %s891 = scalar_lea.hbm %s1, %s890
          %s893 = sshll.u32 %s886, 4
          %s894 = int_to_ptr.vmem [resolvable:$true] %s893
          %896 = dma.hbm_to_vmem [thread:$0]  %s891, 128, %s894, %s883
        $region108: #{tpu_custom_call.1} parent=99 // pred_fallthru
          _
        // Predicated region
        $region109: #{tpu_custom_call.1} parent=99 // pred_check
          %p897 = pneg %p126
        $region110: #{tpu_custom_call.1} parent=99 // pred_check_branch
          %899 = sbr.rel (%p897) target = $region112
        $region111: #{tpu_custom_call.1} parent=99 // pred_region
          %s900 = sand.u32 %s54, 1
          %s901 = scalar_lea.sflag [#allocation6], %s900
          %s902 = sand.u32 %s116, 1
          %s903 = smul.addr %s902, 8
          %s904 = scalar_lea.vmem [#allocation7], %s903
          %s906 = ssub.s32 128, 128
          %907 = vsyncadd %s901, %s906
          %s908 = smul.addr %s54, 128
          %s909 = scalar_lea.hbm %s2, %s908
          %s911 = sshll.u32 %s904, 4
          %s912 = int_to_ptr.vmem [resolvable:$true] %s911
          %914 = dma.hbm_to_vmem [thread:$0]  %s909, 128, %s912, %s901
        $region112: #{tpu_custom_call.1} parent=99 // pred_fallthru
          _
        // Predicated region
        $region113: #{tpu_custom_call.1} parent=99 // pred_check
          %p915 = pneg %p152
        $region114: #{tpu_custom_call.1} parent=99 // pred_check_branch
          %917 = sbr.rel (%p915) target = $region116
        $region115: #{tpu_custom_call.1} parent=99 // pred_region
          %s918 = sand.u32 %s54, 1
          %s919 = scalar_lea.sflag [#allocation9], %s918
          %s920 = sand.u32 %s142, 1
          %s921 = scalar_lea.vmem [#allocation8], %s920
          %s923 = ssub.s32 16, 16
          %924 = vsyncadd %s919, %s923
          %s925 = smul.addr %s54, 16
          %s926 = scalar_lea.hbm %s3, %s925
          %s928 = sshll.u32 %s921, 4
          %s929 = int_to_ptr.vmem [resolvable:$true] %s928
          %931 = dma.hbm_to_vmem [thread:$0]  %s926, 16, %s929, %s919
        $region116: #{tpu_custom_call.1} parent=99 // pred_fallthru
          _
      $region100: #{tpu_custom_call.1} parent=5 // pred_fallthru
        _
      %p932 = scmp.le.s32.totalorder 1, %s54
      %p933 = scmp.lt.s32.totalorder %s54, 3
      %p934 = pnand %p932, %p933
      %p935 = pneg %p934
      // Predicated region
      $region117: #{tpu_custom_call.1} parent=5 // pred_check
        _
      $region118: #{tpu_custom_call.1} parent=5 // pred_check_branch
        %937 = sbr.rel (%p934) target = $region120
      $region119: #{tpu_custom_call.1} parent=5 // pred_region
        %s938 = ssub.s32 %s54, 1
        %s939 = sand.u32 %s67, 1
        %s940 = scalar_lea.sflag [#allocation3], %s939
        %s941 = sand.u32 %s67, 1
        %s942 = smul.addr %s941, 8
        %s943 = scalar_lea.vmem [#allocation2], %s942
        // Predicated region
        $region121: #{tpu_custom_call.1} parent=119 // pred_check
          %p944 = pneg %p80
        $region122: #{tpu_custom_call.1} parent=119 // pred_check_branch
          %946 = sbr.rel (%p944) target = $region124
        $region123: #{tpu_custom_call.1} parent=119 // pred_region
          %947 = dma.done %s940, 128
        $region124: #{tpu_custom_call.1} parent=119 // pred_fallthru
          _
        %s948 = sand.u32 %s59, 1
        %s949 = scalar_lea.sflag [#allocation6], %s948
        %s950 = sand.u32 %s93, 1
        %s951 = smul.addr %s950, 8
        %s952 = scalar_lea.vmem [#allocation5], %s951
        // Predicated region
        $region125: #{tpu_custom_call.1} parent=119 // pred_check
          %p953 = pneg %p106
        $region126: #{tpu_custom_call.1} parent=119 // pred_check_branch
          %955 = sbr.rel (%p953) target = $region128
        $region127: #{tpu_custom_call.1} parent=119 // pred_region
          %956 = dma.done %s949, 128
        $region128: #{tpu_custom_call.1} parent=119 // pred_fallthru
          _
        %s957 = sand.u32 %s59, 1
        %s958 = scalar_lea.sflag [#allocation6], %s957
        %s959 = sand.u32 %s119, 1
        %s960 = smul.addr %s959, 8
        %s961 = scalar_lea.vmem [#allocation7], %s960
        // Predicated region
        $region129: #{tpu_custom_call.1} parent=119 // pred_check
          %p962 = pneg %p132
        $region130: #{tpu_custom_call.1} parent=119 // pred_check_branch
          %964 = sbr.rel (%p962) target = $region132
        $region131: #{tpu_custom_call.1} parent=119 // pred_region
          %965 = dma.done %s958, 128
        $region132: #{tpu_custom_call.1} parent=119 // pred_fallthru
          _
        %s966 = sand.u32 %s59, 1
        %s967 = scalar_lea.sflag [#allocation9], %s966
        %s968 = sand.u32 %s145, 1
        %s969 = scalar_lea.vmem [#allocation8], %s968
        // Predicated region
        $region133: #{tpu_custom_call.1} parent=119 // pred_check
          %p970 = pneg %p158
        $region134: #{tpu_custom_call.1} parent=119 // pred_check_branch
          %972 = sbr.rel (%p970) target = $region136
        $region135: #{tpu_custom_call.1} parent=119 // pred_region
          %973 = dma.done %s967, 16
        $region136: #{tpu_custom_call.1} parent=119 // pred_fallthru
          _
        // Predicated region
        $region137: #{tpu_custom_call.1} parent=119 // pred_check
          %p974 = pneg %p179
        $region138: #{tpu_custom_call.1} parent=119 // pred_check_branch
          %976 = sbr.rel (%p974) target = $region140
        $region139: #{tpu_custom_call.1} parent=119 // pred_region
          %977 = dma.done [#allocation9], 128
        $region140: #{tpu_custom_call.1} parent=119 // pred_fallthru
          _
        // Predicated region
        $region141: #{tpu_custom_call.1} parent=119 // pred_check
          %p978 = pneg %p221
        $region142: #{tpu_custom_call.1} parent=119 // pred_check_branch
          %980 = sbr.rel (%p978) target = $region144
        $region143: #{tpu_custom_call.1} parent=119 // pred_region
          %981 = dma.done [#allocation12], 32
        $region144: #{tpu_custom_call.1} parent=119 // pred_fallthru
          _
        // Predicated region
        $region145: #{tpu_custom_call.1} parent=119 // pred_check
          %p982 = pneg %p263
        $region146: #{tpu_custom_call.1} parent=119 // pred_check_branch
          %984 = sbr.rel (%p982) target = $region148
        $region147: #{tpu_custom_call.1} parent=119 // pred_region
          %985 = dma.done [#allocation12], 32
        $region148: #{tpu_custom_call.1} parent=119 // pred_fallthru
          _
        // Predicated region
        $region149: #{tpu_custom_call.1} parent=119 // pred_check
          %p986 = pneg %p305
        $region150: #{tpu_custom_call.1} parent=119 // pred_check_branch
          %988 = sbr.rel (%p986) target = $region152
        $region151: #{tpu_custom_call.1} parent=119 // pred_region
          %989 = dma.done [#allocation15], 32
        $region152: #{tpu_custom_call.1} parent=119 // pred_fallthru
          _
        // Predicated region
        $region153: #{tpu_custom_call.1} parent=119 // pred_check
          %p990 = pneg %p326
        $region154: #{tpu_custom_call.1} parent=119 // pred_check_branch
          %992 = sbr.rel (%p990) target = $region156
        $region155: #{tpu_custom_call.1} parent=119 // pred_region
          %993 = dma.done [#allocation15], 1024
        $region156: #{tpu_custom_call.1} parent=119 // pred_fallthru
          _
        // Predicated region
        $region157: #{tpu_custom_call.1} parent=119 // pred_check
          %p994 = pneg %p347
        $region158: #{tpu_custom_call.1} parent=119 // pred_check_branch
          %996 = sbr.rel (%p994) target = $region160
        $region159: #{tpu_custom_call.1} parent=119 // pred_region
          %997 = dma.done [#allocation18], 32
        $region160: #{tpu_custom_call.1} parent=119 // pred_fallthru
          _
        // Predicated region
        $region161: #{tpu_custom_call.1} parent=119 // pred_check
          %p998 = pneg %p368
        $region162: #{tpu_custom_call.1} parent=119 // pred_check_branch
          %1000 = sbr.rel (%p998) target = $region164
        $region163: #{tpu_custom_call.1} parent=119 // pred_region
          %1001 = dma.done [#allocation18], 32
        $region164: #{tpu_custom_call.1} parent=119 // pred_fallthru
          _
        // Predicated region
        $region165: #{tpu_custom_call.1} parent=119 // pred_check
          %p1002 = pneg %p389
        $region166: #{tpu_custom_call.1} parent=119 // pred_check_branch
          %1004 = sbr.rel (%p1002) target = $region168
        $region167: #{tpu_custom_call.1} parent=119 // pred_region
          %1005 = dma.done [#allocation21], 32
        $region168: #{tpu_custom_call.1} parent=119 // pred_fallthru
          _
        // Predicated region
        $region169: #{tpu_custom_call.1} parent=119 // pred_check
          %p1006 = pneg %p410
        $region170: #{tpu_custom_call.1} parent=119 // pred_check_branch
          %1008 = sbr.rel (%p1006) target = $region172
        $region171: #{tpu_custom_call.1} parent=119 // pred_region
          %1009 = dma.done [#allocation21], 32
        $region172: #{tpu_custom_call.1} parent=119 // pred_fallthru
          _
        // Predicated region
        $region173: #{tpu_custom_call.1} parent=119 // pred_check
          %p1010 = pneg %p431
        $region174: #{tpu_custom_call.1} parent=119 // pred_check_branch
          %1012 = sbr.rel (%p1010) target = $region176
        $region175: #{tpu_custom_call.1} parent=119 // pred_region
          %1013 = dma.done [#allocation24], 32
        $region176: #{tpu_custom_call.1} parent=119 // pred_fallthru
          _
        // Predicated region
        $region177: #{tpu_custom_call.1} parent=119 // pred_check
          %p1014 = pneg %p452
        $region178: #{tpu_custom_call.1} parent=119 // pred_check_branch
          %1016 = sbr.rel (%p1014) target = $region180
        $region179: #{tpu_custom_call.1} parent=119 // pred_region
          %1017 = dma.done [#allocation24], 32
        $region180: #{tpu_custom_call.1} parent=119 // pred_fallthru
          _
        // Predicated region
        $region181: #{tpu_custom_call.1} parent=119 // pred_check
          %p1018 = pneg %p473
        $region182: #{tpu_custom_call.1} parent=119 // pred_check_branch
          %1020 = sbr.rel (%p1018) target = $region184
        $region183: #{tpu_custom_call.1} parent=119 // pred_region
          %1021 = dma.done [#allocation27], 32
        $region184: #{tpu_custom_call.1} parent=119 // pred_fallthru
          _
        // Predicated region
        $region185: #{tpu_custom_call.1} parent=119 // pred_check
          %p1022 = pneg %p494
        $region186: #{tpu_custom_call.1} parent=119 // pred_check_branch
          %1024 = sbr.rel (%p1022) target = $region188
        $region187: #{tpu_custom_call.1} parent=119 // pred_region
          %1025 = dma.done [#allocation27], 1024
        $region188: #{tpu_custom_call.1} parent=119 // pred_fallthru
          _
        %s1026 = sand.u32 %s67, 1
        %s1027 = scalar_lea.sflag [#allocation3], %s1026
        %s1028 = sand.u32 %s67, 1
        %s1029 = smul.addr %s1028, 8
        %s1030 = scalar_lea.vmem [#allocation2], %s1029
        %p1031 = pneg %p80
        %p1032 = pneg %p77
        %s1033 = sand.u32 %s59, 1
        %s1034 = scalar_lea.sflag [#allocation6], %s1033
        %s1035 = sand.u32 %s93, 1
        %s1036 = smul.addr %s1035, 8
        %s1037 = scalar_lea.vmem [#allocation5], %s1036
        %p1038 = pneg %p106
        %p1039 = pneg %p103
        %s1040 = sand.u32 %s59, 1
        %s1041 = scalar_lea.sflag [#allocation6], %s1040
        %s1042 = sand.u32 %s119, 1
        %s1043 = smul.addr %s1042, 8
        %s1044 = scalar_lea.vmem [#allocation7], %s1043
        %p1045 = pneg %p132
        %p1046 = pneg %p129
        %s1047 = sand.u32 %s59, 1
        %s1048 = scalar_lea.sflag [#allocation9], %s1047
        %s1049 = sand.u32 %s145, 1
        %s1050 = scalar_lea.vmem [#allocation8], %s1049
        %p1051 = pneg %p158
        %p1052 = pneg %p155
        %p1053 = pneg %p179
        %p1054 = pneg %p176
        %p1055 = pneg %p200
        %p1056 = pneg %p197
        %p1057 = pneg %p221
        %p1058 = pneg %p218
        %p1059 = pneg %p242
        %p1060 = pneg %p239
        %p1061 = pneg %p263
        %p1062 = pneg %p260
        %p1063 = pneg %p284
        %p1064 = pneg %p281
        %p1065 = pneg %p305
        %p1066 = pneg %p302
        %p1067 = pneg %p326
        %p1068 = pneg %p323
        %p1069 = pneg %p347
        %p1070 = pneg %p344
        %p1071 = pneg %p368
        %p1072 = pneg %p365
        %p1073 = pneg %p389
        %p1074 = pneg %p386
        %p1075 = pneg %p410
        %p1076 = pneg %p407
        %p1077 = pneg %p431
        %p1078 = pneg %p428
        %p1079 = pneg %p452
        %p1080 = pneg %p449
        %p1081 = pneg %p473
        %p1082 = pneg %p470
        %p1083 = pneg %p494
        %p1084 = pneg %p491
        %p1085 = pneg %p515
        %p1086 = pneg %p512
        %p1087 = pneg %p536
        %p1088 = pneg %p533
        %p1089 = pneg %p557
        %p1090 = pneg %p554
        %p1091 = pneg %p578
        %p1092 = pneg %p575
        %p1093 = pneg %p599
        %p1094 = pneg %p596
        %p1095 = pneg %p625
        %p1096 = pneg %p622
        %s1097 = sand.u32 %s612, 1
        %s1098 = scalar_lea.sflag [#allocation4], %s1097
        %s1099 = sand.u32 %s612, 1
        %s1100 = smul.addr %s1099, 8
        %s1101 = scalar_lea.vmem [#allocation29], %s1100
        %p1102 = pneg %p651
        %p1103 = pneg %p648
        %s1104 = sand.u32 %s638, 1
        %s1105 = scalar_lea.sflag [#allocation31], %s1104
        %s1106 = sand.u32 %s638, 1
        %s1107 = smul.addr %s1106, 8
        %s1108 = scalar_lea.vmem [#allocation30], %s1107
        %v1109 = vld [vmem:[%s943] sm:$0xff]
        %v1110 = vmul.f32 %v1109, 5.656854
        %v1111 = vld [vmem:[#allocation10] sm:$0xff]
        %v1112 = vadd.f32 %v1110, %v1111
        %v1113 = vld [vmem:[%s952] sm:$0xff]
        %v1114 = vld [vmem:[%s961] sm:$0xff]
        %vm1115 = vcmp.eq.f32.partialorder %v1114, 0.0
        %v1116 = vld [vmem:[%s969] sm:$0x1]
        %vm1117 = vcmp.eq.f32.partialorder %v1116, 0.0
        loop: start=0, step=1, limit=2
        $region189: #{tpu_custom_call.1} parent=119 // loop_pre_header
          _
        $region190: #{tpu_custom_call.1} parent=119 // loop_header
          %s1119 = sphi 0, %s1123
          %p1120 = scmp.ge.s32.totalorder %s1119, 2
          %v1124 = vphi %v1112, %v3604
          %v1125 = vphi 0.0, %v2834
          %v1126 = vphi 0.0, %v2907
          %v1127 = vphi 0.0, %v2980
          %v1128 = vphi 0.0, %v3053
        $region191: #{tpu_custom_call.1} parent=119 // loop_header_branch
          %1122 = sbr.rel (%p1120) target = $region195
        $region192: #{tpu_custom_call.1} parent=119 // loop_body
          %s1129 = smul.u32 %s1119, 32
          %s1130 = scalar_lea.vmem %s5, %s1129
          %v1131 = vld [vmem:[%s1130] sm:$0xff]
          %v1132 = vld [vmem:[%s1130 + $0x8] sm:$0xff]
          %v1133 = vld [vmem:[%s1130 + $0x10] sm:$0xff]
          %v1134 = vld [vmem:[%s1130 + $0x18] sm:$0xff]
          %s1135 = scalar_lea.vmem [#allocation11], %s1119
          %v1136 = vld [vmem:[%s1135] sm:$0x1]
          %v1138 = vlaneseq
          %v1139 = vshrl.u32 %v1138, 7
          %v1140 = vsub.s32 0, %v1139
          %v1141 = vrot.slane %v1136, %v1140
          %vm1143 = vcmask 261120
          %v1145 = vsel %vm1143, %v1124, 0
          %1147 = vmatprep.subr.mxu0 0.0
          %1148 = vmatpush1.msra.mxu0 0.0
          %1149 = vmatprep.subr.mxu0 0.0
          %1150 = vmatpush1.msra.mxu0 0.0
          %1151 = vmatprep.subr.mxu0 0.0
          %1152 = vmatpush1.msra.mxu0 0.0
          %1153 = vmatprep.subr.mxu0 0.0
          %1154 = vmatpush1.msra.mxu0 0.0
          %1155 = vmatprep.subr.mxu0 0.0
          %1156 = vmatpush1.msra.mxu0 0.0
          %1157 = vmatprep.subr.mxu0 0.0
          %1158 = vmatpush1.msra.mxu0 0.0
          %1159 = vmatprep.subr.mxu0 0.0
          %1160 = vmatpush1.msra.mxu0 0.0
          %1161 = vmatprep.subr.mxu0 0.0
          %1162 = vmatpush1.msra.mxu0 0.0
          %1163 = vmatprep.subr.mxu0 0.0
          %1164 = vmatpush1.msra.mxu0 0.0
          %1165 = vmatprep.subr.mxu0 0.0
          %1166 = vmatpush1.msra.mxu0 0.0
          %1167 = vmatprep.subr.mxu0 0.0
          %1168 = vmatpush1.msra.mxu0 0.0
          %1169 = vmatprep.subr.mxu0 0.0
          %1170 = vmatpush1.msra.mxu0 0.0
          %1171 = vmatprep.subr.mxu0 0.0
          %1172 = vmatpush1.msra.mxu0 %v1134
          %1173 = vmatprep.subr.mxu0 0.0
          %1174 = vmatpush1.msra.mxu0 %v1133
          %1175 = vmatprep.subr.mxu0 0.0
          %1176 = vmatpush1.msra.mxu0 %v1132
          %1177 = vmatprep.subr.mxu0 0.0
          %1178 = vmatpush1.msra.mxu0 %v1131
          %1179 = vmatprep.subr.mxu0 0.0
          %1180 = vmatpush2.msra.mxu0 0.0
          %1181 = vmatprep.subr.mxu0 0.0
          %1182 = vmatpush2.msra.mxu0 0.0
          %1183 = vmatprep.subr.mxu0 0.0
          %1184 = vmatpush2.msra.mxu0 0.0
          %1185 = vmatprep.subr.mxu0 0.0
          %1186 = vmatpush2.msra.mxu0 0.0
          %1187 = vmatprep.subr.mxu0 0.0
          %1188 = vmatpush2.msra.mxu0 0.0
          %1189 = vmatprep.subr.mxu0 0.0
          %1190 = vmatpush2.msra.mxu0 0.0
          %1191 = vmatprep.subr.mxu0 0.0
          %1192 = vmatpush2.msra.mxu0 0.0
          %1193 = vmatprep.subr.mxu0 0.0
          %1194 = vmatpush2.msra.mxu0 0.0
          %1195 = vmatprep.subr.mxu0 0.0
          %1196 = vmatpush2.msra.mxu0 0.0
          %1197 = vmatprep.subr.mxu0 0.0
          %1198 = vmatpush2.msra.mxu0 0.0
          %1199 = vmatprep.subr.mxu0 0.0
          %1200 = vmatpush2.msra.mxu0 0.0
          %1201 = vmatprep.subr.mxu0 0.0
          %1202 = vmatpush2.msra.mxu0 0.0
          %1203 = vmatprep.subr.mxu0 0.0
          %1204 = vmatpush2.msra.mxu0 0.0
          %1205 = vmatprep.subr.mxu0 0.0
          %1206 = vmatpush2.msra.mxu0 0.0
          %1207 = vmatprep.subr.mxu0 0.0
          %1208 = vmatpush2.msra.mxu0 0.0
          %1209 = vmatprep.subr.mxu0 0.0
          %1210 = vmatpush2.msra.mxu0 0.0
          %1211 = vmatprep.mubr.f32.mxu0 0.0
          %1212 = vmatmul.mubr.f32.gmra.mxu0 %v1145
          %v1213 = vpop.f32.mrf.mxu0
          %v1214 = vadd.f32 %v1141, %v1213
          %v1215 = vpop.f32.mrf.mxu0
          %1216 = vdwg.mxu0
          %1218 = vrot.lane.b32.xlu0 %v1214, 120
          %v1219 = vpop.permute.xlu0 %1218
          %1221 = vrot.lane.b32.xlu0 %v1214, 112
          %v1222 = vpop.permute.xlu0 %1221
          %1224 = vrot.lane.b32.xlu0 %v1214, 104
          %v1225 = vpop.permute.xlu0 %1224
          %v1227 = vmul.f32 %v1214, 0.17677669
          %v1228 = vmul.f32 %v1219, 0.17677669
          %v1229 = vmul.f32 %v1222, 0.17677669
          %v1230 = vmul.f32 %v1225, 0.17677669
          %s1231 = scalar_lea.vmem %s7, %s1129
          %v1232 = vld [vmem:[%s1231] sm:$0xff]
          %v1233 = vld [vmem:[%s1231 + $0x8] sm:$0xff]
          %v1234 = vld [vmem:[%s1231 + $0x10] sm:$0xff]
          %v1235 = vld [vmem:[%s1231 + $0x18] sm:$0xff]
          %s1236 = scalar_lea.vmem [#allocation13], %s1119
          %v1237 = vld [vmem:[%s1236] sm:$0x1]
          %vm1238 = vcmask 64512
          %v1240 = vsel %vm1238, %v1227, 0
          %v1242 = vsel %vm1238, %v1214, 0
          %1244 = vmatprep.subr.mxu0 0.0
          %1245 = vmatpush1.xpose.msra.mxu0 0.0
          %1246 = vmatprep.subr.mxu0 0.0
          %1247 = vmatpush1.xpose.msra.mxu0 0.0
          %1248 = vmatprep.subr.mxu0 0.0
          %1249 = vmatpush1.xpose.msra.mxu0 0.0
          %1250 = vmatprep.subr.mxu0 0.0
          %1251 = vmatpush1.xpose.msra.mxu0 0.0
          %1252 = vmatprep.subr.mxu0 0.0
          %1253 = vmatpush1.xpose.msra.mxu0 0.0
          %1254 = vmatprep.subr.mxu0 0.0
          %1255 = vmatpush1.xpose.msra.mxu0 0.0
          %1256 = vmatprep.subr.mxu0 0.0
          %1257 = vmatpush1.xpose.msra.mxu0 0.0
          %1258 = vmatprep.subr.mxu0 0.0
          %1259 = vmatpush1.xpose.msra.mxu0 0.0
          %1260 = vmatprep.subr.mxu0 0.0
          %1261 = vmatpush1.xpose.msra.mxu0 0.0
          %1262 = vmatprep.subr.mxu0 0.0
          %1263 = vmatpush1.xpose.msra.mxu0 0.0
          %1264 = vmatprep.subr.mxu0 0.0
          %1265 = vmatpush1.xpose.msra.mxu0 0.0
          %1266 = vmatprep.subr.mxu0 0.0
          %1267 = vmatpush1.xpose.msra.mxu0 0.0
          %1268 = vmatprep.subr.mxu0 0.0
          %1269 = vmatpush1.xpose.msra.mxu0 0.0
          %1270 = vmatprep.subr.mxu0 0.0
          %1271 = vmatpush1.xpose.msra.mxu0 0.0
          %1272 = vmatprep.subr.mxu0 0.0
          %1273 = vmatpush1.xpose.msra.mxu0 0.0
          %1274 = vmatprep.subr.mxu0 0.0
          %1275 = vmatpush1.xpose.msra.mxu0 %v1242
          %1276 = vmatprep.subr.mxu0 0.0
          %1277 = vmatpush2.xpose.msra.mxu0 0.0
          %1278 = vmatprep.subr.mxu0 0.0
          %1279 = vmatpush2.xpose.msra.mxu0 0.0
          %1280 = vmatprep.subr.mxu0 0.0
          %1281 = vmatpush2.xpose.msra.mxu0 0.0
          %1282 = vmatprep.subr.mxu0 0.0
          %1283 = vmatpush2.xpose.msra.mxu0 0.0
          %1284 = vmatprep.subr.mxu0 0.0
          %1285 = vmatpush2.xpose.msra.mxu0 0.0
          %1286 = vmatprep.subr.mxu0 0.0
          %1287 = vmatpush2.xpose.msra.mxu0 0.0
          %1288 = vmatprep.subr.mxu0 0.0
          %1289 = vmatpush2.xpose.msra.mxu0 0.0
          %1290 = vmatprep.subr.mxu0 0.0
          %1291 = vmatpush2.xpose.msra.mxu0 0.0
          %1292 = vmatprep.subr.mxu0 0.0
          %1293 = vmatpush2.xpose.msra.mxu0 0.0
          %1294 = vmatprep.subr.mxu0 0.0
          %1295 = vmatpush2.xpose.msra.mxu0 0.0
          %1296 = vmatprep.subr.mxu0 0.0
          %1297 = vmatpush2.xpose.msra.mxu0 0.0
          %1298 = vmatprep.subr.mxu0 0.0
          %1299 = vmatpush2.xpose.msra.mxu0 0.0
          %1300 = vmatprep.subr.mxu0 0.0
          %1301 = vmatpush2.xpose.msra.mxu0 0.0
          %1302 = vmatprep.subr.mxu0 0.0
          %1303 = vmatpush2.xpose.msra.mxu0 0.0
          %1304 = vmatprep.subr.mxu0 0.0
          %1305 = vmatpush2.xpose.msra.mxu0 0.0
          %1306 = vmatprep.subr.mxu0 0.0
          %1307 = vmatpush2.xpose.msra.mxu0 0.0
          %1308 = vmatprep.mubr.f32.mxu0 0.0
          %1309 = vmatmul.mubr.f32.gmra.mxu0 %v1240
          %v1310 = vpop.f32.mrf.mxu0
          %v1311 = vadd.f32 0.0, %v1310
          %v1312 = vpop.f32.mrf.mxu0
          %1313 = vdwg.mxu0
          %v1315 = vsel %vm1238, %v1228, 0
          %v1317 = vsel %vm1238, %v1219, 0
          %1319 = vmatprep.subr.mxu0 0.0
          %1320 = vmatpush1.xpose.msra.mxu0 0.0
          %1321 = vmatprep.subr.mxu0 0.0
          %1322 = vmatpush1.xpose.msra.mxu0 0.0
          %1323 = vmatprep.subr.mxu0 0.0
          %1324 = vmatpush1.xpose.msra.mxu0 0.0
          %1325 = vmatprep.subr.mxu0 0.0
          %1326 = vmatpush1.xpose.msra.mxu0 0.0
          %1327 = vmatprep.subr.mxu0 0.0
          %1328 = vmatpush1.xpose.msra.mxu0 0.0
          %1329 = vmatprep.subr.mxu0 0.0
          %1330 = vmatpush1.xpose.msra.mxu0 0.0
          %1331 = vmatprep.subr.mxu0 0.0
          %1332 = vmatpush1.xpose.msra.mxu0 0.0
          %1333 = vmatprep.subr.mxu0 0.0
          %1334 = vmatpush1.xpose.msra.mxu0 0.0
          %1335 = vmatprep.subr.mxu0 0.0
          %1336 = vmatpush1.xpose.msra.mxu0 0.0
          %1337 = vmatprep.subr.mxu0 0.0
          %1338 = vmatpush1.xpose.msra.mxu0 0.0
          %1339 = vmatprep.subr.mxu0 0.0
          %1340 = vmatpush1.xpose.msra.mxu0 0.0
          %1341 = vmatprep.subr.mxu0 0.0
          %1342 = vmatpush1.xpose.msra.mxu0 0.0
          %1343 = vmatprep.subr.mxu0 0.0
          %1344 = vmatpush1.xpose.msra.mxu0 0.0
          %1345 = vmatprep.subr.mxu0 0.0
          %1346 = vmatpush1.xpose.msra.mxu0 0.0
          %1347 = vmatprep.subr.mxu0 0.0
          %1348 = vmatpush1.xpose.msra.mxu0 0.0
          %1349 = vmatprep.subr.mxu0 0.0
          %1350 = vmatpush1.xpose.msra.mxu0 %v1317
          %1351 = vmatprep.subr.mxu0 0.0
          %1352 = vmatpush2.xpose.msra.mxu0 0.0
          %1353 = vmatprep.subr.mxu0 0.0
          %1354 = vmatpush2.xpose.msra.mxu0 0.0
          %1355 = vmatprep.subr.mxu0 0.0
          %1356 = vmatpush2.xpose.msra.mxu0 0.0
          %1357 = vmatprep.subr.mxu0 0.0
          %1358 = vmatpush2.xpose.msra.mxu0 0.0
          %1359 = vmatprep.subr.mxu0 0.0
          %1360 = vmatpush2.xpose.msra.mxu0 0.0
          %1361 = vmatprep.subr.mxu0 0.0
          %1362 = vmatpush2.xpose.msra.mxu0 0.0
          %1363 = vmatprep.subr.mxu0 0.0
          %1364 = vmatpush2.xpose.msra.mxu0 0.0
          %1365 = vmatprep.subr.mxu0 0.0
          %1366 = vmatpush2.xpose.msra.mxu0 0.0
          %1367 = vmatprep.subr.mxu0 0.0
          %1368 = vmatpush2.xpose.msra.mxu0 0.0
          %1369 = vmatprep.subr.mxu0 0.0
          %1370 = vmatpush2.xpose.msra.mxu0 0.0
          %1371 = vmatprep.subr.mxu0 0.0
          %1372 = vmatpush2.xpose.msra.mxu0 0.0
          %1373 = vmatprep.subr.mxu0 0.0
          %1374 = vmatpush2.xpose.msra.mxu0 0.0
          %1375 = vmatprep.subr.mxu0 0.0
          %1376 = vmatpush2.xpose.msra.mxu0 0.0
          %1377 = vmatprep.subr.mxu0 0.0
          %1378 = vmatpush2.xpose.msra.mxu0 0.0
          %1379 = vmatprep.subr.mxu0 0.0
          %1380 = vmatpush2.xpose.msra.mxu0 0.0
          %1381 = vmatprep.subr.mxu0 0.0
          %1382 = vmatpush2.xpose.msra.mxu0 0.0
          %1383 = vmatprep.mubr.f32.mxu0 0.0
          %1384 = vmatmul.mubr.f32.gmra.mxu0 %v1315
          %v1385 = vpop.f32.mrf.mxu0
          %v1386 = vadd.f32 0.0, %v1385
          %v1387 = vpop.f32.mrf.mxu0
          %1388 = vdwg.mxu0
          %v1390 = vsel %vm1238, %v1229, 0
          %v1392 = vsel %vm1238, %v1222, 0
          %1394 = vmatprep.subr.mxu0 0.0
          %1395 = vmatpush1.xpose.msra.mxu0 0.0
          %1396 = vmatprep.subr.mxu0 0.0
          %1397 = vmatpush1.xpose.msra.mxu0 0.0
          %1398 = vmatprep.subr.mxu0 0.0
          %1399 = vmatpush1.xpose.msra.mxu0 0.0
          %1400 = vmatprep.subr.mxu0 0.0
          %1401 = vmatpush1.xpose.msra.mxu0 0.0
          %1402 = vmatprep.subr.mxu0 0.0
          %1403 = vmatpush1.xpose.msra.mxu0 0.0
          %1404 = vmatprep.subr.mxu0 0.0
          %1405 = vmatpush1.xpose.msra.mxu0 0.0
          %1406 = vmatprep.subr.mxu0 0.0
          %1407 = vmatpush1.xpose.msra.mxu0 0.0
          %1408 = vmatprep.subr.mxu0 0.0
          %1409 = vmatpush1.xpose.msra.mxu0 0.0
          %1410 = vmatprep.subr.mxu0 0.0
          %1411 = vmatpush1.xpose.msra.mxu0 0.0
          %1412 = vmatprep.subr.mxu0 0.0
          %1413 = vmatpush1.xpose.msra.mxu0 0.0
          %1414 = vmatprep.subr.mxu0 0.0
          %1415 = vmatpush1.xpose.msra.mxu0 0.0
          %1416 = vmatprep.subr.mxu0 0.0
          %1417 = vmatpush1.xpose.msra.mxu0 0.0
          %1418 = vmatprep.subr.mxu0 0.0
          %1419 = vmatpush1.xpose.msra.mxu0 0.0
          %1420 = vmatprep.subr.mxu0 0.0
          %1421 = vmatpush1.xpose.msra.mxu0 0.0
          %1422 = vmatprep.subr.mxu0 0.0
          %1423 = vmatpush1.xpose.msra.mxu0 0.0
          %1424 = vmatprep.subr.mxu0 0.0
          %1425 = vmatpush1.xpose.msra.mxu0 %v1392
          %1426 = vmatprep.subr.mxu0 0.0
          %1427 = vmatpush2.xpose.msra.mxu0 0.0
          %1428 = vmatprep.subr.mxu0 0.0
          %1429 = vmatpush2.xpose.msra.mxu0 0.0
          %1430 = vmatprep.subr.mxu0 0.0
          %1431 = vmatpush2.xpose.msra.mxu0 0.0
          %1432 = vmatprep.subr.mxu0 0.0
          %1433 = vmatpush2.xpose.msra.mxu0 0.0
          %1434 = vmatprep.subr.mxu0 0.0
          %1435 = vmatpush2.xpose.msra.mxu0 0.0
          %1436 = vmatprep.subr.mxu0 0.0
          %1437 = vmatpush2.xpose.msra.mxu0 0.0
          %1438 = vmatprep.subr.mxu0 0.0
          %1439 = vmatpush2.xpose.msra.mxu0 0.0
          %1440 = vmatprep.subr.mxu0 0.0
          %1441 = vmatpush2.xpose.msra.mxu0 0.0
          %1442 = vmatprep.subr.mxu0 0.0
          %1443 = vmatpush2.xpose.msra.mxu0 0.0
          %1444 = vmatprep.subr.mxu0 0.0
          %1445 = vmatpush2.xpose.msra.mxu0 0.0
          %1446 = vmatprep.subr.mxu0 0.0
          %1447 = vmatpush2.xpose.msra.mxu0 0.0
          %1448 = vmatprep.subr.mxu0 0.0
          %1449 = vmatpush2.xpose.msra.mxu0 0.0
          %1450 = vmatprep.subr.mxu0 0.0
          %1451 = vmatpush2.xpose.msra.mxu0 0.0
          %1452 = vmatprep.subr.mxu0 0.0
          %1453 = vmatpush2.xpose.msra.mxu0 0.0
          %1454 = vmatprep.subr.mxu0 0.0
          %1455 = vmatpush2.xpose.msra.mxu0 0.0
          %1456 = vmatprep.subr.mxu0 0.0
          %1457 = vmatpush2.xpose.msra.mxu0 0.0
          %1458 = vmatprep.mubr.f32.mxu0 0.0
          %1459 = vmatmul.mubr.f32.gmra.mxu0 %v1390
          %v1460 = vpop.f32.mrf.mxu0
          %v1461 = vadd.f32 0.0, %v1460
          %v1462 = vpop.f32.mrf.mxu0
          %1463 = vdwg.mxu0
          %v1465 = vsel %vm1238, %v1230, 0
          %v1467 = vsel %vm1238, %v1225, 0
          %1469 = vmatprep.subr.mxu0 0.0
          %1470 = vmatpush1.xpose.msra.mxu0 0.0
          %1471 = vmatprep.subr.mxu0 0.0
          %1472 = vmatpush1.xpose.msra.mxu0 0.0
          %1473 = vmatprep.subr.mxu0 0.0
          %1474 = vmatpush1.xpose.msra.mxu0 0.0
          %1475 = vmatprep.subr.mxu0 0.0
          %1476 = vmatpush1.xpose.msra.mxu0 0.0
          %1477 = vmatprep.subr.mxu0 0.0
          %1478 = vmatpush1.xpose.msra.mxu0 0.0
          %1479 = vmatprep.subr.mxu0 0.0
          %1480 = vmatpush1.xpose.msra.mxu0 0.0
          %1481 = vmatprep.subr.mxu0 0.0
          %1482 = vmatpush1.xpose.msra.mxu0 0.0
          %1483 = vmatprep.subr.mxu0 0.0
          %1484 = vmatpush1.xpose.msra.mxu0 0.0
          %1485 = vmatprep.subr.mxu0 0.0
          %1486 = vmatpush1.xpose.msra.mxu0 0.0
          %1487 = vmatprep.subr.mxu0 0.0
          %1488 = vmatpush1.xpose.msra.mxu0 0.0
          %1489 = vmatprep.subr.mxu0 0.0
          %1490 = vmatpush1.xpose.msra.mxu0 0.0
          %1491 = vmatprep.subr.mxu0 0.0
          %1492 = vmatpush1.xpose.msra.mxu0 0.0
          %1493 = vmatprep.subr.mxu0 0.0
          %1494 = vmatpush1.xpose.msra.mxu0 0.0
          %1495 = vmatprep.subr.mxu0 0.0
          %1496 = vmatpush1.xpose.msra.mxu0 0.0
          %1497 = vmatprep.subr.mxu0 0.0
          %1498 = vmatpush1.xpose.msra.mxu0 0.0
          %1499 = vmatprep.subr.mxu0 0.0
          %1500 = vmatpush1.xpose.msra.mxu0 %v1467
          %1501 = vmatprep.subr.mxu0 0.0
          %1502 = vmatpush2.xpose.msra.mxu0 0.0
          %1503 = vmatprep.subr.mxu0 0.0
          %1504 = vmatpush2.xpose.msra.mxu0 0.0
          %1505 = vmatprep.subr.mxu0 0.0
          %1506 = vmatpush2.xpose.msra.mxu0 0.0
          %1507 = vmatprep.subr.mxu0 0.0
          %1508 = vmatpush2.xpose.msra.mxu0 0.0
          %1509 = vmatprep.subr.mxu0 0.0
          %1510 = vmatpush2.xpose.msra.mxu0 0.0
          %1511 = vmatprep.subr.mxu0 0.0
          %1512 = vmatpush2.xpose.msra.mxu0 0.0
          %1513 = vmatprep.subr.mxu0 0.0
          %1514 = vmatpush2.xpose.msra.mxu0 0.0
          %1515 = vmatprep.subr.mxu0 0.0
          %1516 = vmatpush2.xpose.msra.mxu0 0.0
          %1517 = vmatprep.subr.mxu0 0.0
          %1518 = vmatpush2.xpose.msra.mxu0 0.0
          %1519 = vmatprep.subr.mxu0 0.0
          %1520 = vmatpush2.xpose.msra.mxu0 0.0
          %1521 = vmatprep.subr.mxu0 0.0
          %1522 = vmatpush2.xpose.msra.mxu0 0.0
          %1523 = vmatprep.subr.mxu0 0.0
          %1524 = vmatpush2.xpose.msra.mxu0 0.0
          %1525 = vmatprep.subr.mxu0 0.0
          %1526 = vmatpush2.xpose.msra.mxu0 0.0
          %1527 = vmatprep.subr.mxu0 0.0
          %1528 = vmatpush2.xpose.msra.mxu0 0.0
          %1529 = vmatprep.subr.mxu0 0.0
          %1530 = vmatpush2.xpose.msra.mxu0 0.0
          %1531 = vmatprep.subr.mxu0 0.0
          %1532 = vmatpush2.xpose.msra.mxu0 0.0
          %1533 = vmatprep.mubr.f32.mxu0 0.0
          %1534 = vmatmul.mubr.f32.gmra.mxu0 %v1465
          %v1535 = vpop.f32.mrf.mxu0
          %v1536 = vadd.f32 0.0, %v1535
          %v1537 = vpop.f32.mrf.mxu0
          %1538 = vdwg.mxu0
          %v1539 = vsel %vm1115, 1, 0
          %vm1540 = vcmp.eq.s32.totalorder %v1539, 1
          %v1541 = vsel %vm1540, -1e+09, %v1311
          %v1542 = vsel %vm1540, -1e+09, %v1386
          %v1543 = vsel %vm1540, -1e+09, %v1461
          %v1544 = vsel %vm1540, -1e+09, %v1536
          %v1545 = vsel %vm1238, %v1541, -inf
          %1546 = vmax.xlane.f32.xlu0 %v1545
          %v1547 = vpop.xlane.xlu0 %1546
          %v1548 = vsel %vm1238, %v1542, -inf
          %1549 = vmax.xlane.f32.xlu0 %v1548
          %v1550 = vpop.xlane.xlu0 %1549
          %v1551 = vsel %vm1238, %v1543, -inf
          %1552 = vmax.xlane.f32.xlu0 %v1551
          %v1553 = vpop.xlane.xlu0 %1552
          %v1554 = vsel %vm1238, %v1544, -inf
          %1555 = vmax.xlane.f32.xlu0 %v1554
          %v1556 = vpop.xlane.xlu0 %1555
          %v1557 = vsub.f32 %v1541, %v1547
          %v1558 = vsub.f32 %v1542, %v1550
          %v1559 = vsub.f32 %v1543, %v1553
          %v1560 = vsub.f32 %v1544, %v1556
          %v1561 = vmul.f32 %v1557, 1.442695
          %v1562 = vpow.pop %v1561
          %v1563 = vmul.f32 %v1558, 1.442695
          %v1564 = vpow.pop %v1563
          %v1565 = vmul.f32 %v1559, 1.442695
          %v1566 = vpow.pop %v1565
          %v1567 = vmul.f32 %v1560, 1.442695
          %v1568 = vpow.pop %v1567
          %v1569 = vsel %vm1238, %v1562, 0.0
          %1570 = vadd.xlane.f32.xlu0 %v1569
          %v1571 = vpop.xlane.xlu0 %1570
          %v1572 = vsel %vm1238, %v1564, 0.0
          %1573 = vadd.xlane.f32.xlu0 %v1572
          %v1574 = vpop.xlane.xlu0 %1573
          %v1575 = vsel %vm1238, %v1566, 0.0
          %1576 = vadd.xlane.f32.xlu0 %v1575
          %v1577 = vpop.xlane.xlu0 %1576
          %v1578 = vsel %vm1238, %v1568, 0.0
          %1579 = vadd.xlane.f32.xlu0 %v1578
          %v1580 = vpop.xlane.xlu0 %1579
          %v1581 = vrcp.pop %v1571
          %v1582 = vrcp.pop %v1574
          %v1583 = vrcp.pop %v1577
          %v1584 = vrcp.pop %v1580
          %v1585 = vmul.f32 %v1562, %v1581
          %v1586 = vmul.f32 %v1564, %v1582
          %v1587 = vmul.f32 %v1566, %v1583
          %v1588 = vmul.f32 %v1568, %v1584
          %v1590 = vsel %vm1238, %v1585, 0
          %1592 = vmatprep.subr.mxu0 0.0
          %1593 = vmatpush1.msra.mxu0 0.0
          %1594 = vmatprep.subr.mxu0 0.0
          %1595 = vmatpush1.msra.mxu0 0.0
          %1596 = vmatprep.subr.mxu0 0.0
          %1597 = vmatpush1.msra.mxu0 0.0
          %1598 = vmatprep.subr.mxu0 0.0
          %1599 = vmatpush1.msra.mxu0 0.0
          %1600 = vmatprep.subr.mxu0 0.0
          %1601 = vmatpush1.msra.mxu0 0.0
          %1602 = vmatprep.subr.mxu0 0.0
          %1603 = vmatpush1.msra.mxu0 0.0
          %1604 = vmatprep.subr.mxu0 0.0
          %1605 = vmatpush1.msra.mxu0 0.0
          %1606 = vmatprep.subr.mxu0 0.0
          %1607 = vmatpush1.msra.mxu0 0.0
          %1608 = vmatprep.subr.mxu0 0.0
          %1609 = vmatpush1.msra.mxu0 0.0
          %1610 = vmatprep.subr.mxu0 0.0
          %1611 = vmatpush1.msra.mxu0 0.0
          %1612 = vmatprep.subr.mxu0 0.0
          %1613 = vmatpush1.msra.mxu0 0.0
          %1614 = vmatprep.subr.mxu0 0.0
          %1615 = vmatpush1.msra.mxu0 0.0
          %1616 = vmatprep.subr.mxu0 0.0
          %1617 = vmatpush1.msra.mxu0 0.0
          %1618 = vmatprep.subr.mxu0 0.0
          %1619 = vmatpush1.msra.mxu0 0.0
          %1620 = vmatprep.subr.mxu0 0.0
          %1621 = vmatpush1.msra.mxu0 0.0
          %1622 = vmatprep.subr.mxu0 0.0
          %1623 = vmatpush1.msra.mxu0 %v1214
          %1624 = vmatprep.subr.mxu0 0.0
          %1625 = vmatpush2.msra.mxu0 0.0
          %1626 = vmatprep.subr.mxu0 0.0
          %1627 = vmatpush2.msra.mxu0 0.0
          %1628 = vmatprep.subr.mxu0 0.0
          %1629 = vmatpush2.msra.mxu0 0.0
          %1630 = vmatprep.subr.mxu0 0.0
          %1631 = vmatpush2.msra.mxu0 0.0
          %1632 = vmatprep.subr.mxu0 0.0
          %1633 = vmatpush2.msra.mxu0 0.0
          %1634 = vmatprep.subr.mxu0 0.0
          %1635 = vmatpush2.msra.mxu0 0.0
          %1636 = vmatprep.subr.mxu0 0.0
          %1637 = vmatpush2.msra.mxu0 0.0
          %1638 = vmatprep.subr.mxu0 0.0
          %1639 = vmatpush2.msra.mxu0 0.0
          %1640 = vmatprep.subr.mxu0 0.0
          %1641 = vmatpush2.msra.mxu0 0.0
          %1642 = vmatprep.subr.mxu0 0.0
          %1643 = vmatpush2.msra.mxu0 0.0
          %1644 = vmatprep.subr.mxu0 0.0
          %1645 = vmatpush2.msra.mxu0 0.0
          %1646 = vmatprep.subr.mxu0 0.0
          %1647 = vmatpush2.msra.mxu0 0.0
          %1648 = vmatprep.subr.mxu0 0.0
          %1649 = vmatpush2.msra.mxu0 0.0
          %1650 = vmatprep.subr.mxu0 0.0
          %1651 = vmatpush2.msra.mxu0 0.0
          %1652 = vmatprep.subr.mxu0 0.0
          %1653 = vmatpush2.msra.mxu0 0.0
          %1654 = vmatprep.subr.mxu0 0.0
          %1655 = vmatpush2.msra.mxu0 0.0
          %1656 = vmatprep.mubr.f32.mxu0 0.0
          %1657 = vmatmul.mubr.f32.gmra.mxu0 %v1590
          %v1658 = vpop.f32.mrf.mxu0
          %v1659 = vadd.f32 0.0, %v1658
          %v1660 = vpop.f32.mrf.mxu0
          %1661 = vdwg.mxu0
          %v1663 = vsel %vm1238, %v1586, 0
          %1665 = vmatprep.subr.mxu0 0.0
          %1666 = vmatpush1.msra.mxu0 0.0
          %1667 = vmatprep.subr.mxu0 0.0
          %1668 = vmatpush1.msra.mxu0 0.0
          %1669 = vmatprep.subr.mxu0 0.0
          %1670 = vmatpush1.msra.mxu0 0.0
          %1671 = vmatprep.subr.mxu0 0.0
          %1672 = vmatpush1.msra.mxu0 0.0
          %1673 = vmatprep.subr.mxu0 0.0
          %1674 = vmatpush1.msra.mxu0 0.0
          %1675 = vmatprep.subr.mxu0 0.0
          %1676 = vmatpush1.msra.mxu0 0.0
          %1677 = vmatprep.subr.mxu0 0.0
          %1678 = vmatpush1.msra.mxu0 0.0
          %1679 = vmatprep.subr.mxu0 0.0
          %1680 = vmatpush1.msra.mxu0 0.0
          %1681 = vmatprep.subr.mxu0 0.0
          %1682 = vmatpush1.msra.mxu0 0.0
          %1683 = vmatprep.subr.mxu0 0.0
          %1684 = vmatpush1.msra.mxu0 0.0
          %1685 = vmatprep.subr.mxu0 0.0
          %1686 = vmatpush1.msra.mxu0 0.0
          %1687 = vmatprep.subr.mxu0 0.0
          %1688 = vmatpush1.msra.mxu0 0.0
          %1689 = vmatprep.subr.mxu0 0.0
          %1690 = vmatpush1.msra.mxu0 0.0
          %1691 = vmatprep.subr.mxu0 0.0
          %1692 = vmatpush1.msra.mxu0 0.0
          %1693 = vmatprep.subr.mxu0 0.0
          %1694 = vmatpush1.msra.mxu0 0.0
          %1695 = vmatprep.subr.mxu0 0.0
          %1696 = vmatpush1.msra.mxu0 %v1219
          %1697 = vmatprep.subr.mxu0 0.0
          %1698 = vmatpush2.msra.mxu0 0.0
          %1699 = vmatprep.subr.mxu0 0.0
          %1700 = vmatpush2.msra.mxu0 0.0
          %1701 = vmatprep.subr.mxu0 0.0
          %1702 = vmatpush2.msra.mxu0 0.0
          %1703 = vmatprep.subr.mxu0 0.0
          %1704 = vmatpush2.msra.mxu0 0.0
          %1705 = vmatprep.subr.mxu0 0.0
          %1706 = vmatpush2.msra.mxu0 0.0
          %1707 = vmatprep.subr.mxu0 0.0
          %1708 = vmatpush2.msra.mxu0 0.0
          %1709 = vmatprep.subr.mxu0 0.0
          %1710 = vmatpush2.msra.mxu0 0.0
          %1711 = vmatprep.subr.mxu0 0.0
          %1712 = vmatpush2.msra.mxu0 0.0
          %1713 = vmatprep.subr.mxu0 0.0
          %1714 = vmatpush2.msra.mxu0 0.0
          %1715 = vmatprep.subr.mxu0 0.0
          %1716 = vmatpush2.msra.mxu0 0.0
          %1717 = vmatprep.subr.mxu0 0.0
          %1718 = vmatpush2.msra.mxu0 0.0
          %1719 = vmatprep.subr.mxu0 0.0
          %1720 = vmatpush2.msra.mxu0 0.0
          %1721 = vmatprep.subr.mxu0 0.0
          %1722 = vmatpush2.msra.mxu0 0.0
          %1723 = vmatprep.subr.mxu0 0.0
          %1724 = vmatpush2.msra.mxu0 0.0
          %1725 = vmatprep.subr.mxu0 0.0
          %1726 = vmatpush2.msra.mxu0 0.0
          %1727 = vmatprep.subr.mxu0 0.0
          %1728 = vmatpush2.msra.mxu0 0.0
          %1729 = vmatprep.mubr.f32.mxu0 0.0
          %1730 = vmatmul.mubr.f32.gmra.mxu0 %v1663
          %v1731 = vpop.f32.mrf.mxu0
          %v1732 = vadd.f32 0.0, %v1731
          %v1733 = vpop.f32.mrf.mxu0
          %1734 = vdwg.mxu0
          %v1736 = vsel %vm1238, %v1587, 0
          %1738 = vmatprep.subr.mxu0 0.0
          %1739 = vmatpush1.msra.mxu0 0.0
          %1740 = vmatprep.subr.mxu0 0.0
          %1741 = vmatpush1.msra.mxu0 0.0
          %1742 = vmatprep.subr.mxu0 0.0
          %1743 = vmatpush1.msra.mxu0 0.0
          %1744 = vmatprep.subr.mxu0 0.0
          %1745 = vmatpush1.msra.mxu0 0.0
          %1746 = vmatprep.subr.mxu0 0.0
          %1747 = vmatpush1.msra.mxu0 0.0
          %1748 = vmatprep.subr.mxu0 0.0
          %1749 = vmatpush1.msra.mxu0 0.0
          %1750 = vmatprep.subr.mxu0 0.0
          %1751 = vmatpush1.msra.mxu0 0.0
          %1752 = vmatprep.subr.mxu0 0.0
          %1753 = vmatpush1.msra.mxu0 0.0
          %1754 = vmatprep.subr.mxu0 0.0
          %1755 = vmatpush1.msra.mxu0 0.0
          %1756 = vmatprep.subr.mxu0 0.0
          %1757 = vmatpush1.msra.mxu0 0.0
          %1758 = vmatprep.subr.mxu0 0.0
          %1759 = vmatpush1.msra.mxu0 0.0
          %1760 = vmatprep.subr.mxu0 0.0
          %1761 = vmatpush1.msra.mxu0 0.0
          %1762 = vmatprep.subr.mxu0 0.0
          %1763 = vmatpush1.msra.mxu0 0.0
          %1764 = vmatprep.subr.mxu0 0.0
          %1765 = vmatpush1.msra.mxu0 0.0
          %1766 = vmatprep.subr.mxu0 0.0
          %1767 = vmatpush1.msra.mxu0 0.0
          %1768 = vmatprep.subr.mxu0 0.0
          %1769 = vmatpush1.msra.mxu0 %v1222
          %1770 = vmatprep.subr.mxu0 0.0
          %1771 = vmatpush2.msra.mxu0 0.0
          %1772 = vmatprep.subr.mxu0 0.0
          %1773 = vmatpush2.msra.mxu0 0.0
          %1774 = vmatprep.subr.mxu0 0.0
          %1775 = vmatpush2.msra.mxu0 0.0
          %1776 = vmatprep.subr.mxu0 0.0
          %1777 = vmatpush2.msra.mxu0 0.0
          %1778 = vmatprep.subr.mxu0 0.0
          %1779 = vmatpush2.msra.mxu0 0.0
          %1780 = vmatprep.subr.mxu0 0.0
          %1781 = vmatpush2.msra.mxu0 0.0
          %1782 = vmatprep.subr.mxu0 0.0
          %1783 = vmatpush2.msra.mxu0 0.0
          %1784 = vmatprep.subr.mxu0 0.0
          %1785 = vmatpush2.msra.mxu0 0.0
          %1786 = vmatprep.subr.mxu0 0.0
          %1787 = vmatpush2.msra.mxu0 0.0
          %1788 = vmatprep.subr.mxu0 0.0
          %1789 = vmatpush2.msra.mxu0 0.0
          %1790 = vmatprep.subr.mxu0 0.0
          %1791 = vmatpush2.msra.mxu0 0.0
          %1792 = vmatprep.subr.mxu0 0.0
          %1793 = vmatpush2.msra.mxu0 0.0
          %1794 = vmatprep.subr.mxu0 0.0
          %1795 = vmatpush2.msra.mxu0 0.0
          %1796 = vmatprep.subr.mxu0 0.0
          %1797 = vmatpush2.msra.mxu0 0.0
          %1798 = vmatprep.subr.mxu0 0.0
          %1799 = vmatpush2.msra.mxu0 0.0
          %1800 = vmatprep.subr.mxu0 0.0
          %1801 = vmatpush2.msra.mxu0 0.0
          %1802 = vmatprep.mubr.f32.mxu0 0.0
          %1803 = vmatmul.mubr.f32.gmra.mxu0 %v1736
          %v1804 = vpop.f32.mrf.mxu0
          %v1805 = vadd.f32 0.0, %v1804
          %v1806 = vpop.f32.mrf.mxu0
          %1807 = vdwg.mxu0
          %v1809 = vsel %vm1238, %v1588, 0
          %1811 = vmatprep.subr.mxu0 0.0
          %1812 = vmatpush1.msra.mxu0 0.0
          %1813 = vmatprep.subr.mxu0 0.0
          %1814 = vmatpush1.msra.mxu0 0.0
          %1815 = vmatprep.subr.mxu0 0.0
          %1816 = vmatpush1.msra.mxu0 0.0
          %1817 = vmatprep.subr.mxu0 0.0
          %1818 = vmatpush1.msra.mxu0 0.0
          %1819 = vmatprep.subr.mxu0 0.0
          %1820 = vmatpush1.msra.mxu0 0.0
          %1821 = vmatprep.subr.mxu0 0.0
          %1822 = vmatpush1.msra.mxu0 0.0
          %1823 = vmatprep.subr.mxu0 0.0
          %1824 = vmatpush1.msra.mxu0 0.0
          %1825 = vmatprep.subr.mxu0 0.0
          %1826 = vmatpush1.msra.mxu0 0.0
          %1827 = vmatprep.subr.mxu0 0.0
          %1828 = vmatpush1.msra.mxu0 0.0
          %1829 = vmatprep.subr.mxu0 0.0
          %1830 = vmatpush1.msra.mxu0 0.0
          %1831 = vmatprep.subr.mxu0 0.0
          %1832 = vmatpush1.msra.mxu0 0.0
          %1833 = vmatprep.subr.mxu0 0.0
          %1834 = vmatpush1.msra.mxu0 0.0
          %1835 = vmatprep.subr.mxu0 0.0
          %1836 = vmatpush1.msra.mxu0 0.0
          %1837 = vmatprep.subr.mxu0 0.0
          %1838 = vmatpush1.msra.mxu0 0.0
          %1839 = vmatprep.subr.mxu0 0.0
          %1840 = vmatpush1.msra.mxu0 0.0
          %1841 = vmatprep.subr.mxu0 0.0
          %1842 = vmatpush1.msra.mxu0 %v1225
          %1843 = vmatprep.subr.mxu0 0.0
          %1844 = vmatpush2.msra.mxu0 0.0
          %1845 = vmatprep.subr.mxu0 0.0
          %1846 = vmatpush2.msra.mxu0 0.0
          %1847 = vmatprep.subr.mxu0 0.0
          %1848 = vmatpush2.msra.mxu0 0.0
          %1849 = vmatprep.subr.mxu0 0.0
          %1850 = vmatpush2.msra.mxu0 0.0
          %1851 = vmatprep.subr.mxu0 0.0
          %1852 = vmatpush2.msra.mxu0 0.0
          %1853 = vmatprep.subr.mxu0 0.0
          %1854 = vmatpush2.msra.mxu0 0.0
          %1855 = vmatprep.subr.mxu0 0.0
          %1856 = vmatpush2.msra.mxu0 0.0
          %1857 = vmatprep.subr.mxu0 0.0
          %1858 = vmatpush2.msra.mxu0 0.0
          %1859 = vmatprep.subr.mxu0 0.0
          %1860 = vmatpush2.msra.mxu0 0.0
          %1861 = vmatprep.subr.mxu0 0.0
          %1862 = vmatpush2.msra.mxu0 0.0
          %1863 = vmatprep.subr.mxu0 0.0
          %1864 = vmatpush2.msra.mxu0 0.0
          %1865 = vmatprep.subr.mxu0 0.0
          %1866 = vmatpush2.msra.mxu0 0.0
          %1867 = vmatprep.subr.mxu0 0.0
          %1868 = vmatpush2.msra.mxu0 0.0
          %1869 = vmatprep.subr.mxu0 0.0
          %1870 = vmatpush2.msra.mxu0 0.0
          %1871 = vmatprep.subr.mxu0 0.0
          %1872 = vmatpush2.msra.mxu0 0.0
          %1873 = vmatprep.subr.mxu0 0.0
          %1874 = vmatpush2.msra.mxu0 0.0
          %1875 = vmatprep.mubr.f32.mxu0 0.0
          %1876 = vmatmul.mubr.f32.gmra.mxu0 %v1809
          %v1877 = vpop.f32.mrf.mxu0
          %v1878 = vadd.f32 0.0, %v1877
          %v1879 = vpop.f32.mrf.mxu0
          %1880 = vdwg.mxu0
          %v1882 = vsel %vm1238, %v1659, 0
          %1884 = vmatprep.subr.mxu0 0.0
          %1885 = vmatpush1.msra.mxu0 0.0
          %1886 = vmatprep.subr.mxu0 0.0
          %1887 = vmatpush1.msra.mxu0 0.0
          %1888 = vmatprep.subr.mxu0 0.0
          %1889 = vmatpush1.msra.mxu0 0.0
          %1890 = vmatprep.subr.mxu0 0.0
          %1891 = vmatpush1.msra.mxu0 0.0
          %1892 = vmatprep.subr.mxu0 0.0
          %1893 = vmatpush1.msra.mxu0 0.0
          %1894 = vmatprep.subr.mxu0 0.0
          %1895 = vmatpush1.msra.mxu0 0.0
          %1896 = vmatprep.subr.mxu0 0.0
          %1897 = vmatpush1.msra.mxu0 0.0
          %1898 = vmatprep.subr.mxu0 0.0
          %1899 = vmatpush1.msra.mxu0 0.0
          %1900 = vmatprep.subr.mxu0 0.0
          %1901 = vmatpush1.msra.mxu0 0.0
          %1902 = vmatprep.subr.mxu0 0.0
          %1903 = vmatpush1.msra.mxu0 0.0
          %1904 = vmatprep.subr.mxu0 0.0
          %1905 = vmatpush1.msra.mxu0 0.0
          %1906 = vmatprep.subr.mxu0 0.0
          %1907 = vmatpush1.msra.mxu0 0.0
          %1908 = vmatprep.subr.mxu0 0.0
          %1909 = vmatpush1.msra.mxu0 0.0
          %1910 = vmatprep.subr.mxu0 0.0
          %1911 = vmatpush1.msra.mxu0 0.0
          %1912 = vmatprep.subr.mxu0 0.0
          %1913 = vmatpush1.msra.mxu0 0.0
          %1914 = vmatprep.subr.mxu0 0.0
          %1915 = vmatpush1.msra.mxu0 %v1232
          %1916 = vmatprep.subr.mxu0 0.0
          %1917 = vmatpush2.msra.mxu0 0.0
          %1918 = vmatprep.subr.mxu0 0.0
          %1919 = vmatpush2.msra.mxu0 0.0
          %1920 = vmatprep.subr.mxu0 0.0
          %1921 = vmatpush2.msra.mxu0 0.0
          %1922 = vmatprep.subr.mxu0 0.0
          %1923 = vmatpush2.msra.mxu0 0.0
          %1924 = vmatprep.subr.mxu0 0.0
          %1925 = vmatpush2.msra.mxu0 0.0
          %1926 = vmatprep.subr.mxu0 0.0
          %1927 = vmatpush2.msra.mxu0 0.0
          %1928 = vmatprep.subr.mxu0 0.0
          %1929 = vmatpush2.msra.mxu0 0.0
          %1930 = vmatprep.subr.mxu0 0.0
          %1931 = vmatpush2.msra.mxu0 0.0
          %1932 = vmatprep.subr.mxu0 0.0
          %1933 = vmatpush2.msra.mxu0 0.0
          %1934 = vmatprep.subr.mxu0 0.0
          %1935 = vmatpush2.msra.mxu0 0.0
          %1936 = vmatprep.subr.mxu0 0.0
          %1937 = vmatpush2.msra.mxu0 0.0
          %1938 = vmatprep.subr.mxu0 0.0
          %1939 = vmatpush2.msra.mxu0 0.0
          %1940 = vmatprep.subr.mxu0 0.0
          %1941 = vmatpush2.msra.mxu0 0.0
          %1942 = vmatprep.subr.mxu0 0.0
          %1943 = vmatpush2.msra.mxu0 0.0
          %1944 = vmatprep.subr.mxu0 0.0
          %1945 = vmatpush2.msra.mxu0 0.0
          %1946 = vmatprep.subr.mxu0 0.0
          %1947 = vmatpush2.msra.mxu0 0.0
          %1948 = vmatprep.mubr.f32.mxu0 0.0
          %1949 = vmatmul.mubr.f32.gmra.mxu0 %v1882
          %v1950 = vpop.f32.mrf.mxu0
          %v1951 = vadd.f32 0.0, %v1950
          %v1952 = vpop.f32.mrf.mxu0
          %1953 = vdwg.mxu0
          %v1955 = vsel %vm1238, %v1732, 0
          %1957 = vmatprep.subr.mxu0 0.0
          %1958 = vmatpush1.msra.mxu0 0.0
          %1959 = vmatprep.subr.mxu0 0.0
          %1960 = vmatpush1.msra.mxu0 0.0
          %1961 = vmatprep.subr.mxu0 0.0
          %1962 = vmatpush1.msra.mxu0 0.0
          %1963 = vmatprep.subr.mxu0 0.0
          %1964 = vmatpush1.msra.mxu0 0.0
          %1965 = vmatprep.subr.mxu0 0.0
          %1966 = vmatpush1.msra.mxu0 0.0
          %1967 = vmatprep.subr.mxu0 0.0
          %1968 = vmatpush1.msra.mxu0 0.0
          %1969 = vmatprep.subr.mxu0 0.0
          %1970 = vmatpush1.msra.mxu0 0.0
          %1971 = vmatprep.subr.mxu0 0.0
          %1972 = vmatpush1.msra.mxu0 0.0
          %1973 = vmatprep.subr.mxu0 0.0
          %1974 = vmatpush1.msra.mxu0 0.0
          %1975 = vmatprep.subr.mxu0 0.0
          %1976 = vmatpush1.msra.mxu0 0.0
          %1977 = vmatprep.subr.mxu0 0.0
          %1978 = vmatpush1.msra.mxu0 0.0
          %1979 = vmatprep.subr.mxu0 0.0
          %1980 = vmatpush1.msra.mxu0 0.0
          %1981 = vmatprep.subr.mxu0 0.0
          %1982 = vmatpush1.msra.mxu0 0.0
          %1983 = vmatprep.subr.mxu0 0.0
          %1984 = vmatpush1.msra.mxu0 0.0
          %1985 = vmatprep.subr.mxu0 0.0
          %1986 = vmatpush1.msra.mxu0 0.0
          %1987 = vmatprep.subr.mxu0 0.0
          %1988 = vmatpush1.msra.mxu0 %v1233
          %1989 = vmatprep.subr.mxu0 0.0
          %1990 = vmatpush2.msra.mxu0 0.0
          %1991 = vmatprep.subr.mxu0 0.0
          %1992 = vmatpush2.msra.mxu0 0.0
          %1993 = vmatprep.subr.mxu0 0.0
          %1994 = vmatpush2.msra.mxu0 0.0
          %1995 = vmatprep.subr.mxu0 0.0
          %1996 = vmatpush2.msra.mxu0 0.0
          %1997 = vmatprep.subr.mxu0 0.0
          %1998 = vmatpush2.msra.mxu0 0.0
          %1999 = vmatprep.subr.mxu0 0.0
          %2000 = vmatpush2.msra.mxu0 0.0
          %2001 = vmatprep.subr.mxu0 0.0
          %2002 = vmatpush2.msra.mxu0 0.0
          %2003 = vmatprep.subr.mxu0 0.0
          %2004 = vmatpush2.msra.mxu0 0.0
          %2005 = vmatprep.subr.mxu0 0.0
          %2006 = vmatpush2.msra.mxu0 0.0
          %2007 = vmatprep.subr.mxu0 0.0
          %2008 = vmatpush2.msra.mxu0 0.0
          %2009 = vmatprep.subr.mxu0 0.0
          %2010 = vmatpush2.msra.mxu0 0.0
          %2011 = vmatprep.subr.mxu0 0.0
          %2012 = vmatpush2.msra.mxu0 0.0
          %2013 = vmatprep.subr.mxu0 0.0
          %2014 = vmatpush2.msra.mxu0 0.0
          %2015 = vmatprep.subr.mxu0 0.0
          %2016 = vmatpush2.msra.mxu0 0.0
          %2017 = vmatprep.subr.mxu0 0.0
          %2018 = vmatpush2.msra.mxu0 0.0
          %2019 = vmatprep.subr.mxu0 0.0
          %2020 = vmatpush2.msra.mxu0 0.0
          %2021 = vmatprep.mubr.f32.mxu0 0.0
          %2022 = vmatmul.mubr.f32.gmra.mxu0 %v1955
          %v2023 = vpop.f32.mrf.mxu0
          %v2024 = vadd.f32 0.0, %v2023
          %v2025 = vpop.f32.mrf.mxu0
          %2026 = vdwg.mxu0
          %v2028 = vsel %vm1238, %v1805, 0
          %2030 = vmatprep.subr.mxu0 0.0
          %2031 = vmatpush1.msra.mxu0 0.0
          %2032 = vmatprep.subr.mxu0 0.0
          %2033 = vmatpush1.msra.mxu0 0.0
          %2034 = vmatprep.subr.mxu0 0.0
          %2035 = vmatpush1.msra.mxu0 0.0
          %2036 = vmatprep.subr.mxu0 0.0
          %2037 = vmatpush1.msra.mxu0 0.0
          %2038 = vmatprep.subr.mxu0 0.0
          %2039 = vmatpush1.msra.mxu0 0.0
          %2040 = vmatprep.subr.mxu0 0.0
          %2041 = vmatpush1.msra.mxu0 0.0
          %2042 = vmatprep.subr.mxu0 0.0
          %2043 = vmatpush1.msra.mxu0 0.0
          %2044 = vmatprep.subr.mxu0 0.0
          %2045 = vmatpush1.msra.mxu0 0.0
          %2046 = vmatprep.subr.mxu0 0.0
          %2047 = vmatpush1.msra.mxu0 0.0
          %2048 = vmatprep.subr.mxu0 0.0
          %2049 = vmatpush1.msra.mxu0 0.0
          %2050 = vmatprep.subr.mxu0 0.0
          %2051 = vmatpush1.msra.mxu0 0.0
          %2052 = vmatprep.subr.mxu0 0.0
          %2053 = vmatpush1.msra.mxu0 0.0
          %2054 = vmatprep.subr.mxu0 0.0
          %2055 = vmatpush1.msra.mxu0 0.0
          %2056 = vmatprep.subr.mxu0 0.0
          %2057 = vmatpush1.msra.mxu0 0.0
          %2058 = vmatprep.subr.mxu0 0.0
          %2059 = vmatpush1.msra.mxu0 0.0
          %2060 = vmatprep.subr.mxu0 0.0
          %2061 = vmatpush1.msra.mxu0 %v1234
          %2062 = vmatprep.subr.mxu0 0.0
          %2063 = vmatpush2.msra.mxu0 0.0
          %2064 = vmatprep.subr.mxu0 0.0
          %2065 = vmatpush2.msra.mxu0 0.0
          %2066 = vmatprep.subr.mxu0 0.0
          %2067 = vmatpush2.msra.mxu0 0.0
          %2068 = vmatprep.subr.mxu0 0.0
          %2069 = vmatpush2.msra.mxu0 0.0
          %2070 = vmatprep.subr.mxu0 0.0
          %2071 = vmatpush2.msra.mxu0 0.0
          %2072 = vmatprep.subr.mxu0 0.0
          %2073 = vmatpush2.msra.mxu0 0.0
          %2074 = vmatprep.subr.mxu0 0.0
          %2075 = vmatpush2.msra.mxu0 0.0
          %2076 = vmatprep.subr.mxu0 0.0
          %2077 = vmatpush2.msra.mxu0 0.0
          %2078 = vmatprep.subr.mxu0 0.0
          %2079 = vmatpush2.msra.mxu0 0.0
          %2080 = vmatprep.subr.mxu0 0.0
          %2081 = vmatpush2.msra.mxu0 0.0
          %2082 = vmatprep.subr.mxu0 0.0
          %2083 = vmatpush2.msra.mxu0 0.0
          %2084 = vmatprep.subr.mxu0 0.0
          %2085 = vmatpush2.msra.mxu0 0.0
          %2086 = vmatprep.subr.mxu0 0.0
          %2087 = vmatpush2.msra.mxu0 0.0
          %2088 = vmatprep.subr.mxu0 0.0
          %2089 = vmatpush2.msra.mxu0 0.0
          %2090 = vmatprep.subr.mxu0 0.0
          %2091 = vmatpush2.msra.mxu0 0.0
          %2092 = vmatprep.subr.mxu0 0.0
          %2093 = vmatpush2.msra.mxu0 0.0
          %2094 = vmatprep.mubr.f32.mxu0 0.0
          %2095 = vmatmul.mubr.f32.gmra.mxu0 %v2028
          %v2096 = vpop.f32.mrf.mxu0
          %v2097 = vadd.f32 0.0, %v2096
          %v2098 = vpop.f32.mrf.mxu0
          %2099 = vdwg.mxu0
          %v2101 = vsel %vm1238, %v1878, 0
          %2103 = vmatprep.subr.mxu0 0.0
          %2104 = vmatpush1.msra.mxu0 0.0
          %2105 = vmatprep.subr.mxu0 0.0
          %2106 = vmatpush1.msra.mxu0 0.0
          %2107 = vmatprep.subr.mxu0 0.0
          %2108 = vmatpush1.msra.mxu0 0.0
          %2109 = vmatprep.subr.mxu0 0.0
          %2110 = vmatpush1.msra.mxu0 0.0
          %2111 = vmatprep.subr.mxu0 0.0
          %2112 = vmatpush1.msra.mxu0 0.0
          %2113 = vmatprep.subr.mxu0 0.0
          %2114 = vmatpush1.msra.mxu0 0.0
          %2115 = vmatprep.subr.mxu0 0.0
          %2116 = vmatpush1.msra.mxu0 0.0
          %2117 = vmatprep.subr.mxu0 0.0
          %2118 = vmatpush1.msra.mxu0 0.0
          %2119 = vmatprep.subr.mxu0 0.0
          %2120 = vmatpush1.msra.mxu0 0.0
          %2121 = vmatprep.subr.mxu0 0.0
          %2122 = vmatpush1.msra.mxu0 0.0
          %2123 = vmatprep.subr.mxu0 0.0
          %2124 = vmatpush1.msra.mxu0 0.0
          %2125 = vmatprep.subr.mxu0 0.0
          %2126 = vmatpush1.msra.mxu0 0.0
          %2127 = vmatprep.subr.mxu0 0.0
          %2128 = vmatpush1.msra.mxu0 0.0
          %2129 = vmatprep.subr.mxu0 0.0
          %2130 = vmatpush1.msra.mxu0 0.0
          %2131 = vmatprep.subr.mxu0 0.0
          %2132 = vmatpush1.msra.mxu0 0.0
          %2133 = vmatprep.subr.mxu0 0.0
          %2134 = vmatpush1.msra.mxu0 %v1235
          %2135 = vmatprep.subr.mxu0 0.0
          %2136 = vmatpush2.msra.mxu0 0.0
          %2137 = vmatprep.subr.mxu0 0.0
          %2138 = vmatpush2.msra.mxu0 0.0
          %2139 = vmatprep.subr.mxu0 0.0
          %2140 = vmatpush2.msra.mxu0 0.0
          %2141 = vmatprep.subr.mxu0 0.0
          %2142 = vmatpush2.msra.mxu0 0.0
          %2143 = vmatprep.subr.mxu0 0.0
          %2144 = vmatpush2.msra.mxu0 0.0
          %2145 = vmatprep.subr.mxu0 0.0
          %2146 = vmatpush2.msra.mxu0 0.0
          %2147 = vmatprep.subr.mxu0 0.0
          %2148 = vmatpush2.msra.mxu0 0.0
          %2149 = vmatprep.subr.mxu0 0.0
          %2150 = vmatpush2.msra.mxu0 0.0
          %2151 = vmatprep.subr.mxu0 0.0
          %2152 = vmatpush2.msra.mxu0 0.0
          %2153 = vmatprep.subr.mxu0 0.0
          %2154 = vmatpush2.msra.mxu0 0.0
          %2155 = vmatprep.subr.mxu0 0.0
          %2156 = vmatpush2.msra.mxu0 0.0
          %2157 = vmatprep.subr.mxu0 0.0
          %2158 = vmatpush2.msra.mxu0 0.0
          %2159 = vmatprep.subr.mxu0 0.0
          %2160 = vmatpush2.msra.mxu0 0.0
          %2161 = vmatprep.subr.mxu0 0.0
          %2162 = vmatpush2.msra.mxu0 0.0
          %2163 = vmatprep.subr.mxu0 0.0
          %2164 = vmatpush2.msra.mxu0 0.0
          %2165 = vmatprep.subr.mxu0 0.0
          %2166 = vmatpush2.msra.mxu0 0.0
          %2167 = vmatprep.mubr.f32.mxu0 0.0
          %2168 = vmatmul.mubr.f32.gmra.mxu0 %v2101
          %v2169 = vpop.f32.mrf.mxu0
          %v2170 = vadd.f32 0.0, %v2169
          %v2171 = vpop.f32.mrf.mxu0
          %2172 = vdwg.mxu0
          %v2173 = vsel %vm1143, %v1951, 0.0
          %v2174 = vsel %vm1143, %v2024, 0.0
          %v2175 = vadd.f32 %v2173, %v2174
          %v2176 = vsel %vm1143, %v2097, 0.0
          %v2177 = vadd.f32 %v2175, %v2176
          %v2178 = vsel %vm1143, %v2170, 0.0
          %v2179 = vadd.f32 %v2177, %v2178
          %v2181 = vlaneseq
          %v2182 = vshrl.u32 %v2181, 7
          %v2183 = vsub.s32 0, %v2182
          %v2184 = vrot.slane %v1237, %v2183
          %v2186 = vadd.f32 %v2179, %v2184
          %v2187 = vadd.f32 %v1124, %v2186
          %s2188 = scalar_lea.vmem [#allocation19], %s1119
          %v2189 = vld [vmem:[%s2188] sm:$0x1]
          %s2190 = scalar_lea.vmem [#allocation20], %s1119
          %v2191 = vld [vmem:[%s2190] sm:$0x1]
          %v2192 = vsel %vm1143, %v2187, 0.0
          %2193 = vadd.xlane.f32.xlu0 %v2192
          %v2194 = vpop.xlane.xlu0 %2193
          %v2195 = vrcp.pop 32.0
          %v2196 = vmul.f32 %v2194, %v2195
          %v2197 = vsub.f32 %v2187, %v2196
          %v2198 = vmul.f32 %v2197, %v2197
          %v2199 = vsel %vm1143, %v2198, 0.0
          %2200 = vadd.xlane.f32.xlu0 %v2199
          %v2201 = vpop.xlane.xlu0 %2200
          %v2202 = vmul.f32 %v2201, %v2195
          %v2203 = vadd.f32 %v2202, 1e-05
          %v2204 = vrsqrt.pop %v2203
          %v2205 = vmul.f32 %v2197, %v2204
          %v2207 = vlaneseq
          %v2208 = vshrl.u32 %v2207, 7
          %v2209 = vsub.s32 0, %v2208
          %v2210 = vrot.slane %v2189, %v2209
          %v2212 = vmul.f32 %v2205, %v2210
          %v2214 = vlaneseq
          %v2215 = vshrl.u32 %v2214, 7
          %v2216 = vsub.s32 0, %v2215
          %v2217 = vrot.slane %v2191, %v2216
          %v2219 = vadd.f32 %v2212, %v2217
          %s2220 = scalar_lea.vmem %s9, %s1129
          %v2221 = vld [vmem:[%s2220] sm:$0xff]
          %v2222 = vld [vmem:[%s2220 + $0x8] sm:$0xff]
          %v2223 = vld [vmem:[%s2220 + $0x10] sm:$0xff]
          %v2224 = vld [vmem:[%s2220 + $0x18] sm:$0xff]
          %s2225 = scalar_lea.vmem [#allocation14], %s1119
          %v2226 = vld [vmem:[%s2225] sm:$0x1]
          %v2228 = vlaneseq
          %v2229 = vshrl.u32 %v2228, 7
          %v2230 = vsub.s32 0, %v2229
          %v2231 = vrot.slane %v2226, %v2230
          %v2234 = vsel %vm1143, %v2219, 0
          %2236 = vmatprep.subr.mxu0 0.0
          %2237 = vmatpush1.msra.mxu0 0.0
          %2238 = vmatprep.subr.mxu0 0.0
          %2239 = vmatpush1.msra.mxu0 0.0
          %2240 = vmatprep.subr.mxu0 0.0
          %2241 = vmatpush1.msra.mxu0 0.0
          %2242 = vmatprep.subr.mxu0 0.0
          %2243 = vmatpush1.msra.mxu0 0.0
          %2244 = vmatprep.subr.mxu0 0.0
          %2245 = vmatpush1.msra.mxu0 0.0
          %2246 = vmatprep.subr.mxu0 0.0
          %2247 = vmatpush1.msra.mxu0 0.0
          %2248 = vmatprep.subr.mxu0 0.0
          %2249 = vmatpush1.msra.mxu0 0.0
          %2250 = vmatprep.subr.mxu0 0.0
          %2251 = vmatpush1.msra.mxu0 0.0
          %2252 = vmatprep.subr.mxu0 0.0
          %2253 = vmatpush1.msra.mxu0 0.0
          %2254 = vmatprep.subr.mxu0 0.0
          %2255 = vmatpush1.msra.mxu0 0.0
          %2256 = vmatprep.subr.mxu0 0.0
          %2257 = vmatpush1.msra.mxu0 0.0
          %2258 = vmatprep.subr.mxu0 0.0
          %2259 = vmatpush1.msra.mxu0 0.0
          %2260 = vmatprep.subr.mxu0 0.0
          %2261 = vmatpush1.msra.mxu0 %v2224
          %2262 = vmatprep.subr.mxu0 0.0
          %2263 = vmatpush1.msra.mxu0 %v2223
          %2264 = vmatprep.subr.mxu0 0.0
          %2265 = vmatpush1.msra.mxu0 %v2222
          %2266 = vmatprep.subr.mxu0 0.0
          %2267 = vmatpush1.msra.mxu0 %v2221
          %2268 = vmatprep.subr.mxu0 0.0
          %2269 = vmatpush2.msra.mxu0 0.0
          %2270 = vmatprep.subr.mxu0 0.0
          %2271 = vmatpush2.msra.mxu0 0.0
          %2272 = vmatprep.subr.mxu0 0.0
          %2273 = vmatpush2.msra.mxu0 0.0
          %2274 = vmatprep.subr.mxu0 0.0
          %2275 = vmatpush2.msra.mxu0 0.0
          %2276 = vmatprep.subr.mxu0 0.0
          %2277 = vmatpush2.msra.mxu0 0.0
          %2278 = vmatprep.subr.mxu0 0.0
          %2279 = vmatpush2.msra.mxu0 0.0
          %2280 = vmatprep.subr.mxu0 0.0
          %2281 = vmatpush2.msra.mxu0 0.0
          %2282 = vmatprep.subr.mxu0 0.0
          %2283 = vmatpush2.msra.mxu0 0.0
          %2284 = vmatprep.subr.mxu0 0.0
          %2285 = vmatpush2.msra.mxu0 0.0
          %2286 = vmatprep.subr.mxu0 0.0
          %2287 = vmatpush2.msra.mxu0 0.0
          %2288 = vmatprep.subr.mxu0 0.0
          %2289 = vmatpush2.msra.mxu0 0.0
          %2290 = vmatprep.subr.mxu0 0.0
          %2291 = vmatpush2.msra.mxu0 0.0
          %2292 = vmatprep.subr.mxu0 0.0
          %2293 = vmatpush2.msra.mxu0 0.0
          %2294 = vmatprep.subr.mxu0 0.0
          %2295 = vmatpush2.msra.mxu0 0.0
          %2296 = vmatprep.subr.mxu0 0.0
          %2297 = vmatpush2.msra.mxu0 0.0
          %2298 = vmatprep.subr.mxu0 0.0
          %2299 = vmatpush2.msra.mxu0 0.0
          %2300 = vmatprep.mubr.f32.mxu0 0.0
          %2301 = vmatmul.mubr.f32.gmra.mxu0 %v2234
          %v2302 = vpop.f32.mrf.mxu0
          %v2303 = vadd.f32 %v2231, %v2302
          %v2304 = vpop.f32.mrf.mxu0
          %2305 = vdwg.mxu0
          %v2307 = vsel %vm1143, %v1113, 0
          %2309 = vmatprep.subr.mxu0 0.0
          %2310 = vmatpush1.msra.mxu0 0.0
          %2311 = vmatprep.subr.mxu0 0.0
          %2312 = vmatpush1.msra.mxu0 0.0
          %2313 = vmatprep.subr.mxu0 0.0
          %2314 = vmatpush1.msra.mxu0 0.0
          %2315 = vmatprep.subr.mxu0 0.0
          %2316 = vmatpush1.msra.mxu0 0.0
          %2317 = vmatprep.subr.mxu0 0.0
          %2318 = vmatpush1.msra.mxu0 0.0
          %2319 = vmatprep.subr.mxu0 0.0
          %2320 = vmatpush1.msra.mxu0 0.0
          %2321 = vmatprep.subr.mxu0 0.0
          %2322 = vmatpush1.msra.mxu0 0.0
          %2323 = vmatprep.subr.mxu0 0.0
          %2324 = vmatpush1.msra.mxu0 0.0
          %2325 = vmatprep.subr.mxu0 0.0
          %2326 = vmatpush1.msra.mxu0 0.0
          %2327 = vmatprep.subr.mxu0 0.0
          %2328 = vmatpush1.msra.mxu0 0.0
          %2329 = vmatprep.subr.mxu0 0.0
          %2330 = vmatpush1.msra.mxu0 0.0
          %2331 = vmatprep.subr.mxu0 0.0
          %2332 = vmatpush1.msra.mxu0 0.0
          %2333 = vmatprep.subr.mxu0 0.0
          %2334 = vmatpush1.msra.mxu0 %v2224
          %2335 = vmatprep.subr.mxu0 0.0
          %2336 = vmatpush1.msra.mxu0 %v2223
          %2337 = vmatprep.subr.mxu0 0.0
          %2338 = vmatpush1.msra.mxu0 %v2222
          %2339 = vmatprep.subr.mxu0 0.0
          %2340 = vmatpush1.msra.mxu0 %v2221
          %2341 = vmatprep.subr.mxu0 0.0
          %2342 = vmatpush2.msra.mxu0 0.0
          %2343 = vmatprep.subr.mxu0 0.0
          %2344 = vmatpush2.msra.mxu0 0.0
          %2345 = vmatprep.subr.mxu0 0.0
          %2346 = vmatpush2.msra.mxu0 0.0
          %2347 = vmatprep.subr.mxu0 0.0
          %2348 = vmatpush2.msra.mxu0 0.0
          %2349 = vmatprep.subr.mxu0 0.0
          %2350 = vmatpush2.msra.mxu0 0.0
          %2351 = vmatprep.subr.mxu0 0.0
          %2352 = vmatpush2.msra.mxu0 0.0
          %2353 = vmatprep.subr.mxu0 0.0
          %2354 = vmatpush2.msra.mxu0 0.0
          %2355 = vmatprep.subr.mxu0 0.0
          %2356 = vmatpush2.msra.mxu0 0.0
          %2357 = vmatprep.subr.mxu0 0.0
          %2358 = vmatpush2.msra.mxu0 0.0
          %2359 = vmatprep.subr.mxu0 0.0
          %2360 = vmatpush2.msra.mxu0 0.0
          %2361 = vmatprep.subr.mxu0 0.0
          %2362 = vmatpush2.msra.mxu0 0.0
          %2363 = vmatprep.subr.mxu0 0.0
          %2364 = vmatpush2.msra.mxu0 0.0
          %2365 = vmatprep.subr.mxu0 0.0
          %2366 = vmatpush2.msra.mxu0 0.0
          %2367 = vmatprep.subr.mxu0 0.0
          %2368 = vmatpush2.msra.mxu0 0.0
          %2369 = vmatprep.subr.mxu0 0.0
          %2370 = vmatpush2.msra.mxu0 0.0
          %2371 = vmatprep.subr.mxu0 0.0
          %2372 = vmatpush2.msra.mxu0 0.0
          %2373 = vmatprep.mubr.f32.mxu0 0.0
          %2374 = vmatmul.mubr.f32.gmra.mxu0 %v2307
          %v2375 = vpop.f32.mrf.mxu0
          %v2376 = vadd.f32 %v2231, %v2375
          %v2377 = vpop.f32.mrf.mxu0
          %2378 = vdwg.mxu0
          %2380 = vrot.lane.b32.xlu0 %v2303, 120
          %v2381 = vpop.permute.xlu0 %2380
          %2383 = vrot.lane.b32.xlu0 %v2303, 112
          %v2384 = vpop.permute.xlu0 %2383
          %2386 = vrot.lane.b32.xlu0 %v2303, 104
          %v2387 = vpop.permute.xlu0 %2386
          %v2389 = vmul.f32 %v2303, 0.17677669
          %v2390 = vmul.f32 %v2381, 0.17677669
          %v2391 = vmul.f32 %v2384, 0.17677669
          %v2392 = vmul.f32 %v2387, 0.17677669
          %2394 = vrot.lane.b32.xlu0 %v2376, 120
          %v2395 = vpop.permute.xlu0 %2394
          %2397 = vrot.lane.b32.xlu0 %v2376, 112
          %v2398 = vpop.permute.xlu0 %2397
          %2400 = vrot.lane.b32.xlu0 %v2376, 104
          %v2401 = vpop.permute.xlu0 %2400
          %s2403 = scalar_lea.vmem [#allocation16], %s1129
          %v2404 = vld [vmem:[%s2403] sm:$0xff]
          %v2405 = vld [vmem:[%s2403 + $0x8] sm:$0xff]
          %v2406 = vld [vmem:[%s2403 + $0x10] sm:$0xff]
          %v2407 = vld [vmem:[%s2403 + $0x18] sm:$0xff]
          %s2408 = scalar_lea.vmem [#allocation17], %s1119
          %v2409 = vld [vmem:[%s2408] sm:$0x1]
          %v2411 = vsel %vm1238, %v2389, 0
          %v2413 = vsel %vm1238, %v2376, 0
          %2415 = vmatprep.subr.mxu0 0.0
          %2416 = vmatpush1.xpose.msra.mxu0 0.0
          %2417 = vmatprep.subr.mxu0 0.0
          %2418 = vmatpush1.xpose.msra.mxu0 0.0
          %2419 = vmatprep.subr.mxu0 0.0
          %2420 = vmatpush1.xpose.msra.mxu0 0.0
          %2421 = vmatprep.subr.mxu0 0.0
          %2422 = vmatpush1.xpose.msra.mxu0 0.0
          %2423 = vmatprep.subr.mxu0 0.0
          %2424 = vmatpush1.xpose.msra.mxu0 0.0
          %2425 = vmatprep.subr.mxu0 0.0
          %2426 = vmatpush1.xpose.msra.mxu0 0.0
          %2427 = vmatprep.subr.mxu0 0.0
          %2428 = vmatpush1.xpose.msra.mxu0 0.0
          %2429 = vmatprep.subr.mxu0 0.0
          %2430 = vmatpush1.xpose.msra.mxu0 0.0
          %2431 = vmatprep.subr.mxu0 0.0
          %2432 = vmatpush1.xpose.msra.mxu0 0.0
          %2433 = vmatprep.subr.mxu0 0.0
          %2434 = vmatpush1.xpose.msra.mxu0 0.0
          %2435 = vmatprep.subr.mxu0 0.0
          %2436 = vmatpush1.xpose.msra.mxu0 0.0
          %2437 = vmatprep.subr.mxu0 0.0
          %2438 = vmatpush1.xpose.msra.mxu0 0.0
          %2439 = vmatprep.subr.mxu0 0.0
          %2440 = vmatpush1.xpose.msra.mxu0 0.0
          %2441 = vmatprep.subr.mxu0 0.0
          %2442 = vmatpush1.xpose.msra.mxu0 0.0
          %2443 = vmatprep.subr.mxu0 0.0
          %2444 = vmatpush1.xpose.msra.mxu0 0.0
          %2445 = vmatprep.subr.mxu0 0.0
          %2446 = vmatpush1.xpose.msra.mxu0 %v2413
          %2447 = vmatprep.subr.mxu0 0.0
          %2448 = vmatpush2.xpose.msra.mxu0 0.0
          %2449 = vmatprep.subr.mxu0 0.0
          %2450 = vmatpush2.xpose.msra.mxu0 0.0
          %2451 = vmatprep.subr.mxu0 0.0
          %2452 = vmatpush2.xpose.msra.mxu0 0.0
          %2453 = vmatprep.subr.mxu0 0.0
          %2454 = vmatpush2.xpose.msra.mxu0 0.0
          %2455 = vmatprep.subr.mxu0 0.0
          %2456 = vmatpush2.xpose.msra.mxu0 0.0
          %2457 = vmatprep.subr.mxu0 0.0
          %2458 = vmatpush2.xpose.msra.mxu0 0.0
          %2459 = vmatprep.subr.mxu0 0.0
          %2460 = vmatpush2.xpose.msra.mxu0 0.0
          %2461 = vmatprep.subr.mxu0 0.0
          %2462 = vmatpush2.xpose.msra.mxu0 0.0
          %2463 = vmatprep.subr.mxu0 0.0
          %2464 = vmatpush2.xpose.msra.mxu0 0.0
          %2465 = vmatprep.subr.mxu0 0.0
          %2466 = vmatpush2.xpose.msra.mxu0 0.0
          %2467 = vmatprep.subr.mxu0 0.0
          %2468 = vmatpush2.xpose.msra.mxu0 0.0
          %2469 = vmatprep.subr.mxu0 0.0
          %2470 = vmatpush2.xpose.msra.mxu0 0.0
          %2471 = vmatprep.subr.mxu0 0.0
          %2472 = vmatpush2.xpose.msra.mxu0 0.0
          %2473 = vmatprep.subr.mxu0 0.0
          %2474 = vmatpush2.xpose.msra.mxu0 0.0
          %2475 = vmatprep.subr.mxu0 0.0
          %2476 = vmatpush2.xpose.msra.mxu0 0.0
          %2477 = vmatprep.subr.mxu0 0.0
          %2478 = vmatpush2.xpose.msra.mxu0 0.0
          %2479 = vmatprep.mubr.f32.mxu0 0.0
          %2480 = vmatmul.mubr.f32.gmra.mxu0 %v2411
          %v2481 = vpop.f32.mrf.mxu0
          %v2482 = vadd.f32 0.0, %v2481
          %v2483 = vpop.f32.mrf.mxu0
          %2484 = vdwg.mxu0
          %v2486 = vsel %vm1238, %v2390, 0
          %v2488 = vsel %vm1238, %v2395, 0
          %2490 = vmatprep.subr.mxu0 0.0
          %2491 = vmatpush1.xpose.msra.mxu0 0.0
          %2492 = vmatprep.subr.mxu0 0.0
          %2493 = vmatpush1.xpose.msra.mxu0 0.0
          %2494 = vmatprep.subr.mxu0 0.0
          %2495 = vmatpush1.xpose.msra.mxu0 0.0
          %2496 = vmatprep.subr.mxu0 0.0
          %2497 = vmatpush1.xpose.msra.mxu0 0.0
          %2498 = vmatprep.subr.mxu0 0.0
          %2499 = vmatpush1.xpose.msra.mxu0 0.0
          %2500 = vmatprep.subr.mxu0 0.0
          %2501 = vmatpush1.xpose.msra.mxu0 0.0
          %2502 = vmatprep.subr.mxu0 0.0
          %2503 = vmatpush1.xpose.msra.mxu0 0.0
          %2504 = vmatprep.subr.mxu0 0.0
          %2505 = vmatpush1.xpose.msra.mxu0 0.0
          %2506 = vmatprep.subr.mxu0 0.0
          %2507 = vmatpush1.xpose.msra.mxu0 0.0
          %2508 = vmatprep.subr.mxu0 0.0
          %2509 = vmatpush1.xpose.msra.mxu0 0.0
          %2510 = vmatprep.subr.mxu0 0.0
          %2511 = vmatpush1.xpose.msra.mxu0 0.0
          %2512 = vmatprep.subr.mxu0 0.0
          %2513 = vmatpush1.xpose.msra.mxu0 0.0
          %2514 = vmatprep.subr.mxu0 0.0
          %2515 = vmatpush1.xpose.msra.mxu0 0.0
          %2516 = vmatprep.subr.mxu0 0.0
          %2517 = vmatpush1.xpose.msra.mxu0 0.0
          %2518 = vmatprep.subr.mxu0 0.0
          %2519 = vmatpush1.xpose.msra.mxu0 0.0
          %2520 = vmatprep.subr.mxu0 0.0
          %2521 = vmatpush1.xpose.msra.mxu0 %v2488
          %2522 = vmatprep.subr.mxu0 0.0
          %2523 = vmatpush2.xpose.msra.mxu0 0.0
          %2524 = vmatprep.subr.mxu0 0.0
          %2525 = vmatpush2.xpose.msra.mxu0 0.0
          %2526 = vmatprep.subr.mxu0 0.0
          %2527 = vmatpush2.xpose.msra.mxu0 0.0
          %2528 = vmatprep.subr.mxu0 0.0
          %2529 = vmatpush2.xpose.msra.mxu0 0.0
          %2530 = vmatprep.subr.mxu0 0.0
          %2531 = vmatpush2.xpose.msra.mxu0 0.0
          %2532 = vmatprep.subr.mxu0 0.0
          %2533 = vmatpush2.xpose.msra.mxu0 0.0
          %2534 = vmatprep.subr.mxu0 0.0
          %2535 = vmatpush2.xpose.msra.mxu0 0.0
          %2536 = vmatprep.subr.mxu0 0.0
          %2537 = vmatpush2.xpose.msra.mxu0 0.0
          %2538 = vmatprep.subr.mxu0 0.0
          %2539 = vmatpush2.xpose.msra.mxu0 0.0
          %2540 = vmatprep.subr.mxu0 0.0
          %2541 = vmatpush2.xpose.msra.mxu0 0.0
          %2542 = vmatprep.subr.mxu0 0.0
          %2543 = vmatpush2.xpose.msra.mxu0 0.0
          %2544 = vmatprep.subr.mxu0 0.0
          %2545 = vmatpush2.xpose.msra.mxu0 0.0
          %2546 = vmatprep.subr.mxu0 0.0
          %2547 = vmatpush2.xpose.msra.mxu0 0.0
          %2548 = vmatprep.subr.mxu0 0.0
          %2549 = vmatpush2.xpose.msra.mxu0 0.0
          %2550 = vmatprep.subr.mxu0 0.0
          %2551 = vmatpush2.xpose.msra.mxu0 0.0
          %2552 = vmatprep.subr.mxu0 0.0
          %2553 = vmatpush2.xpose.msra.mxu0 0.0
          %2554 = vmatprep.mubr.f32.mxu0 0.0
          %2555 = vmatmul.mubr.f32.gmra.mxu0 %v2486
          %v2556 = vpop.f32.mrf.mxu0
          %v2557 = vadd.f32 0.0, %v2556
          %v2558 = vpop.f32.mrf.mxu0
          %2559 = vdwg.mxu0
          %v2561 = vsel %vm1238, %v2391, 0
          %v2563 = vsel %vm1238, %v2398, 0
          %2565 = vmatprep.subr.mxu0 0.0
          %2566 = vmatpush1.xpose.msra.mxu0 0.0
          %2567 = vmatprep.subr.mxu0 0.0
          %2568 = vmatpush1.xpose.msra.mxu0 0.0
          %2569 = vmatprep.subr.mxu0 0.0
          %2570 = vmatpush1.xpose.msra.mxu0 0.0
          %2571 = vmatprep.subr.mxu0 0.0
          %2572 = vmatpush1.xpose.msra.mxu0 0.0
          %2573 = vmatprep.subr.mxu0 0.0
          %2574 = vmatpush1.xpose.msra.mxu0 0.0
          %2575 = vmatprep.subr.mxu0 0.0
          %2576 = vmatpush1.xpose.msra.mxu0 0.0
          %2577 = vmatprep.subr.mxu0 0.0
          %2578 = vmatpush1.xpose.msra.mxu0 0.0
          %2579 = vmatprep.subr.mxu0 0.0
          %2580 = vmatpush1.xpose.msra.mxu0 0.0
          %2581 = vmatprep.subr.mxu0 0.0
          %2582 = vmatpush1.xpose.msra.mxu0 0.0
          %2583 = vmatprep.subr.mxu0 0.0
          %2584 = vmatpush1.xpose.msra.mxu0 0.0
          %2585 = vmatprep.subr.mxu0 0.0
          %2586 = vmatpush1.xpose.msra.mxu0 0.0
          %2587 = vmatprep.subr.mxu0 0.0
          %2588 = vmatpush1.xpose.msra.mxu0 0.0
          %2589 = vmatprep.subr.mxu0 0.0
          %2590 = vmatpush1.xpose.msra.mxu0 0.0
          %2591 = vmatprep.subr.mxu0 0.0
          %2592 = vmatpush1.xpose.msra.mxu0 0.0
          %2593 = vmatprep.subr.mxu0 0.0
          %2594 = vmatpush1.xpose.msra.mxu0 0.0
          %2595 = vmatprep.subr.mxu0 0.0
          %2596 = vmatpush1.xpose.msra.mxu0 %v2563
          %2597 = vmatprep.subr.mxu0 0.0
          %2598 = vmatpush2.xpose.msra.mxu0 0.0
          %2599 = vmatprep.subr.mxu0 0.0
          %2600 = vmatpush2.xpose.msra.mxu0 0.0
          %2601 = vmatprep.subr.mxu0 0.0
          %2602 = vmatpush2.xpose.msra.mxu0 0.0
          %2603 = vmatprep.subr.mxu0 0.0
          %2604 = vmatpush2.xpose.msra.mxu0 0.0
          %2605 = vmatprep.subr.mxu0 0.0
          %2606 = vmatpush2.xpose.msra.mxu0 0.0
          %2607 = vmatprep.subr.mxu0 0.0
          %2608 = vmatpush2.xpose.msra.mxu0 0.0
          %2609 = vmatprep.subr.mxu0 0.0
          %2610 = vmatpush2.xpose.msra.mxu0 0.0
          %2611 = vmatprep.subr.mxu0 0.0
          %2612 = vmatpush2.xpose.msra.mxu0 0.0
          %2613 = vmatprep.subr.mxu0 0.0
          %2614 = vmatpush2.xpose.msra.mxu0 0.0
          %2615 = vmatprep.subr.mxu0 0.0
          %2616 = vmatpush2.xpose.msra.mxu0 0.0
          %2617 = vmatprep.subr.mxu0 0.0
          %2618 = vmatpush2.xpose.msra.mxu0 0.0
          %2619 = vmatprep.subr.mxu0 0.0
          %2620 = vmatpush2.xpose.msra.mxu0 0.0
          %2621 = vmatprep.subr.mxu0 0.0
          %2622 = vmatpush2.xpose.msra.mxu0 0.0
          %2623 = vmatprep.subr.mxu0 0.0
          %2624 = vmatpush2.xpose.msra.mxu0 0.0
          %2625 = vmatprep.subr.mxu0 0.0
          %2626 = vmatpush2.xpose.msra.mxu0 0.0
          %2627 = vmatprep.subr.mxu0 0.0
          %2628 = vmatpush2.xpose.msra.mxu0 0.0
          %2629 = vmatprep.mubr.f32.mxu0 0.0
          %2630 = vmatmul.mubr.f32.gmra.mxu0 %v2561
          %v2631 = vpop.f32.mrf.mxu0
          %v2632 = vadd.f32 0.0, %v2631
          %v2633 = vpop.f32.mrf.mxu0
          %2634 = vdwg.mxu0
          %v2636 = vsel %vm1238, %v2392, 0
          %v2638 = vsel %vm1238, %v2401, 0
          %2640 = vmatprep.subr.mxu0 0.0
          %2641 = vmatpush1.xpose.msra.mxu0 0.0
          %2642 = vmatprep.subr.mxu0 0.0
          %2643 = vmatpush1.xpose.msra.mxu0 0.0
          %2644 = vmatprep.subr.mxu0 0.0
          %2645 = vmatpush1.xpose.msra.mxu0 0.0
          %2646 = vmatprep.subr.mxu0 0.0
          %2647 = vmatpush1.xpose.msra.mxu0 0.0
          %2648 = vmatprep.subr.mxu0 0.0
          %2649 = vmatpush1.xpose.msra.mxu0 0.0
          %2650 = vmatprep.subr.mxu0 0.0
          %2651 = vmatpush1.xpose.msra.mxu0 0.0
          %2652 = vmatprep.subr.mxu0 0.0
          %2653 = vmatpush1.xpose.msra.mxu0 0.0
          %2654 = vmatprep.subr.mxu0 0.0
          %2655 = vmatpush1.xpose.msra.mxu0 0.0
          %2656 = vmatprep.subr.mxu0 0.0
          %2657 = vmatpush1.xpose.msra.mxu0 0.0
          %2658 = vmatprep.subr.mxu0 0.0
          %2659 = vmatpush1.xpose.msra.mxu0 0.0
          %2660 = vmatprep.subr.mxu0 0.0
          %2661 = vmatpush1.xpose.msra.mxu0 0.0
          %2662 = vmatprep.subr.mxu0 0.0
          %2663 = vmatpush1.xpose.msra.mxu0 0.0
          %2664 = vmatprep.subr.mxu0 0.0
          %2665 = vmatpush1.xpose.msra.mxu0 0.0
          %2666 = vmatprep.subr.mxu0 0.0
          %2667 = vmatpush1.xpose.msra.mxu0 0.0
          %2668 = vmatprep.subr.mxu0 0.0
          %2669 = vmatpush1.xpose.msra.mxu0 0.0
          %2670 = vmatprep.subr.mxu0 0.0
          %2671 = vmatpush1.xpose.msra.mxu0 %v2638
          %2672 = vmatprep.subr.mxu0 0.0
          %2673 = vmatpush2.xpose.msra.mxu0 0.0
          %2674 = vmatprep.subr.mxu0 0.0
          %2675 = vmatpush2.xpose.msra.mxu0 0.0
          %2676 = vmatprep.subr.mxu0 0.0
          %2677 = vmatpush2.xpose.msra.mxu0 0.0
          %2678 = vmatprep.subr.mxu0 0.0
          %2679 = vmatpush2.xpose.msra.mxu0 0.0
          %2680 = vmatprep.subr.mxu0 0.0
          %2681 = vmatpush2.xpose.msra.mxu0 0.0
          %2682 = vmatprep.subr.mxu0 0.0
          %2683 = vmatpush2.xpose.msra.mxu0 0.0
          %2684 = vmatprep.subr.mxu0 0.0
          %2685 = vmatpush2.xpose.msra.mxu0 0.0
          %2686 = vmatprep.subr.mxu0 0.0
          %2687 = vmatpush2.xpose.msra.mxu0 0.0
          %2688 = vmatprep.subr.mxu0 0.0
          %2689 = vmatpush2.xpose.msra.mxu0 0.0
          %2690 = vmatprep.subr.mxu0 0.0
          %2691 = vmatpush2.xpose.msra.mxu0 0.0
          %2692 = vmatprep.subr.mxu0 0.0
          %2693 = vmatpush2.xpose.msra.mxu0 0.0
          %2694 = vmatprep.subr.mxu0 0.0
          %2695 = vmatpush2.xpose.msra.mxu0 0.0
          %2696 = vmatprep.subr.mxu0 0.0
          %2697 = vmatpush2.xpose.msra.mxu0 0.0
          %2698 = vmatprep.subr.mxu0 0.0
          %2699 = vmatpush2.xpose.msra.mxu0 0.0
          %2700 = vmatprep.subr.mxu0 0.0
          %2701 = vmatpush2.xpose.msra.mxu0 0.0
          %2702 = vmatprep.subr.mxu0 0.0
          %2703 = vmatpush2.xpose.msra.mxu0 0.0
          %2704 = vmatprep.mubr.f32.mxu0 0.0
          %2705 = vmatmul.mubr.f32.gmra.mxu0 %v2636
          %v2706 = vpop.f32.mrf.mxu0
          %v2707 = vadd.f32 0.0, %v2706
          %v2708 = vpop.f32.mrf.mxu0
          %2709 = vdwg.mxu0
          %v2710 = vsel %vm1117, 1, 0
          %v2711 = vlaneseq
          %v2712 = vshrl.u32 %v2711, 7
          %v2713 = vsub.s32 0, %v2712
          %v2714 = vrot.slane %v2710, %v2713
          %vm2715 = vcmp.eq.s32.totalorder %v2714, 1
          %v2716 = vsel %vm2715, -1e+09, %v2482
          %v2717 = vsel %vm2715, -1e+09, %v2557
          %v2718 = vsel %vm2715, -1e+09, %v2632
          %v2719 = vsel %vm2715, -1e+09, %v2707
          %v2720 = vsel %vm1238, %v2716, -inf
          %2721 = vmax.xlane.f32.xlu0 %v2720
          %v2722 = vpop.xlane.xlu0 %2721
          %v2723 = vsel %vm1238, %v2717, -inf
          %2724 = vmax.xlane.f32.xlu0 %v2723
          %v2725 = vpop.xlane.xlu0 %2724
          %v2726 = vsel %vm1238, %v2718, -inf
          %2727 = vmax.xlane.f32.xlu0 %v2726
          %v2728 = vpop.xlane.xlu0 %2727
          %v2729 = vsel %vm1238, %v2719, -inf
          %2730 = vmax.xlane.f32.xlu0 %v2729
          %v2731 = vpop.xlane.xlu0 %2730
          %v2732 = vsub.f32 %v2716, %v2722
          %v2733 = vsub.f32 %v2717, %v2725
          %v2734 = vsub.f32 %v2718, %v2728
          %v2735 = vsub.f32 %v2719, %v2731
          %v2736 = vmul.f32 %v2732, 1.442695
          %v2737 = vpow.pop %v2736
          %v2738 = vmul.f32 %v2733, 1.442695
          %v2739 = vpow.pop %v2738
          %v2740 = vmul.f32 %v2734, 1.442695
          %v2741 = vpow.pop %v2740
          %v2742 = vmul.f32 %v2735, 1.442695
          %v2743 = vpow.pop %v2742
          %v2744 = vsel %vm1238, %v2737, 0.0
          %2745 = vadd.xlane.f32.xlu0 %v2744
          %v2746 = vpop.xlane.xlu0 %2745
          %v2747 = vsel %vm1238, %v2739, 0.0
          %2748 = vadd.xlane.f32.xlu0 %v2747
          %v2749 = vpop.xlane.xlu0 %2748
          %v2750 = vsel %vm1238, %v2741, 0.0
          %2751 = vadd.xlane.f32.xlu0 %v2750
          %v2752 = vpop.xlane.xlu0 %2751
          %v2753 = vsel %vm1238, %v2743, 0.0
          %2754 = vadd.xlane.f32.xlu0 %v2753
          %v2755 = vpop.xlane.xlu0 %2754
          %v2756 = vrcp.pop %v2746
          %v2757 = vrcp.pop %v2749
          %v2758 = vrcp.pop %v2752
          %v2759 = vrcp.pop %v2755
          %v2760 = vmul.f32 %v2737, %v2756
          %v2761 = vmul.f32 %v2739, %v2757
          %v2762 = vmul.f32 %v2741, %v2758
          %v2763 = vmul.f32 %v2743, %v2759
          %v2765 = vsel %vm1238, %v2760, 0
          %2767 = vmatprep.subr.mxu0 0.0
          %2768 = vmatpush1.msra.mxu0 0.0
          %2769 = vmatprep.subr.mxu0 0.0
          %2770 = vmatpush1.msra.mxu0 0.0
          %2771 = vmatprep.subr.mxu0 0.0
          %2772 = vmatpush1.msra.mxu0 0.0
          %2773 = vmatprep.subr.mxu0 0.0
          %2774 = vmatpush1.msra.mxu0 0.0
          %2775 = vmatprep.subr.mxu0 0.0
          %2776 = vmatpush1.msra.mxu0 0.0
          %2777 = vmatprep.subr.mxu0 0.0
          %2778 = vmatpush1.msra.mxu0 0.0
          %2779 = vmatprep.subr.mxu0 0.0
          %2780 = vmatpush1.msra.mxu0 0.0
          %2781 = vmatprep.subr.mxu0 0.0
          %2782 = vmatpush1.msra.mxu0 0.0
          %2783 = vmatprep.subr.mxu0 0.0
          %2784 = vmatpush1.msra.mxu0 0.0
          %2785 = vmatprep.subr.mxu0 0.0
          %2786 = vmatpush1.msra.mxu0 0.0
          %2787 = vmatprep.subr.mxu0 0.0
          %2788 = vmatpush1.msra.mxu0 0.0
          %2789 = vmatprep.subr.mxu0 0.0
          %2790 = vmatpush1.msra.mxu0 0.0
          %2791 = vmatprep.subr.mxu0 0.0
          %2792 = vmatpush1.msra.mxu0 0.0
          %2793 = vmatprep.subr.mxu0 0.0
          %2794 = vmatpush1.msra.mxu0 0.0
          %2795 = vmatprep.subr.mxu0 0.0
          %2796 = vmatpush1.msra.mxu0 0.0
          %2797 = vmatprep.subr.mxu0 0.0
          %2798 = vmatpush1.msra.mxu0 %v2376
          %2799 = vmatprep.subr.mxu0 0.0
          %2800 = vmatpush2.msra.mxu0 0.0
          %2801 = vmatprep.subr.mxu0 0.0
          %2802 = vmatpush2.msra.mxu0 0.0
          %2803 = vmatprep.subr.mxu0 0.0
          %2804 = vmatpush2.msra.mxu0 0.0
          %2805 = vmatprep.subr.mxu0 0.0
          %2806 = vmatpush2.msra.mxu0 0.0
          %2807 = vmatprep.subr.mxu0 0.0
          %2808 = vmatpush2.msra.mxu0 0.0
          %2809 = vmatprep.subr.mxu0 0.0
          %2810 = vmatpush2.msra.mxu0 0.0
          %2811 = vmatprep.subr.mxu0 0.0
          %2812 = vmatpush2.msra.mxu0 0.0
          %2813 = vmatprep.subr.mxu0 0.0
          %2814 = vmatpush2.msra.mxu0 0.0
          %2815 = vmatprep.subr.mxu0 0.0
          %2816 = vmatpush2.msra.mxu0 0.0
          %2817 = vmatprep.subr.mxu0 0.0
          %2818 = vmatpush2.msra.mxu0 0.0
          %2819 = vmatprep.subr.mxu0 0.0
          %2820 = vmatpush2.msra.mxu0 0.0
          %2821 = vmatprep.subr.mxu0 0.0
          %2822 = vmatpush2.msra.mxu0 0.0
          %2823 = vmatprep.subr.mxu0 0.0
          %2824 = vmatpush2.msra.mxu0 0.0
          %2825 = vmatprep.subr.mxu0 0.0
          %2826 = vmatpush2.msra.mxu0 0.0
          %2827 = vmatprep.subr.mxu0 0.0
          %2828 = vmatpush2.msra.mxu0 0.0
          %2829 = vmatprep.subr.mxu0 0.0
          %2830 = vmatpush2.msra.mxu0 0.0
          %2831 = vmatprep.mubr.f32.mxu0 0.0
          %2832 = vmatmul.mubr.f32.gmra.mxu0 %v2765
          %v2833 = vpop.f32.mrf.mxu0
          %v2834 = vadd.f32 0.0, %v2833
          %v2835 = vpop.f32.mrf.mxu0
          %2836 = vdwg.mxu0
          %v2838 = vsel %vm1238, %v2761, 0
          %2840 = vmatprep.subr.mxu0 0.0
          %2841 = vmatpush1.msra.mxu0 0.0
          %2842 = vmatprep.subr.mxu0 0.0
          %2843 = vmatpush1.msra.mxu0 0.0
          %2844 = vmatprep.subr.mxu0 0.0
          %2845 = vmatpush1.msra.mxu0 0.0
          %2846 = vmatprep.subr.mxu0 0.0
          %2847 = vmatpush1.msra.mxu0 0.0
          %2848 = vmatprep.subr.mxu0 0.0
          %2849 = vmatpush1.msra.mxu0 0.0
          %2850 = vmatprep.subr.mxu0 0.0
          %2851 = vmatpush1.msra.mxu0 0.0
          %2852 = vmatprep.subr.mxu0 0.0
          %2853 = vmatpush1.msra.mxu0 0.0
          %2854 = vmatprep.subr.mxu0 0.0
          %2855 = vmatpush1.msra.mxu0 0.0
          %2856 = vmatprep.subr.mxu0 0.0
          %2857 = vmatpush1.msra.mxu0 0.0
          %2858 = vmatprep.subr.mxu0 0.0
          %2859 = vmatpush1.msra.mxu0 0.0
          %2860 = vmatprep.subr.mxu0 0.0
          %2861 = vmatpush1.msra.mxu0 0.0
          %2862 = vmatprep.subr.mxu0 0.0
          %2863 = vmatpush1.msra.mxu0 0.0
          %2864 = vmatprep.subr.mxu0 0.0
          %2865 = vmatpush1.msra.mxu0 0.0
          %2866 = vmatprep.subr.mxu0 0.0
          %2867 = vmatpush1.msra.mxu0 0.0
          %2868 = vmatprep.subr.mxu0 0.0
          %2869 = vmatpush1.msra.mxu0 0.0
          %2870 = vmatprep.subr.mxu0 0.0
          %2871 = vmatpush1.msra.mxu0 %v2395
          %2872 = vmatprep.subr.mxu0 0.0
          %2873 = vmatpush2.msra.mxu0 0.0
          %2874 = vmatprep.subr.mxu0 0.0
          %2875 = vmatpush2.msra.mxu0 0.0
          %2876 = vmatprep.subr.mxu0 0.0
          %2877 = vmatpush2.msra.mxu0 0.0
          %2878 = vmatprep.subr.mxu0 0.0
          %2879 = vmatpush2.msra.mxu0 0.0
          %2880 = vmatprep.subr.mxu0 0.0
          %2881 = vmatpush2.msra.mxu0 0.0
          %2882 = vmatprep.subr.mxu0 0.0
          %2883 = vmatpush2.msra.mxu0 0.0
          %2884 = vmatprep.subr.mxu0 0.0
          %2885 = vmatpush2.msra.mxu0 0.0
          %2886 = vmatprep.subr.mxu0 0.0
          %2887 = vmatpush2.msra.mxu0 0.0
          %2888 = vmatprep.subr.mxu0 0.0
          %2889 = vmatpush2.msra.mxu0 0.0
          %2890 = vmatprep.subr.mxu0 0.0
          %2891 = vmatpush2.msra.mxu0 0.0
          %2892 = vmatprep.subr.mxu0 0.0
          %2893 = vmatpush2.msra.mxu0 0.0
          %2894 = vmatprep.subr.mxu0 0.0
          %2895 = vmatpush2.msra.mxu0 0.0
          %2896 = vmatprep.subr.mxu0 0.0
          %2897 = vmatpush2.msra.mxu0 0.0
          %2898 = vmatprep.subr.mxu0 0.0
          %2899 = vmatpush2.msra.mxu0 0.0
          %2900 = vmatprep.subr.mxu0 0.0
          %2901 = vmatpush2.msra.mxu0 0.0
          %2902 = vmatprep.subr.mxu0 0.0
          %2903 = vmatpush2.msra.mxu0 0.0
          %2904 = vmatprep.mubr.f32.mxu0 0.0
          %2905 = vmatmul.mubr.f32.gmra.mxu0 %v2838
          %v2906 = vpop.f32.mrf.mxu0
          %v2907 = vadd.f32 0.0, %v2906
          %v2908 = vpop.f32.mrf.mxu0
          %2909 = vdwg.mxu0
          %v2911 = vsel %vm1238, %v2762, 0
          %2913 = vmatprep.subr.mxu0 0.0
          %2914 = vmatpush1.msra.mxu0 0.0
          %2915 = vmatprep.subr.mxu0 0.0
          %2916 = vmatpush1.msra.mxu0 0.0
          %2917 = vmatprep.subr.mxu0 0.0
          %2918 = vmatpush1.msra.mxu0 0.0
          %2919 = vmatprep.subr.mxu0 0.0
          %2920 = vmatpush1.msra.mxu0 0.0
          %2921 = vmatprep.subr.mxu0 0.0
          %2922 = vmatpush1.msra.mxu0 0.0
          %2923 = vmatprep.subr.mxu0 0.0
          %2924 = vmatpush1.msra.mxu0 0.0
          %2925 = vmatprep.subr.mxu0 0.0
          %2926 = vmatpush1.msra.mxu0 0.0
          %2927 = vmatprep.subr.mxu0 0.0
          %2928 = vmatpush1.msra.mxu0 0.0
          %2929 = vmatprep.subr.mxu0 0.0
          %2930 = vmatpush1.msra.mxu0 0.0
          %2931 = vmatprep.subr.mxu0 0.0
          %2932 = vmatpush1.msra.mxu0 0.0
          %2933 = vmatprep.subr.mxu0 0.0
          %2934 = vmatpush1.msra.mxu0 0.0
          %2935 = vmatprep.subr.mxu0 0.0
          %2936 = vmatpush1.msra.mxu0 0.0
          %2937 = vmatprep.subr.mxu0 0.0
          %2938 = vmatpush1.msra.mxu0 0.0
          %2939 = vmatprep.subr.mxu0 0.0
          %2940 = vmatpush1.msra.mxu0 0.0
          %2941 = vmatprep.subr.mxu0 0.0
          %2942 = vmatpush1.msra.mxu0 0.0
          %2943 = vmatprep.subr.mxu0 0.0
          %2944 = vmatpush1.msra.mxu0 %v2398
          %2945 = vmatprep.subr.mxu0 0.0
          %2946 = vmatpush2.msra.mxu0 0.0
          %2947 = vmatprep.subr.mxu0 0.0
          %2948 = vmatpush2.msra.mxu0 0.0
          %2949 = vmatprep.subr.mxu0 0.0
          %2950 = vmatpush2.msra.mxu0 0.0
          %2951 = vmatprep.subr.mxu0 0.0
          %2952 = vmatpush2.msra.mxu0 0.0
          %2953 = vmatprep.subr.mxu0 0.0
          %2954 = vmatpush2.msra.mxu0 0.0
          %2955 = vmatprep.subr.mxu0 0.0
          %2956 = vmatpush2.msra.mxu0 0.0
          %2957 = vmatprep.subr.mxu0 0.0
          %2958 = vmatpush2.msra.mxu0 0.0
          %2959 = vmatprep.subr.mxu0 0.0
          %2960 = vmatpush2.msra.mxu0 0.0
          %2961 = vmatprep.subr.mxu0 0.0
          %2962 = vmatpush2.msra.mxu0 0.0
          %2963 = vmatprep.subr.mxu0 0.0
          %2964 = vmatpush2.msra.mxu0 0.0
          %2965 = vmatprep.subr.mxu0 0.0
          %2966 = vmatpush2.msra.mxu0 0.0
          %2967 = vmatprep.subr.mxu0 0.0
          %2968 = vmatpush2.msra.mxu0 0.0
          %2969 = vmatprep.subr.mxu0 0.0
          %2970 = vmatpush2.msra.mxu0 0.0
          %2971 = vmatprep.subr.mxu0 0.0
          %2972 = vmatpush2.msra.mxu0 0.0
          %2973 = vmatprep.subr.mxu0 0.0
          %2974 = vmatpush2.msra.mxu0 0.0
          %2975 = vmatprep.subr.mxu0 0.0
          %2976 = vmatpush2.msra.mxu0 0.0
          %2977 = vmatprep.mubr.f32.mxu0 0.0
          %2978 = vmatmul.mubr.f32.gmra.mxu0 %v2911
          %v2979 = vpop.f32.mrf.mxu0
          %v2980 = vadd.f32 0.0, %v2979
          %v2981 = vpop.f32.mrf.mxu0
          %2982 = vdwg.mxu0
          %v2984 = vsel %vm1238, %v2763, 0
          %2986 = vmatprep.subr.mxu0 0.0
          %2987 = vmatpush1.msra.mxu0 0.0
          %2988 = vmatprep.subr.mxu0 0.0
          %2989 = vmatpush1.msra.mxu0 0.0
          %2990 = vmatprep.subr.mxu0 0.0
          %2991 = vmatpush1.msra.mxu0 0.0
          %2992 = vmatprep.subr.mxu0 0.0
          %2993 = vmatpush1.msra.mxu0 0.0
          %2994 = vmatprep.subr.mxu0 0.0
          %2995 = vmatpush1.msra.mxu0 0.0
          %2996 = vmatprep.subr.mxu0 0.0
          %2997 = vmatpush1.msra.mxu0 0.0
          %2998 = vmatprep.subr.mxu0 0.0
          %2999 = vmatpush1.msra.mxu0 0.0
          %3000 = vmatprep.subr.mxu0 0.0
          %3001 = vmatpush1.msra.mxu0 0.0
          %3002 = vmatprep.subr.mxu0 0.0
          %3003 = vmatpush1.msra.mxu0 0.0
          %3004 = vmatprep.subr.mxu0 0.0
          %3005 = vmatpush1.msra.mxu0 0.0
          %3006 = vmatprep.subr.mxu0 0.0
          %3007 = vmatpush1.msra.mxu0 0.0
          %3008 = vmatprep.subr.mxu0 0.0
          %3009 = vmatpush1.msra.mxu0 0.0
          %3010 = vmatprep.subr.mxu0 0.0
          %3011 = vmatpush1.msra.mxu0 0.0
          %3012 = vmatprep.subr.mxu0 0.0
          %3013 = vmatpush1.msra.mxu0 0.0
          %3014 = vmatprep.subr.mxu0 0.0
          %3015 = vmatpush1.msra.mxu0 0.0
          %3016 = vmatprep.subr.mxu0 0.0
          %3017 = vmatpush1.msra.mxu0 %v2401
          %3018 = vmatprep.subr.mxu0 0.0
          %3019 = vmatpush2.msra.mxu0 0.0
          %3020 = vmatprep.subr.mxu0 0.0
          %3021 = vmatpush2.msra.mxu0 0.0
          %3022 = vmatprep.subr.mxu0 0.0
          %3023 = vmatpush2.msra.mxu0 0.0
          %3024 = vmatprep.subr.mxu0 0.0
          %3025 = vmatpush2.msra.mxu0 0.0
          %3026 = vmatprep.subr.mxu0 0.0
          %3027 = vmatpush2.msra.mxu0 0.0
          %3028 = vmatprep.subr.mxu0 0.0
          %3029 = vmatpush2.msra.mxu0 0.0
          %3030 = vmatprep.subr.mxu0 0.0
          %3031 = vmatpush2.msra.mxu0 0.0
          %3032 = vmatprep.subr.mxu0 0.0
          %3033 = vmatpush2.msra.mxu0 0.0
          %3034 = vmatprep.subr.mxu0 0.0
          %3035 = vmatpush2.msra.mxu0 0.0
          %3036 = vmatprep.subr.mxu0 0.0
          %3037 = vmatpush2.msra.mxu0 0.0
          %3038 = vmatprep.subr.mxu0 0.0
          %3039 = vmatpush2.msra.mxu0 0.0
          %3040 = vmatprep.subr.mxu0 0.0
          %3041 = vmatpush2.msra.mxu0 0.0
          %3042 = vmatprep.subr.mxu0 0.0
          %3043 = vmatpush2.msra.mxu0 0.0
          %3044 = vmatprep.subr.mxu0 0.0
          %3045 = vmatpush2.msra.mxu0 0.0
          %3046 = vmatprep.subr.mxu0 0.0
          %3047 = vmatpush2.msra.mxu0 0.0
          %3048 = vmatprep.subr.mxu0 0.0
          %3049 = vmatpush2.msra.mxu0 0.0
          %3050 = vmatprep.mubr.f32.mxu0 0.0
          %3051 = vmatmul.mubr.f32.gmra.mxu0 %v2984
          %v3052 = vpop.f32.mrf.mxu0
          %v3053 = vadd.f32 0.0, %v3052
          %v3054 = vpop.f32.mrf.mxu0
          %3055 = vdwg.mxu0
          %v3057 = vsel %vm1238, %v2834, 0
          %3059 = vmatprep.subr.mxu0 0.0
          %3060 = vmatpush1.msra.mxu0 0.0
          %3061 = vmatprep.subr.mxu0 0.0
          %3062 = vmatpush1.msra.mxu0 0.0
          %3063 = vmatprep.subr.mxu0 0.0
          %3064 = vmatpush1.msra.mxu0 0.0
          %3065 = vmatprep.subr.mxu0 0.0
          %3066 = vmatpush1.msra.mxu0 0.0
          %3067 = vmatprep.subr.mxu0 0.0
          %3068 = vmatpush1.msra.mxu0 0.0
          %3069 = vmatprep.subr.mxu0 0.0
          %3070 = vmatpush1.msra.mxu0 0.0
          %3071 = vmatprep.subr.mxu0 0.0
          %3072 = vmatpush1.msra.mxu0 0.0
          %3073 = vmatprep.subr.mxu0 0.0
          %3074 = vmatpush1.msra.mxu0 0.0
          %3075 = vmatprep.subr.mxu0 0.0
          %3076 = vmatpush1.msra.mxu0 0.0
          %3077 = vmatprep.subr.mxu0 0.0
          %3078 = vmatpush1.msra.mxu0 0.0
          %3079 = vmatprep.subr.mxu0 0.0
          %3080 = vmatpush1.msra.mxu0 0.0
          %3081 = vmatprep.subr.mxu0 0.0
          %3082 = vmatpush1.msra.mxu0 0.0
          %3083 = vmatprep.subr.mxu0 0.0
          %3084 = vmatpush1.msra.mxu0 0.0
          %3085 = vmatprep.subr.mxu0 0.0
          %3086 = vmatpush1.msra.mxu0 0.0
          %3087 = vmatprep.subr.mxu0 0.0
          %3088 = vmatpush1.msra.mxu0 0.0
          %3089 = vmatprep.subr.mxu0 0.0
          %3090 = vmatpush1.msra.mxu0 %v2404
          %3091 = vmatprep.subr.mxu0 0.0
          %3092 = vmatpush2.msra.mxu0 0.0
          %3093 = vmatprep.subr.mxu0 0.0
          %3094 = vmatpush2.msra.mxu0 0.0
          %3095 = vmatprep.subr.mxu0 0.0
          %3096 = vmatpush2.msra.mxu0 0.0
          %3097 = vmatprep.subr.mxu0 0.0
          %3098 = vmatpush2.msra.mxu0 0.0
          %3099 = vmatprep.subr.mxu0 0.0
          %3100 = vmatpush2.msra.mxu0 0.0
          %3101 = vmatprep.subr.mxu0 0.0
          %3102 = vmatpush2.msra.mxu0 0.0
          %3103 = vmatprep.subr.mxu0 0.0
          %3104 = vmatpush2.msra.mxu0 0.0
          %3105 = vmatprep.subr.mxu0 0.0
          %3106 = vmatpush2.msra.mxu0 0.0
          %3107 = vmatprep.subr.mxu0 0.0
          %3108 = vmatpush2.msra.mxu0 0.0
          %3109 = vmatprep.subr.mxu0 0.0
          %3110 = vmatpush2.msra.mxu0 0.0
          %3111 = vmatprep.subr.mxu0 0.0
          %3112 = vmatpush2.msra.mxu0 0.0
          %3113 = vmatprep.subr.mxu0 0.0
          %3114 = vmatpush2.msra.mxu0 0.0
          %3115 = vmatprep.subr.mxu0 0.0
          %3116 = vmatpush2.msra.mxu0 0.0
          %3117 = vmatprep.subr.mxu0 0.0
          %3118 = vmatpush2.msra.mxu0 0.0
          %3119 = vmatprep.subr.mxu0 0.0
          %3120 = vmatpush2.msra.mxu0 0.0
          %3121 = vmatprep.subr.mxu0 0.0
          %3122 = vmatpush2.msra.mxu0 0.0
          %3123 = vmatprep.mubr.f32.mxu0 0.0
          %3124 = vmatmul.mubr.f32.gmra.mxu0 %v3057
          %v3125 = vpop.f32.mrf.mxu0
          %v3126 = vadd.f32 0.0, %v3125
          %v3127 = vpop.f32.mrf.mxu0
          %3128 = vdwg.mxu0
          %v3130 = vsel %vm1238, %v2907, 0
          %3132 = vmatprep.subr.mxu0 0.0
          %3133 = vmatpush1.msra.mxu0 0.0
          %3134 = vmatprep.subr.mxu0 0.0
          %3135 = vmatpush1.msra.mxu0 0.0
          %3136 = vmatprep.subr.mxu0 0.0
          %3137 = vmatpush1.msra.mxu0 0.0
          %3138 = vmatprep.subr.mxu0 0.0
          %3139 = vmatpush1.msra.mxu0 0.0
          %3140 = vmatprep.subr.mxu0 0.0
          %3141 = vmatpush1.msra.mxu0 0.0
          %3142 = vmatprep.subr.mxu0 0.0
          %3143 = vmatpush1.msra.mxu0 0.0
          %3144 = vmatprep.subr.mxu0 0.0
          %3145 = vmatpush1.msra.mxu0 0.0
          %3146 = vmatprep.subr.mxu0 0.0
          %3147 = vmatpush1.msra.mxu0 0.0
          %3148 = vmatprep.subr.mxu0 0.0
          %3149 = vmatpush1.msra.mxu0 0.0
          %3150 = vmatprep.subr.mxu0 0.0
          %3151 = vmatpush1.msra.mxu0 0.0
          %3152 = vmatprep.subr.mxu0 0.0
          %3153 = vmatpush1.msra.mxu0 0.0
          %3154 = vmatprep.subr.mxu0 0.0
          %3155 = vmatpush1.msra.mxu0 0.0
          %3156 = vmatprep.subr.mxu0 0.0
          %3157 = vmatpush1.msra.mxu0 0.0
          %3158 = vmatprep.subr.mxu0 0.0
          %3159 = vmatpush1.msra.mxu0 0.0
          %3160 = vmatprep.subr.mxu0 0.0
          %3161 = vmatpush1.msra.mxu0 0.0
          %3162 = vmatprep.subr.mxu0 0.0
          %3163 = vmatpush1.msra.mxu0 %v2405
          %3164 = vmatprep.subr.mxu0 0.0
          %3165 = vmatpush2.msra.mxu0 0.0
          %3166 = vmatprep.subr.mxu0 0.0
          %3167 = vmatpush2.msra.mxu0 0.0
          %3168 = vmatprep.subr.mxu0 0.0
          %3169 = vmatpush2.msra.mxu0 0.0
          %3170 = vmatprep.subr.mxu0 0.0
          %3171 = vmatpush2.msra.mxu0 0.0
          %3172 = vmatprep.subr.mxu0 0.0
          %3173 = vmatpush2.msra.mxu0 0.0
          %3174 = vmatprep.subr.mxu0 0.0
          %3175 = vmatpush2.msra.mxu0 0.0
          %3176 = vmatprep.subr.mxu0 0.0
          %3177 = vmatpush2.msra.mxu0 0.0
          %3178 = vmatprep.subr.mxu0 0.0
          %3179 = vmatpush2.msra.mxu0 0.0
          %3180 = vmatprep.subr.mxu0 0.0
          %3181 = vmatpush2.msra.mxu0 0.0
          %3182 = vmatprep.subr.mxu0 0.0
          %3183 = vmatpush2.msra.mxu0 0.0
          %3184 = vmatprep.subr.mxu0 0.0
          %3185 = vmatpush2.msra.mxu0 0.0
          %3186 = vmatprep.subr.mxu0 0.0
          %3187 = vmatpush2.msra.mxu0 0.0
          %3188 = vmatprep.subr.mxu0 0.0
          %3189 = vmatpush2.msra.mxu0 0.0
          %3190 = vmatprep.subr.mxu0 0.0
          %3191 = vmatpush2.msra.mxu0 0.0
          %3192 = vmatprep.subr.mxu0 0.0
          %3193 = vmatpush2.msra.mxu0 0.0
          %3194 = vmatprep.subr.mxu0 0.0
          %3195 = vmatpush2.msra.mxu0 0.0
          %3196 = vmatprep.mubr.f32.mxu0 0.0
          %3197 = vmatmul.mubr.f32.gmra.mxu0 %v3130
          %v3198 = vpop.f32.mrf.mxu0
          %v3199 = vadd.f32 0.0, %v3198
          %v3200 = vpop.f32.mrf.mxu0
          %3201 = vdwg.mxu0
          %v3203 = vsel %vm1238, %v2980, 0
          %3205 = vmatprep.subr.mxu0 0.0
          %3206 = vmatpush1.msra.mxu0 0.0
          %3207 = vmatprep.subr.mxu0 0.0
          %3208 = vmatpush1.msra.mxu0 0.0
          %3209 = vmatprep.subr.mxu0 0.0
          %3210 = vmatpush1.msra.mxu0 0.0
          %3211 = vmatprep.subr.mxu0 0.0
          %3212 = vmatpush1.msra.mxu0 0.0
          %3213 = vmatprep.subr.mxu0 0.0
          %3214 = vmatpush1.msra.mxu0 0.0
          %3215 = vmatprep.subr.mxu0 0.0
          %3216 = vmatpush1.msra.mxu0 0.0
          %3217 = vmatprep.subr.mxu0 0.0
          %3218 = vmatpush1.msra.mxu0 0.0
          %3219 = vmatprep.subr.mxu0 0.0
          %3220 = vmatpush1.msra.mxu0 0.0
          %3221 = vmatprep.subr.mxu0 0.0
          %3222 = vmatpush1.msra.mxu0 0.0
          %3223 = vmatprep.subr.mxu0 0.0
          %3224 = vmatpush1.msra.mxu0 0.0
          %3225 = vmatprep.subr.mxu0 0.0
          %3226 = vmatpush1.msra.mxu0 0.0
          %3227 = vmatprep.subr.mxu0 0.0
          %3228 = vmatpush1.msra.mxu0 0.0
          %3229 = vmatprep.subr.mxu0 0.0
          %3230 = vmatpush1.msra.mxu0 0.0
          %3231 = vmatprep.subr.mxu0 0.0
          %3232 = vmatpush1.msra.mxu0 0.0
          %3233 = vmatprep.subr.mxu0 0.0
          %3234 = vmatpush1.msra.mxu0 0.0
          %3235 = vmatprep.subr.mxu0 0.0
          %3236 = vmatpush1.msra.mxu0 %v2406
          %3237 = vmatprep.subr.mxu0 0.0
          %3238 = vmatpush2.msra.mxu0 0.0
          %3239 = vmatprep.subr.mxu0 0.0
          %3240 = vmatpush2.msra.mxu0 0.0
          %3241 = vmatprep.subr.mxu0 0.0
          %3242 = vmatpush2.msra.mxu0 0.0
          %3243 = vmatprep.subr.mxu0 0.0
          %3244 = vmatpush2.msra.mxu0 0.0
          %3245 = vmatprep.subr.mxu0 0.0
          %3246 = vmatpush2.msra.mxu0 0.0
          %3247 = vmatprep.subr.mxu0 0.0
          %3248 = vmatpush2.msra.mxu0 0.0
          %3249 = vmatprep.subr.mxu0 0.0
          %3250 = vmatpush2.msra.mxu0 0.0
          %3251 = vmatprep.subr.mxu0 0.0
          %3252 = vmatpush2.msra.mxu0 0.0
          %3253 = vmatprep.subr.mxu0 0.0
          %3254 = vmatpush2.msra.mxu0 0.0
          %3255 = vmatprep.subr.mxu0 0.0
          %3256 = vmatpush2.msra.mxu0 0.0
          %3257 = vmatprep.subr.mxu0 0.0
          %3258 = vmatpush2.msra.mxu0 0.0
          %3259 = vmatprep.subr.mxu0 0.0
          %3260 = vmatpush2.msra.mxu0 0.0
          %3261 = vmatprep.subr.mxu0 0.0
          %3262 = vmatpush2.msra.mxu0 0.0
          %3263 = vmatprep.subr.mxu0 0.0
          %3264 = vmatpush2.msra.mxu0 0.0
          %3265 = vmatprep.subr.mxu0 0.0
          %3266 = vmatpush2.msra.mxu0 0.0
          %3267 = vmatprep.subr.mxu0 0.0
          %3268 = vmatpush2.msra.mxu0 0.0
          %3269 = vmatprep.mubr.f32.mxu0 0.0
          %3270 = vmatmul.mubr.f32.gmra.mxu0 %v3203
          %v3271 = vpop.f32.mrf.mxu0
          %v3272 = vadd.f32 0.0, %v3271
          %v3273 = vpop.f32.mrf.mxu0
          %3274 = vdwg.mxu0
          %v3276 = vsel %vm1238, %v3053, 0
          %3278 = vmatprep.subr.mxu0 0.0
          %3279 = vmatpush1.msra.mxu0 0.0
          %3280 = vmatprep.subr.mxu0 0.0
          %3281 = vmatpush1.msra.mxu0 0.0
          %3282 = vmatprep.subr.mxu0 0.0
          %3283 = vmatpush1.msra.mxu0 0.0
          %3284 = vmatprep.subr.mxu0 0.0
          %3285 = vmatpush1.msra.mxu0 0.0
          %3286 = vmatprep.subr.mxu0 0.0
          %3287 = vmatpush1.msra.mxu0 0.0
          %3288 = vmatprep.subr.mxu0 0.0
          %3289 = vmatpush1.msra.mxu0 0.0
          %3290 = vmatprep.subr.mxu0 0.0
          %3291 = vmatpush1.msra.mxu0 0.0
          %3292 = vmatprep.subr.mxu0 0.0
          %3293 = vmatpush1.msra.mxu0 0.0
          %3294 = vmatprep.subr.mxu0 0.0
          %3295 = vmatpush1.msra.mxu0 0.0
          %3296 = vmatprep.subr.mxu0 0.0
          %3297 = vmatpush1.msra.mxu0 0.0
          %3298 = vmatprep.subr.mxu0 0.0
          %3299 = vmatpush1.msra.mxu0 0.0
          %3300 = vmatprep.subr.mxu0 0.0
          %3301 = vmatpush1.msra.mxu0 0.0
          %3302 = vmatprep.subr.mxu0 0.0
          %3303 = vmatpush1.msra.mxu0 0.0
          %3304 = vmatprep.subr.mxu0 0.0
          %3305 = vmatpush1.msra.mxu0 0.0
          %3306 = vmatprep.subr.mxu0 0.0
          %3307 = vmatpush1.msra.mxu0 0.0
          %3308 = vmatprep.subr.mxu0 0.0
          %3309 = vmatpush1.msra.mxu0 %v2407
          %3310 = vmatprep.subr.mxu0 0.0
          %3311 = vmatpush2.msra.mxu0 0.0
          %3312 = vmatprep.subr.mxu0 0.0
          %3313 = vmatpush2.msra.mxu0 0.0
          %3314 = vmatprep.subr.mxu0 0.0
          %3315 = vmatpush2.msra.mxu0 0.0
          %3316 = vmatprep.subr.mxu0 0.0
          %3317 = vmatpush2.msra.mxu0 0.0
          %3318 = vmatprep.subr.mxu0 0.0
          %3319 = vmatpush2.msra.mxu0 0.0
          %3320 = vmatprep.subr.mxu0 0.0
          %3321 = vmatpush2.msra.mxu0 0.0
          %3322 = vmatprep.subr.mxu0 0.0
          %3323 = vmatpush2.msra.mxu0 0.0
          %3324 = vmatprep.subr.mxu0 0.0
          %3325 = vmatpush2.msra.mxu0 0.0
          %3326 = vmatprep.subr.mxu0 0.0
          %3327 = vmatpush2.msra.mxu0 0.0
          %3328 = vmatprep.subr.mxu0 0.0
          %3329 = vmatpush2.msra.mxu0 0.0
          %3330 = vmatprep.subr.mxu0 0.0
          %3331 = vmatpush2.msra.mxu0 0.0
          %3332 = vmatprep.subr.mxu0 0.0
          %3333 = vmatpush2.msra.mxu0 0.0
          %3334 = vmatprep.subr.mxu0 0.0
          %3335 = vmatpush2.msra.mxu0 0.0
          %3336 = vmatprep.subr.mxu0 0.0
          %3337 = vmatpush2.msra.mxu0 0.0
          %3338 = vmatprep.subr.mxu0 0.0
          %3339 = vmatpush2.msra.mxu0 0.0
          %3340 = vmatprep.subr.mxu0 0.0
          %3341 = vmatpush2.msra.mxu0 0.0
          %3342 = vmatprep.mubr.f32.mxu0 0.0
          %3343 = vmatmul.mubr.f32.gmra.mxu0 %v3276
          %v3344 = vpop.f32.mrf.mxu0
          %v3345 = vadd.f32 0.0, %v3344
          %v3346 = vpop.f32.mrf.mxu0
          %3347 = vdwg.mxu0
          %v3348 = vsel %vm1143, %v3126, 0.0
          %v3349 = vsel %vm1143, %v3199, 0.0
          %v3350 = vadd.f32 %v3348, %v3349
          %v3351 = vsel %vm1143, %v3272, 0.0
          %v3352 = vadd.f32 %v3350, %v3351
          %v3353 = vsel %vm1143, %v3345, 0.0
          %v3354 = vadd.f32 %v3352, %v3353
          %v3356 = vlaneseq
          %v3357 = vshrl.u32 %v3356, 7
          %v3358 = vsub.s32 0, %v3357
          %v3359 = vrot.slane %v2409, %v3358
          %v3361 = vadd.f32 %v3354, %v3359
          %v3362 = vadd.f32 %v2219, %v3361
          %s3363 = scalar_lea.vmem [#allocation22], %s1119
          %v3364 = vld [vmem:[%s3363] sm:$0x1]
          %s3365 = scalar_lea.vmem [#allocation23], %s1119
          %v3366 = vld [vmem:[%s3365] sm:$0x1]
          %v3367 = vsel %vm1143, %v3362, 0.0
          %3368 = vadd.xlane.f32.xlu0 %v3367
          %v3369 = vpop.xlane.xlu0 %3368
          %v3370 = vmul.f32 %v3369, %v2195
          %v3371 = vsub.f32 %v3362, %v3370
          %v3372 = vmul.f32 %v3371, %v3371
          %v3373 = vsel %vm1143, %v3372, 0.0
          %3374 = vadd.xlane.f32.xlu0 %v3373
          %v3375 = vpop.xlane.xlu0 %3374
          %v3376 = vmul.f32 %v3375, %v2195
          %v3377 = vadd.f32 %v3376, 1e-05
          %v3378 = vrsqrt.pop %v3377
          %v3379 = vmul.f32 %v3371, %v3378
          %v3381 = vlaneseq
          %v3382 = vshrl.u32 %v3381, 7
          %v3383 = vsub.s32 0, %v3382
          %v3384 = vrot.slane %v3364, %v3383
          %v3386 = vmul.f32 %v3379, %v3384
          %v3388 = vlaneseq
          %v3389 = vshrl.u32 %v3388, 7
          %v3390 = vsub.s32 0, %v3389
          %v3391 = vrot.slane %v3366, %v3390
          %v3393 = vadd.f32 %v3386, %v3391
          %s3394 = scalar_lea.vmem [#allocation28], %s1129
          %v3395 = vld [vmem:[%s3394] sm:$0xff]
          %v3396 = vld [vmem:[%s3394 + $0x8] sm:$0xff]
          %v3397 = vld [vmem:[%s3394 + $0x10] sm:$0xff]
          %v3398 = vld [vmem:[%s3394 + $0x18] sm:$0xff]
          %s3399 = scalar_lea.vmem %s20, %s1119
          %v3400 = vld [vmem:[%s3399] sm:$0x1]
          %s3401 = smul.u32 %s1119, 64
          %s3402 = scalar_lea.vmem %s21, %s3401
          %v3403 = vld [vmem:[%s3402] sm:$0xff]
          %v3404 = vld [vmem:[%s3402 + $0x8] sm:$0xff]
          %v3405 = vld [vmem:[%s3402 + $0x10] sm:$0xff]
          %v3406 = vld [vmem:[%s3402 + $0x18] sm:$0xff]
          %v3407 = vld [vmem:[%s3402 + $0x20] sm:$0xff]
          %v3408 = vld [vmem:[%s3402 + $0x28] sm:$0xff]
          %v3409 = vld [vmem:[%s3402 + $0x30] sm:$0xff]
          %v3410 = vld [vmem:[%s3402 + $0x38] sm:$0xff]
          %s3411 = scalar_lea.vmem %s22, %s1119
          %v3412 = vld [vmem:[%s3411] sm:$0x1]
          %v3414 = vlaneseq
          %v3415 = vshrl.u32 %v3414, 7
          %v3416 = vsub.s32 0, %v3415
          %v3417 = vrot.slane %v3400, %v3416
          %v3420 = vsel %vm1143, %v3393, 0
          %3422 = vmatprep.subr.mxu0 0.0
          %3423 = vmatpush1.msra.mxu0 0.0
          %3424 = vmatprep.subr.mxu0 0.0
          %3425 = vmatpush1.msra.mxu0 0.0
          %3426 = vmatprep.subr.mxu0 0.0
          %3427 = vmatpush1.msra.mxu0 0.0
          %3428 = vmatprep.subr.mxu0 0.0
          %3429 = vmatpush1.msra.mxu0 0.0
          %3430 = vmatprep.subr.mxu0 0.0
          %3431 = vmatpush1.msra.mxu0 0.0
          %3432 = vmatprep.subr.mxu0 0.0
          %3433 = vmatpush1.msra.mxu0 0.0
          %3434 = vmatprep.subr.mxu0 0.0
          %3435 = vmatpush1.msra.mxu0 0.0
          %3436 = vmatprep.subr.mxu0 0.0
          %3437 = vmatpush1.msra.mxu0 0.0
          %3438 = vmatprep.subr.mxu0 0.0
          %3439 = vmatpush1.msra.mxu0 0.0
          %3440 = vmatprep.subr.mxu0 0.0
          %3441 = vmatpush1.msra.mxu0 0.0
          %3442 = vmatprep.subr.mxu0 0.0
          %3443 = vmatpush1.msra.mxu0 0.0
          %3444 = vmatprep.subr.mxu0 0.0
          %3445 = vmatpush1.msra.mxu0 0.0
          %3446 = vmatprep.subr.mxu0 0.0
          %3447 = vmatpush1.msra.mxu0 %v3398
          %3448 = vmatprep.subr.mxu0 0.0
          %3449 = vmatpush1.msra.mxu0 %v3397
          %3450 = vmatprep.subr.mxu0 0.0
          %3451 = vmatpush1.msra.mxu0 %v3396
          %3452 = vmatprep.subr.mxu0 0.0
          %3453 = vmatpush1.msra.mxu0 %v3395
          %3454 = vmatprep.subr.mxu0 0.0
          %3455 = vmatpush2.msra.mxu0 0.0
          %3456 = vmatprep.subr.mxu0 0.0
          %3457 = vmatpush2.msra.mxu0 0.0
          %3458 = vmatprep.subr.mxu0 0.0
          %3459 = vmatpush2.msra.mxu0 0.0
          %3460 = vmatprep.subr.mxu0 0.0
          %3461 = vmatpush2.msra.mxu0 0.0
          %3462 = vmatprep.subr.mxu0 0.0
          %3463 = vmatpush2.msra.mxu0 0.0
          %3464 = vmatprep.subr.mxu0 0.0
          %3465 = vmatpush2.msra.mxu0 0.0
          %3466 = vmatprep.subr.mxu0 0.0
          %3467 = vmatpush2.msra.mxu0 0.0
          %3468 = vmatprep.subr.mxu0 0.0
          %3469 = vmatpush2.msra.mxu0 0.0
          %3470 = vmatprep.subr.mxu0 0.0
          %3471 = vmatpush2.msra.mxu0 0.0
          %3472 = vmatprep.subr.mxu0 0.0
          %3473 = vmatpush2.msra.mxu0 0.0
          %3474 = vmatprep.subr.mxu0 0.0
          %3475 = vmatpush2.msra.mxu0 0.0
          %3476 = vmatprep.subr.mxu0 0.0
          %3477 = vmatpush2.msra.mxu0 0.0
          %3478 = vmatprep.subr.mxu0 0.0
          %3479 = vmatpush2.msra.mxu0 0.0
          %3480 = vmatprep.subr.mxu0 0.0
          %3481 = vmatpush2.msra.mxu0 0.0
          %3482 = vmatprep.subr.mxu0 0.0
          %3483 = vmatpush2.msra.mxu0 0.0
          %3484 = vmatprep.subr.mxu0 0.0
          %3485 = vmatpush2.msra.mxu0 0.0
          %3486 = vmatprep.mubr.f32.mxu0 0.0
          %3487 = vmatmul.mubr.f32.gmra.mxu0 %v3420
          %v3488 = vpop.f32.mrf.mxu0
          %v3489 = vadd.f32 %v3417, %v3488
          %v3490 = vpop.f32.mrf.mxu0
          %3491 = vdwg.mxu0
          %v3492 = vmax.f32 %v3489, 0.0
          %v3494 = vlaneseq
          %v3495 = vshrl.u32 %v3494, 7
          %v3496 = vsub.s32 0, %v3495
          %v3497 = vrot.slane %v3412, %v3496
          %vm3499 = vcmask 523264
          %v3501 = vsel %vm3499, %v3492, 0
          %3503 = vmatprep.subr.mxu0 0.0
          %3504 = vmatpush1.msra.mxu0 0.0
          %3505 = vmatprep.subr.mxu0 0.0
          %3506 = vmatpush1.msra.mxu0 0.0
          %3507 = vmatprep.subr.mxu0 0.0
          %3508 = vmatpush1.msra.mxu0 0.0
          %3509 = vmatprep.subr.mxu0 0.0
          %3510 = vmatpush1.msra.mxu0 0.0
          %3511 = vmatprep.subr.mxu0 0.0
          %3512 = vmatpush1.msra.mxu0 0.0
          %3513 = vmatprep.subr.mxu0 0.0
          %3514 = vmatpush1.msra.mxu0 0.0
          %3515 = vmatprep.subr.mxu0 0.0
          %3516 = vmatpush1.msra.mxu0 0.0
          %3517 = vmatprep.subr.mxu0 0.0
          %3518 = vmatpush1.msra.mxu0 0.0
          %3519 = vmatprep.subr.mxu0 0.0
          %3520 = vmatpush1.msra.mxu0 %v3410
          %3521 = vmatprep.subr.mxu0 0.0
          %3522 = vmatpush1.msra.mxu0 %v3409
          %3523 = vmatprep.subr.mxu0 0.0
          %3524 = vmatpush1.msra.mxu0 %v3408
          %3525 = vmatprep.subr.mxu0 0.0
          %3526 = vmatpush1.msra.mxu0 %v3407
          %3527 = vmatprep.subr.mxu0 0.0
          %3528 = vmatpush1.msra.mxu0 %v3406
          %3529 = vmatprep.subr.mxu0 0.0
          %3530 = vmatpush1.msra.mxu0 %v3405
          %3531 = vmatprep.subr.mxu0 0.0
          %3532 = vmatpush1.msra.mxu0 %v3404
          %3533 = vmatprep.subr.mxu0 0.0
          %3534 = vmatpush1.msra.mxu0 %v3403
          %3535 = vmatprep.subr.mxu0 0.0
          %3536 = vmatpush2.msra.mxu0 0.0
          %3537 = vmatprep.subr.mxu0 0.0
          %3538 = vmatpush2.msra.mxu0 0.0
          %3539 = vmatprep.subr.mxu0 0.0
          %3540 = vmatpush2.msra.mxu0 0.0
          %3541 = vmatprep.subr.mxu0 0.0
          %3542 = vmatpush2.msra.mxu0 0.0
          %3543 = vmatprep.subr.mxu0 0.0
          %3544 = vmatpush2.msra.mxu0 0.0
          %3545 = vmatprep.subr.mxu0 0.0
          %3546 = vmatpush2.msra.mxu0 0.0
          %3547 = vmatprep.subr.mxu0 0.0
          %3548 = vmatpush2.msra.mxu0 0.0
          %3549 = vmatprep.subr.mxu0 0.0
          %3550 = vmatpush2.msra.mxu0 0.0
          %3551 = vmatprep.subr.mxu0 0.0
          %3552 = vmatpush2.msra.mxu0 0.0
          %3553 = vmatprep.subr.mxu0 0.0
          %3554 = vmatpush2.msra.mxu0 0.0
          %3555 = vmatprep.subr.mxu0 0.0
          %3556 = vmatpush2.msra.mxu0 0.0
          %3557 = vmatprep.subr.mxu0 0.0
          %3558 = vmatpush2.msra.mxu0 0.0
          %3559 = vmatprep.subr.mxu0 0.0
          %3560 = vmatpush2.msra.mxu0 0.0
          %3561 = vmatprep.subr.mxu0 0.0
          %3562 = vmatpush2.msra.mxu0 0.0
          %3563 = vmatprep.subr.mxu0 0.0
          %3564 = vmatpush2.msra.mxu0 0.0
          %3565 = vmatprep.subr.mxu0 0.0
          %3566 = vmatpush2.msra.mxu0 0.0
          %3567 = vmatprep.mubr.f32.mxu0 0.0
          %3568 = vmatmul.mubr.f32.gmra.mxu0 %v3501
          %v3569 = vpop.f32.mrf.mxu0
          %v3570 = vadd.f32 %v3497, %v3569
          %v3571 = vpop.f32.mrf.mxu0
          %3572 = vdwg.mxu0
          %v3573 = vadd.f32 %v3393, %v3570
          %s3574 = scalar_lea.vmem [#allocation25], %s1119
          %v3575 = vld [vmem:[%s3574] sm:$0x1]
          %s3576 = scalar_lea.vmem [#allocation26], %s1119
          %v3577 = vld [vmem:[%s3576] sm:$0x1]
          %v3578 = vsel %vm1143, %v3573, 0.0
          %3579 = vadd.xlane.f32.xlu0 %v3578
          %v3580 = vpop.xlane.xlu0 %3579
          %v3581 = vmul.f32 %v3580, %v2195
          %v3582 = vsub.f32 %v3573, %v3581
          %v3583 = vmul.f32 %v3582, %v3582
          %v3584 = vsel %vm1143, %v3583, 0.0
          %3585 = vadd.xlane.f32.xlu0 %v3584
          %v3586 = vpop.xlane.xlu0 %3585
          %v3587 = vmul.f32 %v3586, %v2195
          %v3588 = vadd.f32 %v3587, 1e-05
          %v3589 = vrsqrt.pop %v3588
          %v3590 = vmul.f32 %v3582, %v3589
          %v3592 = vlaneseq
          %v3593 = vshrl.u32 %v3592, 7
          %v3594 = vsub.s32 0, %v3593
          %v3595 = vrot.slane %v3575, %v3594
          %v3597 = vmul.f32 %v3590, %v3595
          %v3599 = vlaneseq
          %v3600 = vshrl.u32 %v3599, 7
          %v3601 = vsub.s32 0, %v3600
          %v3602 = vrot.slane %v3577, %v3601
          %v3604 = vadd.f32 %v3597, %v3602
        $region193: #{tpu_custom_call.1} parent=119 // loop_footer
          %s1123 = sadd.s32 1, %s1119
        $region194: #{tpu_custom_call.1} parent=119 // loop_footer_branch
          %1118 = sbr.rel target = $region190
        $region195: #{tpu_custom_call.1} parent=119 // loop_exit
          _
        %3606 = vrot.lane.b32.xlu0 %v1126, 8
        %v3607 = vpop.permute.xlu0 %3606
        %3610 = vrot.lane.b32.xlu0 %v1127, 16
        %v3611 = vpop.permute.xlu0 %3610
        %3614 = vrot.lane.b32.xlu0 %v1128, 24
        %v3615 = vpop.permute.xlu0 %3614
        %vm3617 = vcmask 64512
        %v3618 = vsel %vm3617, %v1125, %v3607
        %vm3619 = vcmask 130048
        %v3620 = vsel %vm3619, %v3618, %v3611
        %vm3621 = vcmask 195584
        %v3622 = vsel %vm3621, %v3620, %v3615
        %vm3623 = vcmask 261120
        %v3624 = vsel %vm3623, %v3622, 0.0
        %3625 = vst [vmem:[%s1108] sm:$0xff] %v3624
        %v3626 = vld [vmem:[%s23] sm:$0xff]
        %v3627 = vld [vmem:[%s23 + $0x8] sm:$0xff]
        %v3628 = vld [vmem:[%s23 + $0x10] sm:$0xff]
        %v3629 = vld [vmem:[%s23 + $0x18] sm:$0xff]
        %v3630 = vld [vmem:[%s24] sm:$0x1]
        %v3632 = vlaneseq
        %v3633 = vshrl.u32 %v3632, 7
        %v3634 = vsub.s32 0, %v3633
        %v3635 = vrot.slane %v3630, %v3634
        %v3638 = vsel %vm3623, %v1124, 0
        %3640 = vmatprep.subr.mxu0 0.0
        %3641 = vmatpush1.msra.mxu0 0.0
        %3642 = vmatprep.subr.mxu0 0.0
        %3643 = vmatpush1.msra.mxu0 0.0
        %3644 = vmatprep.subr.mxu0 0.0
        %3645 = vmatpush1.msra.mxu0 0.0
        %3646 = vmatprep.subr.mxu0 0.0
        %3647 = vmatpush1.msra.mxu0 0.0
        %3648 = vmatprep.subr.mxu0 0.0
        %3649 = vmatpush1.msra.mxu0 0.0
        %3650 = vmatprep.subr.mxu0 0.0
        %3651 = vmatpush1.msra.mxu0 0.0
        %3652 = vmatprep.subr.mxu0 0.0
        %3653 = vmatpush1.msra.mxu0 0.0
        %3654 = vmatprep.subr.mxu0 0.0
        %3655 = vmatpush1.msra.mxu0 0.0
        %3656 = vmatprep.subr.mxu0 0.0
        %3657 = vmatpush1.msra.mxu0 0.0
        %3658 = vmatprep.subr.mxu0 0.0
        %3659 = vmatpush1.msra.mxu0 0.0
        %3660 = vmatprep.subr.mxu0 0.0
        %3661 = vmatpush1.msra.mxu0 0.0
        %3662 = vmatprep.subr.mxu0 0.0
        %3663 = vmatpush1.msra.mxu0 0.0
        %3664 = vmatprep.subr.mxu0 0.0
        %3665 = vmatpush1.msra.mxu0 %v3629
        %3666 = vmatprep.subr.mxu0 0.0
        %3667 = vmatpush1.msra.mxu0 %v3628
        %3668 = vmatprep.subr.mxu0 0.0
        %3669 = vmatpush1.msra.mxu0 %v3627
        %3670 = vmatprep.subr.mxu0 0.0
        %3671 = vmatpush1.msra.mxu0 %v3626
        %3672 = vmatprep.subr.mxu0 0.0
        %3673 = vmatpush2.msra.mxu0 0.0
        %3674 = vmatprep.subr.mxu0 0.0
        %3675 = vmatpush2.msra.mxu0 0.0
        %3676 = vmatprep.subr.mxu0 0.0
        %3677 = vmatpush2.msra.mxu0 0.0
        %3678 = vmatprep.subr.mxu0 0.0
        %3679 = vmatpush2.msra.mxu0 0.0
        %3680 = vmatprep.subr.mxu0 0.0
        %3681 = vmatpush2.msra.mxu0 0.0
        %3682 = vmatprep.subr.mxu0 0.0
        %3683 = vmatpush2.msra.mxu0 0.0
        %3684 = vmatprep.subr.mxu0 0.0
        %3685 = vmatpush2.msra.mxu0 0.0
        %3686 = vmatprep.subr.mxu0 0.0
        %3687 = vmatpush2.msra.mxu0 0.0
        %3688 = vmatprep.subr.mxu0 0.0
        %3689 = vmatpush2.msra.mxu0 0.0
        %3690 = vmatprep.subr.mxu0 0.0
        %3691 = vmatpush2.msra.mxu0 0.0
        %3692 = vmatprep.subr.mxu0 0.0
        %3693 = vmatpush2.msra.mxu0 0.0
        %3694 = vmatprep.subr.mxu0 0.0
        %3695 = vmatpush2.msra.mxu0 0.0
        %3696 = vmatprep.subr.mxu0 0.0
        %3697 = vmatpush2.msra.mxu0 0.0
        %3698 = vmatprep.subr.mxu0 0.0
        %3699 = vmatpush2.msra.mxu0 0.0
        %3700 = vmatprep.subr.mxu0 0.0
        %3701 = vmatpush2.msra.mxu0 0.0
        %3702 = vmatprep.subr.mxu0 0.0
        %3703 = vmatpush2.msra.mxu0 0.0
        %3704 = vmatprep.mubr.f32.mxu0 0.0
        %3705 = vmatmul.mubr.f32.gmra.mxu0 %v3638
        %v3706 = vpop.f32.mrf.mxu0
        %v3707 = vadd.f32 %v3635, %v3706
        %v3708 = vpop.f32.mrf.mxu0
        %3709 = vdwg.mxu0
        %3710 = vst [vmem:[%s1101] sm:$0xff] %v3707
        %s3711 = sand.u32 %s612, 1
        %s3712 = scalar_lea.sflag [#allocation4], %s3711
        %s3713 = sand.u32 %s612, 1
        %s3714 = smul.addr %s3713, 8
        %s3715 = scalar_lea.vmem [#allocation29], %s3714
        %s3716 = sand.u32 %s638, 1
        %s3717 = scalar_lea.sflag [#allocation31], %s3716
        %s3718 = sand.u32 %s638, 1
        %s3719 = smul.addr %s3718, 8
        %s3720 = scalar_lea.vmem [#allocation30], %s3719
        // Predicated region
        $region196: #{tpu_custom_call.1} parent=119 // pred_check
          %p3721 = pneg %p622
        $region197: #{tpu_custom_call.1} parent=119 // pred_check_branch
          %3723 = sbr.rel (%p3721) target = $region199
        $region198: #{tpu_custom_call.1} parent=119 // pred_region
          %s3725 = ssub.s32 128, 128
          %3726 = vsyncadd %s3712, %s3725
          %s3727 = smul.addr %s59, 128
          %s3728 = scalar_lea.hbm %s25, %s3727
          %s3730 = sshll.u32 %s3715, 4
          %s3731 = int_to_ptr.vmem [resolvable:$true] %s3730
          %3733 = dma.vmem_to_hbm [thread:$0]  %s3731, 128, %s3728, %s3712
        $region199: #{tpu_custom_call.1} parent=119 // pred_fallthru
          _
        // Predicated region
        $region200: #{tpu_custom_call.1} parent=119 // pred_check
          %p3734 = pneg %p648
        $region201: #{tpu_custom_call.1} parent=119 // pred_check_branch
          %3736 = sbr.rel (%p3734) target = $region203
        $region202: #{tpu_custom_call.1} parent=119 // pred_region
          %s3738 = ssub.s32 128, 128
          %3739 = vsyncadd %s3717, %s3738
          %s3740 = smul.addr %s59, 128
          %s3741 = scalar_lea.hbm %s26, %s3740
          %s3743 = sshll.u32 %s3720, 4
          %s3744 = int_to_ptr.vmem [resolvable:$true] %s3743
          %3746 = dma.vmem_to_hbm [thread:$0]  %s3744, 128, %s3741, %s3717
        $region203: #{tpu_custom_call.1} parent=119 // pred_fallthru
          _
      $region120: #{tpu_custom_call.1} parent=5 // pred_fallthru
        _
      %p3747 = scmp.le.s32.totalorder 2, %s54
      // Predicated region
      $region204: #{tpu_custom_call.1} parent=5 // pred_check
        %p3748 = pneg %p3747
      $region205: #{tpu_custom_call.1} parent=5 // pred_check_branch
        %3750 = sbr.rel (%p3748) target = $region207
      $region206: #{tpu_custom_call.1} parent=5 // pred_region
        %s3751 = ssub.s32 %s54, 2
        // Predicated region
        $region208: #{tpu_custom_call.1} parent=206 // pred_check
          %p3752 = pneg %p628
        $region209: #{tpu_custom_call.1} parent=206 // pred_check_branch
          %3754 = sbr.rel (%p3752) target = $region211
        $region210: #{tpu_custom_call.1} parent=206 // pred_region
          %s3755 = sand.u32 %s613, 1
          %s3756 = scalar_lea.sflag [#allocation4], %s3755
          %s3757 = sand.u32 %s613, 1
          %s3758 = smul.addr %s3757, 8
          %s3759 = scalar_lea.vmem [#allocation29], %s3758
          %3760 = dma.done %s3756, 128
        $region211: #{tpu_custom_call.1} parent=206 // pred_fallthru
          _
        // Predicated region
        $region212: #{tpu_custom_call.1} parent=206 // pred_check
          %p3761 = pneg %p654
        $region213: #{tpu_custom_call.1} parent=206 // pred_check_branch
          %3763 = sbr.rel (%p3761) target = $region215
        $region214: #{tpu_custom_call.1} parent=206 // pred_region
          %s3764 = sand.u32 %s639, 1
          %s3765 = scalar_lea.sflag [#allocation31], %s3764
          %s3766 = sand.u32 %s639, 1
          %s3767 = smul.addr %s3766, 8
          %s3768 = scalar_lea.vmem [#allocation30], %s3767
          %3769 = dma.done %s3765, 128
        $region215: #{tpu_custom_call.1} parent=206 // pred_fallthru
          _
      $region207: #{tpu_custom_call.1} parent=5 // pred_fallthru
        _
    $region6: #{tpu_custom_call.1} parent=1 // loop_footer
      %s58 = sadd.s32 1, %s54
    $region7: #{tpu_custom_call.1} parent=1 // loop_footer_branch
      %53 = sbr.rel target = $region3
    $region8: #{tpu_custom_call.1} parent=1 // loop_exit
      _
    %3770 = vsyncpa [#allocation3], 1
    %s3771 = scalar_lea.sflag [#allocation3], 1
    %3772 = vsyncpa %s3771, 1
    %3773 = vsyncpa [#allocation6], 1
    %s3774 = scalar_lea.sflag [#allocation6], 1
    %3775 = vsyncpa %s3774, 1
    %3776 = vsyncpa [#allocation9], 1
    %s3777 = scalar_lea.sflag [#allocation9], 1
    %3778 = vsyncpa %s3777, 1
    %3779 = vsyncpa [#allocation12], 1
    %3780 = vsyncpa [#allocation15], 1
    %3781 = vsyncpa [#allocation18], 1
    %3782 = vsyncpa [#allocation21], 1
    %3783 = vsyncpa [#allocation24], 1
    %3784 = vsyncpa [#allocation27], 1
    %3785 = vsyncpa [#allocation4], 1
    %s3786 = scalar_lea.sflag [#allocation4], 1
    %3787 = vsyncpa %s3786, 1
    %3788 = vsyncpa [#allocation31], 1
    %s3789 = scalar_lea.sflag [#allocation31], 1
    %3790 = vsyncpa %s3789, 1

</llo_original>
